<compile_context>
chip_gen: v7x
topology: tpu7x:2x2x1
jax: 0.10.0
libtpu: 0.0.40
codegen_flags: <defaults>
</compile_context>

<pallas_src>
import jax
import jax.numpy as jnp
from jax import lax
from jax.experimental import pallas as pl
from jax.experimental.pallas import tpu as pltpu
import numpy as np

# Problem constants (fixed by the PyTorch module's view(-1, 2*43*43)).
IN_C = 1
OUT_C = 2
KSIZE = 5
H_IN = 90                    # 90 -> conv -> 86 -> pool -> 43
H_CONV = H_IN - KSIZE + 1    # 86
H_POOL = H_CONV // 2         # 43
W_HALF = H_IN // 2           # 45 (even / odd column planes)
LANE_TILE = 128              # samples per grid step (batch on the 128-lane axis)


def _tap_plan():
    """Map (column-plane, pooled-column-offset) window -> list of (parity, dj) taps.

    conv[r, 2q + parity] = sum_{di,dj} w[di,dj] * x[r+di, 2q+parity+dj].
    With columns pre-split into even (E) / odd (O) planes, column 2q+parity+dj
    lands on plane E/O at pooled offset q + (parity+dj)//2, so each conv row
    needs only 6 windows (2 planes x offsets 0..2) shared by all 10 taps.
    """
    plan = {}
    for parity in range(2):
        for dj in range(KSIZE):
            c = parity + dj
            plane = "E" if c % 2 == 0 else "O"
            plan.setdefault((plane, c // 2), []).append((parity, dj))
    return plan


_TAPS = _tap_plan()   # 6 windows per row offset, feeding 10 (parity, dj) taps


def simple_cnn_kernel(w_ref, b_ref, xe_ref, xo_ref, out_ref):
    """One LANE_TILE-wide slab of samples per grid step (batch on lanes).

    w_ref  : SMEM (OUT_C*IN_C*KSIZE*KSIZE,) flattened conv weights
    b_ref  : SMEM (OUT_C,) conv bias
    xe_ref : VMEM (90, 45, LANE_TILE) even input columns
    xo_ref : VMEM (90, 45, LANE_TILE) odd  input columns
    out_ref: VMEM (OUT_C, 43, 43, LANE_TILE) pooled output
    """
    # Hoist all weight / bias scalar reads out of the row loop (read once).
    w_s = [[[w_ref[oc * (IN_C * KSIZE * KSIZE) + di * KSIZE + dj]
             for dj in range(KSIZE)]
            for di in range(KSIZE)]
           for oc in range(OUT_C)]
    b_s = [b_ref[oc] for oc in range(OUT_C)]

    def conv_row_accs(r):
        """Conv outputs for conv row r, split by output-column parity, kept in
        registers: accs[oc][parity] has shape (1, H_POOL, LANE_TILE)."""
        accs = [[None, None] for _ in range(OUT_C)]
        for di in range(KSIZE):                                   # static / unrolled
            row = r + di
            for plane, src_ref in (("E", xe_ref), ("O", xo_ref)):
                slab = src_ref[pl.ds(row, 1)]                     # (1, 45, L), one load
                for off in range(3):
                    win = slab[:, off:off + H_POOL, :]            # in-register slice
                    for (parity, dj) in _TAPS[(plane, off)]:
                        for oc in range(OUT_C):
                            contrib = win * w_s[oc][di][dj]
                            if accs[oc][parity] is None:          # fold init into di=0
                                accs[oc][parity] = contrib
                            else:
                                accs[oc][parity] = accs[oc][parity] + contrib
        return accs

    def pooled_row_body(p, carry):
        r0 = pl.multiple_of(2 * p, 2)
        a0 = conv_row_accs(r0)                                    # conv row 2p
        cmax = [jnp.maximum(a0[oc][0], a0[oc][1]) for oc in range(OUT_C)]
        a1 = conv_row_accs(r0 + 1)                                # conv row 2p + 1
        for oc in range(OUT_C):
            m = jnp.maximum(cmax[oc], jnp.maximum(a1[oc][0], a1[oc][1]))
            # MaxPool commutes with adding a per-channel constant, and
            # relu(max(.)) == max(relu(.)), so bias + ReLU after pooling is exact.
            out_ref[oc, pl.ds(p, 1), :, :] = jnp.maximum(m + b_s[oc], 0.0)
        return carry

    lax.fori_loop(0, H_POOL, pooled_row_body, 0)


def simple_cnn_forward(x, weight, bias):
    """x: (B, 1, 90, 90); weight: (2, 1, 5, 5); bias: (2,). Returns (B, 2*43*43)."""
    B = x.shape[0]
    Bp = pl.cdiv(B, LANE_TILE) * LANE_TILE
    n_tiles = Bp // LANE_TILE

    # Layout plumbing (plain XLA, outside the kernel): batch -> lane axis,
    # pad batch to a multiple of 128, split columns into even / odd planes.
    xt = jnp.transpose(x.astype(jnp.float32)[:, 0, :, :], (1, 2, 0))   # (90,90,B)
    if Bp != B:
        xt = jnp.pad(xt, ((0, 0), (0, 0), (0, Bp - B)))
    xe = xt[:, 0::2, :]                                                # (90,45,Bp)
    xo = xt[:, 1::2, :]                                                # (90,45,Bp)

    w_flat = weight.reshape(-1).astype(jnp.float32)                    # (50,)
    b = bias.astype(jnp.float32)                                       # (2,)

    pooled = pl.pallas_call(
        simple_cnn_kernel,
        out_shape=jax.ShapeDtypeStruct((OUT_C, H_POOL, H_POOL, Bp), jnp.float32),
        grid=(n_tiles,),
        in_specs=[
            pl.BlockSpec(memory_space=pltpu.MemorySpace.SMEM),             # weights
            pl.BlockSpec(memory_space=pltpu.MemorySpace.SMEM),             # bias
            pl.BlockSpec((H_IN, W_HALF, LANE_TILE), lambda g: (0, 0, g)),  # xE
            pl.BlockSpec((H_IN, W_HALF, LANE_TILE), lambda g: (0, 0, g)),  # xO
        ],
        out_specs=pl.BlockSpec((OUT_C, H_POOL, H_POOL, LANE_TILE),
                               lambda g: (0, 0, 0, g)),
        compiler_params=pltpu.CompilerParams(
            dimension_semantics=("parallel",),
            vmem_limit_bytes=32 * 1024 * 1024),
    )(w_flat, b, xe, xo)

    # Back to PyTorch layout and channel-major flatten (== x.view(-1, 2*43*43)).
    out = jnp.transpose(pooled, (3, 0, 1, 2))[:B]                      # (B,2,43,43)
    return out.reshape(B, OUT_C * H_POOL * H_POOL)


def reference_forward(x, weight, bias):
    """Pure-JAX reference with the same math (conv as shifted slices + pool)."""
    B = x.shape[0]
    xi = x[:, 0, :, :].astype(jnp.float32)                             # (B, 90, 90)
    outs = []
    for oc in range(OUT_C):
        acc = jnp.full((B, H_CONV, H_CONV), bias[oc], dtype=jnp.float32)
        for di in range(KSIZE):
            for dj in range(KSIZE):
                acc = acc + xi[:, di:di + H_CONV, dj:dj + H_CONV] * weight[oc, 0, di, dj]
        acc = jnp.maximum(acc, 0.0)
        p = jnp.maximum(
            jnp.maximum(acc[:, 0::2, 0::2], acc[:, 0::2, 1::2]),
            jnp.maximum(acc[:, 1::2, 0::2], acc[:, 1::2, 1::2]),
        )
        outs.append(p)
    pooled = jnp.stack(outs, axis=1)                                   # (B, 2, 43, 43)
    return pooled.reshape(B, OUT_C * H_POOL * H_POOL)


if __name__ == "__main__":
    key = jax.random.PRNGKey(0)
    kx, kw, kb = jax.random.split(key, 3)

    # The module's view(-1, 2*43*43) forces a 90x90 spatial input.
    B = 2
    x = jax.random.normal(kx, (B, IN_C, H_IN, H_IN), dtype=jnp.float32)

    # Deterministic parameter init (PyTorch-Conv2d-like uniform fan-in bound).
    fan_in = IN_C * KSIZE * KSIZE
    bound = 1.0 / np.sqrt(fan_in)
    weight = jax.random.uniform(kw, (OUT_C, IN_C, KSIZE, KSIZE),
                                dtype=jnp.float32, minval=-bound, maxval=bound)
    bias = jax.random.uniform(kb, (OUT_C,), dtype=jnp.float32,
                              minval=-bound, maxval=bound)

    out = simple_cnn_forward(x, weight, bias)
    out = jax.block_until_ready(out)

    ref = jax.block_until_ready(reference_forward(x, weight, bias))
    np.testing.assert_allclose(np.asarray(out), np.asarray(ref),
                               rtol=1e-5, atol=1e-5)
    assert out.shape == (B, OUT_C * H_POOL * H_POOL)

    print("KERNEL_OK")
</pallas_src>

<mosaic_0001>
module attributes {stable_mosaic.version = 11 : i64} {
  func.func @simple_cnn_kernel(%arg0: i32, %arg1: memref<50xf32, #tpu.memory_space<smem>>, %arg2: memref<2xf32, #tpu.memory_space<smem>>, %arg3: memref<90x45x128xf32, #tpu.memory_space<vmem>>, %arg4: memref<90x45x128xf32, #tpu.memory_space<vmem>>, %arg5: memref<2x43x43x128xf32, #tpu.memory_space<vmem>>) attributes {dimension_semantics = [#tpu.dimension_semantics<parallel>], iteration_bounds = array<i64: 1>, scalar_prefetch = 0 : i64, scratch_operands = 0 : i64, tpu.core_type = #tpu.core_type<tc>, window_params = [{transform_indices = @transform_0, window_bounds = array<i64: 50>}, {transform_indices = @transform_1, window_bounds = array<i64: 2>}, {transform_indices = @transform_2, window_bounds = array<i64: 90, 45, 128>}, {transform_indices = @transform_3, window_bounds = array<i64: 90, 45, 128>}, {transform_indices = @transform_4, window_bounds = array<i64: 2, 43, 43, 128>}]} {
    %c0 = arith.constant 0 : index
    %0 = memref.load %arg1[%c0] : memref<50xf32, #tpu.memory_space<smem>>
    %c1 = arith.constant 1 : index
    %1 = memref.load %arg1[%c1] : memref<50xf32, #tpu.memory_space<smem>>
    %c2 = arith.constant 2 : index
    %2 = memref.load %arg1[%c2] : memref<50xf32, #tpu.memory_space<smem>>
    %c3 = arith.constant 3 : index
    %3 = memref.load %arg1[%c3] : memref<50xf32, #tpu.memory_space<smem>>
    %c4 = arith.constant 4 : index
    %4 = memref.load %arg1[%c4] : memref<50xf32, #tpu.memory_space<smem>>
    %c5 = arith.constant 5 : index
    %5 = memref.load %arg1[%c5] : memref<50xf32, #tpu.memory_space<smem>>
    %c6 = arith.constant 6 : index
    %6 = memref.load %arg1[%c6] : memref<50xf32, #tpu.memory_space<smem>>
    %c7 = arith.constant 7 : index
    %7 = memref.load %arg1[%c7] : memref<50xf32, #tpu.memory_space<smem>>
    %c8 = arith.constant 8 : index
    %8 = memref.load %arg1[%c8] : memref<50xf32, #tpu.memory_space<smem>>
    %c9 = arith.constant 9 : index
    %9 = memref.load %arg1[%c9] : memref<50xf32, #tpu.memory_space<smem>>
    %c10 = arith.constant 10 : index
    %10 = memref.load %arg1[%c10] : memref<50xf32, #tpu.memory_space<smem>>
    %c11 = arith.constant 11 : index
    %11 = memref.load %arg1[%c11] : memref<50xf32, #tpu.memory_space<smem>>
    %c12 = arith.constant 12 : index
    %12 = memref.load %arg1[%c12] : memref<50xf32, #tpu.memory_space<smem>>
    %c13 = arith.constant 13 : index
    %13 = memref.load %arg1[%c13] : memref<50xf32, #tpu.memory_space<smem>>
    %c14 = arith.constant 14 : index
    %14 = memref.load %arg1[%c14] : memref<50xf32, #tpu.memory_space<smem>>
    %c15 = arith.constant 15 : index
    %15 = memref.load %arg1[%c15] : memref<50xf32, #tpu.memory_space<smem>>
    %c16 = arith.constant 16 : index
    %16 = memref.load %arg1[%c16] : memref<50xf32, #tpu.memory_space<smem>>
    %c17 = arith.constant 17 : index
    %17 = memref.load %arg1[%c17] : memref<50xf32, #tpu.memory_space<smem>>
    %c18 = arith.constant 18 : index
    %18 = memref.load %arg1[%c18] : memref<50xf32, #tpu.memory_space<smem>>
    %c19 = arith.constant 19 : index
    %19 = memref.load %arg1[%c19] : memref<50xf32, #tpu.memory_space<smem>>
    %c20 = arith.constant 20 : index
    %20 = memref.load %arg1[%c20] : memref<50xf32, #tpu.memory_space<smem>>
    %c21 = arith.constant 21 : index
    %21 = memref.load %arg1[%c21] : memref<50xf32, #tpu.memory_space<smem>>
    %c22 = arith.constant 22 : index
    %22 = memref.load %arg1[%c22] : memref<50xf32, #tpu.memory_space<smem>>
    %c23 = arith.constant 23 : index
    %23 = memref.load %arg1[%c23] : memref<50xf32, #tpu.memory_space<smem>>
    %c24 = arith.constant 24 : index
    %24 = memref.load %arg1[%c24] : memref<50xf32, #tpu.memory_space<smem>>
    %c25 = arith.constant 25 : index
    %25 = memref.load %arg1[%c25] : memref<50xf32, #tpu.memory_space<smem>>
    %c26 = arith.constant 26 : index
    %26 = memref.load %arg1[%c26] : memref<50xf32, #tpu.memory_space<smem>>
    %c27 = arith.constant 27 : index
    %27 = memref.load %arg1[%c27] : memref<50xf32, #tpu.memory_space<smem>>
    %c28 = arith.constant 28 : index
    %28 = memref.load %arg1[%c28] : memref<50xf32, #tpu.memory_space<smem>>
    %c29 = arith.constant 29 : index
    %29 = memref.load %arg1[%c29] : memref<50xf32, #tpu.memory_space<smem>>
    %c30 = arith.constant 30 : index
    %30 = memref.load %arg1[%c30] : memref<50xf32, #tpu.memory_space<smem>>
    %c31 = arith.constant 31 : index
    %31 = memref.load %arg1[%c31] : memref<50xf32, #tpu.memory_space<smem>>
    %c32 = arith.constant 32 : index
    %32 = memref.load %arg1[%c32] : memref<50xf32, #tpu.memory_space<smem>>
    %c33 = arith.constant 33 : index
    %33 = memref.load %arg1[%c33] : memref<50xf32, #tpu.memory_space<smem>>
    %c34 = arith.constant 34 : index
    %34 = memref.load %arg1[%c34] : memref<50xf32, #tpu.memory_space<smem>>
    %c35 = arith.constant 35 : index
    %35 = memref.load %arg1[%c35] : memref<50xf32, #tpu.memory_space<smem>>
    %c36 = arith.constant 36 : index
    %36 = memref.load %arg1[%c36] : memref<50xf32, #tpu.memory_space<smem>>
    %c37 = arith.constant 37 : index
    %37 = memref.load %arg1[%c37] : memref<50xf32, #tpu.memory_space<smem>>
    %c38 = arith.constant 38 : index
    %38 = memref.load %arg1[%c38] : memref<50xf32, #tpu.memory_space<smem>>
    %c39 = arith.constant 39 : index
    %39 = memref.load %arg1[%c39] : memref<50xf32, #tpu.memory_space<smem>>
    %c40 = arith.constant 40 : index
    %40 = memref.load %arg1[%c40] : memref<50xf32, #tpu.memory_space<smem>>
    %c41 = arith.constant 41 : index
    %41 = memref.load %arg1[%c41] : memref<50xf32, #tpu.memory_space<smem>>
    %c42 = arith.constant 42 : index
    %42 = memref.load %arg1[%c42] : memref<50xf32, #tpu.memory_space<smem>>
    %c43 = arith.constant 43 : index
    %43 = memref.load %arg1[%c43] : memref<50xf32, #tpu.memory_space<smem>>
    %c44 = arith.constant 44 : index
    %44 = memref.load %arg1[%c44] : memref<50xf32, #tpu.memory_space<smem>>
    %c45 = arith.constant 45 : index
    %45 = memref.load %arg1[%c45] : memref<50xf32, #tpu.memory_space<smem>>
    %c46 = arith.constant 46 : index
    %46 = memref.load %arg1[%c46] : memref<50xf32, #tpu.memory_space<smem>>
    %c47 = arith.constant 47 : index
    %47 = memref.load %arg1[%c47] : memref<50xf32, #tpu.memory_space<smem>>
    %c48 = arith.constant 48 : index
    %48 = memref.load %arg1[%c48] : memref<50xf32, #tpu.memory_space<smem>>
    %c49 = arith.constant 49 : index
    %49 = memref.load %arg1[%c49] : memref<50xf32, #tpu.memory_space<smem>>
    %c0_0 = arith.constant 0 : index
    %50 = memref.load %arg2[%c0_0] : memref<2xf32, #tpu.memory_space<smem>>
    %c1_1 = arith.constant 1 : index
    %51 = memref.load %arg2[%c1_1] : memref<2xf32, #tpu.memory_space<smem>>
    %c0_i32 = arith.constant 0 : i32
    %c43_i32 = arith.constant 43 : i32
    %52 = arith.addi %c0_i32, %c43_i32 : i32
    %c1_i32 = arith.constant 1 : i32
    scf.for %arg6 = %c0_i32 to %52 step %c1_i32  : i32 {
      %c2_i32 = arith.constant 2 : i32
      %53 = arith.muli %c2_i32, %arg6 : i32
      %54 = tpu.assume_multiple %53, 2 : i32
      %c0_i32_3 = arith.constant 0 : i32
      %55 = arith.addi %54, %c0_i32_3 : i32
      %56 = arith.index_cast %55 : i32 to index
      %c0_4 = arith.constant 0 : index
      %c0_5 = arith.constant 0 : index
      %57 = vector.load %arg3[%56, %c0_4, %c0_5] : memref<90x45x128xf32, #tpu.memory_space<vmem>>, vector<1x45x128xf32>
      %58 = vector.extract_strided_slice %57 {offsets = [0, 0, 0], sizes = [1, 43, 128], strides = [1, 1, 1]} : vector<1x45x128xf32> to vector<1x43x128xf32>
      %59 = vector.broadcast %0 : f32 to vector<1x43x128xf32>
      %60 = arith.mulf %58, %59 : vector<1x43x128xf32>
      %61 = vector.broadcast %25 : f32 to vector<1x43x128xf32>
      %62 = arith.mulf %58, %61 : vector<1x43x128xf32>
      %63 = vector.extract_strided_slice %57 {offsets = [0, 1, 0], sizes = [1, 43, 128], strides = [1, 1, 1]} : vector<1x45x128xf32> to vector<1x43x128xf32>
      %64 = vector.broadcast %2 : f32 to vector<1x43x128xf32>
      %65 = arith.mulf %63, %64 : vector<1x43x128xf32>
      %66 = arith.addf %60, %65 : vector<1x43x128xf32>
      %67 = vector.broadcast %27 : f32 to vector<1x43x128xf32>
      %68 = arith.mulf %63, %67 : vector<1x43x128xf32>
      %69 = arith.addf %62, %68 : vector<1x43x128xf32>
      %70 = vector.broadcast %1 : f32 to vector<1x43x128xf32>
      %71 = arith.mulf %63, %70 : vector<1x43x128xf32>
      %72 = vector.broadcast %26 : f32 to vector<1x43x128xf32>
      %73 = arith.mulf %63, %72 : vector<1x43x128xf32>
      %74 = vector.extract_strided_slice %57 {offsets = [0, 2, 0], sizes = [1, 43, 128], strides = [1, 1, 1]} : vector<1x45x128xf32> to vector<1x43x128xf32>
      %75 = vector.broadcast %4 : f32 to vector<1x43x128xf32>
      %76 = arith.mulf %74, %75 : vector<1x43x128xf32>
      %77 = arith.addf %66, %76 : vector<1x43x128xf32>
      %78 = vector.broadcast %29 : f32 to vector<1x43x128xf32>
      %79 = arith.mulf %74, %78 : vector<1x43x128xf32>
      %80 = arith.addf %69, %79 : vector<1x43x128xf32>
      %81 = vector.broadcast %3 : f32 to vector<1x43x128xf32>
      %82 = arith.mulf %74, %81 : vector<1x43x128xf32>
      %83 = arith.addf %71, %82 : vector<1x43x128xf32>
      %84 = vector.broadcast %28 : f32 to vector<1x43x128xf32>
      %85 = arith.mulf %74, %84 : vector<1x43x128xf32>
      %86 = arith.addf %73, %85 : vector<1x43x128xf32>
      %87 = arith.index_cast %55 : i32 to index
      %c0_6 = arith.constant 0 : index
      %c0_7 = arith.constant 0 : index
      %88 = vector.load %arg4[%87, %c0_6, %c0_7] : memref<90x45x128xf32, #tpu.memory_space<vmem>>, vector<1x45x128xf32>
      %89 = vector.extract_strided_slice %88 {offsets = [0, 0, 0], sizes = [1, 43, 128], strides = [1, 1, 1]} : vector<1x45x128xf32> to vector<1x43x128xf32>
      %90 = vector.broadcast %1 : f32 to vector<1x43x128xf32>
      %91 = arith.mulf %89, %90 : vector<1x43x128xf32>
      %92 = arith.addf %77, %91 : vector<1x43x128xf32>
      %93 = vector.broadcast %26 : f32 to vector<1x43x128xf32>
      %94 = arith.mulf %89, %93 : vector<1x43x128xf32>
      %95 = arith.addf %80, %94 : vector<1x43x128xf32>
      %96 = vector.broadcast %0 : f32 to vector<1x43x128xf32>
      %97 = arith.mulf %89, %96 : vector<1x43x128xf32>
      %98 = arith.addf %83, %97 : vector<1x43x128xf32>
      %99 = vector.broadcast %25 : f32 to vector<1x43x128xf32>
      %100 = arith.mulf %89, %99 : vector<1x43x128xf32>
      %101 = arith.addf %86, %100 : vector<1x43x128xf32>
      %102 = vector.extract_strided_slice %88 {offsets = [0, 1, 0], sizes = [1, 43, 128], strides = [1, 1, 1]} : vector<1x45x128xf32> to vector<1x43x128xf32>
      %103 = vector.broadcast %3 : f32 to vector<1x43x128xf32>
      %104 = arith.mulf %102, %103 : vector<1x43x128xf32>
      %105 = arith.addf %92, %104 : vector<1x43x128xf32>
      %106 = vector.broadcast %28 : f32 to vector<1x43x128xf32>
      %107 = arith.mulf %102, %106 : vector<1x43x128xf32>
      %108 = arith.addf %95, %107 : vector<1x43x128xf32>
      %109 = vector.broadcast %2 : f32 to vector<1x43x128xf32>
      %110 = arith.mulf %102, %109 : vector<1x43x128xf32>
      %111 = arith.addf %98, %110 : vector<1x43x128xf32>
      %112 = vector.broadcast %27 : f32 to vector<1x43x128xf32>
      %113 = arith.mulf %102, %112 : vector<1x43x128xf32>
      %114 = arith.addf %101, %113 : vector<1x43x128xf32>
      %115 = vector.extract_strided_slice %88 {offsets = [0, 2, 0], sizes = [1, 43, 128], strides = [1, 1, 1]} : vector<1x45x128xf32> to vector<1x43x128xf32>
      %116 = vector.broadcast %4 : f32 to vector<1x43x128xf32>
      %117 = arith.mulf %115, %116 : vector<1x43x128xf32>
      %118 = arith.addf %111, %117 : vector<1x43x128xf32>
      %119 = vector.broadcast %29 : f32 to vector<1x43x128xf32>
      %120 = arith.mulf %115, %119 : vector<1x43x128xf32>
      %121 = arith.addf %114, %120 : vector<1x43x128xf32>
      %c1_i32_8 = arith.constant 1 : i32
      %122 = arith.addi %54, %c1_i32_8 : i32
      %123 = arith.index_cast %122 : i32 to index
      %c0_9 = arith.constant 0 : index
      %c0_10 = arith.constant 0 : index
      %124 = vector.load %arg3[%123, %c0_9, %c0_10] : memref<90x45x128xf32, #tpu.memory_space<vmem>>, vector<1x45x128xf32>
      %125 = vector.extract_strided_slice %124 {offsets = [0, 0, 0], sizes = [1, 43, 128], strides = [1, 1, 1]} : vector<1x45x128xf32> to vector<1x43x128xf32>
      %126 = vector.broadcast %5 : f32 to vector<1x43x128xf32>
      %127 = arith.mulf %125, %126 : vector<1x43x128xf32>
      %128 = arith.addf %105, %127 : vector<1x43x128xf32>
      %129 = vector.broadcast %30 : f32 to vector<1x43x128xf32>
      %130 = arith.mulf %125, %129 : vector<1x43x128xf32>
      %131 = arith.addf %108, %130 : vector<1x43x128xf32>
      %132 = vector.extract_strided_slice %124 {offsets = [0, 1, 0], sizes = [1, 43, 128], strides = [1, 1, 1]} : vector<1x45x128xf32> to vector<1x43x128xf32>
      %133 = vector.broadcast %7 : f32 to vector<1x43x128xf32>
      %134 = arith.mulf %132, %133 : vector<1x43x128xf32>
      %135 = arith.addf %128, %134 : vector<1x43x128xf32>
      %136 = vector.broadcast %32 : f32 to vector<1x43x128xf32>
      %137 = arith.mulf %132, %136 : vector<1x43x128xf32>
      %138 = arith.addf %131, %137 : vector<1x43x128xf32>
      %139 = vector.broadcast %6 : f32 to vector<1x43x128xf32>
      %140 = arith.mulf %132, %139 : vector<1x43x128xf32>
      %141 = arith.addf %118, %140 : vector<1x43x128xf32>
      %142 = vector.broadcast %31 : f32 to vector<1x43x128xf32>
      %143 = arith.mulf %132, %142 : vector<1x43x128xf32>
      %144 = arith.addf %121, %143 : vector<1x43x128xf32>
      %145 = vector.extract_strided_slice %124 {offsets = [0, 2, 0], sizes = [1, 43, 128], strides = [1, 1, 1]} : vector<1x45x128xf32> to vector<1x43x128xf32>
      %146 = vector.broadcast %9 : f32 to vector<1x43x128xf32>
      %147 = arith.mulf %145, %146 : vector<1x43x128xf32>
      %148 = arith.addf %135, %147 : vector<1x43x128xf32>
      %149 = vector.broadcast %34 : f32 to vector<1x43x128xf32>
      %150 = arith.mulf %145, %149 : vector<1x43x128xf32>
      %151 = arith.addf %138, %150 : vector<1x43x128xf32>
      %152 = vector.broadcast %8 : f32 to vector<1x43x128xf32>
      %153 = arith.mulf %145, %152 : vector<1x43x128xf32>
      %154 = arith.addf %141, %153 : vector<1x43x128xf32>
      %155 = vector.broadcast %33 : f32 to vector<1x43x128xf32>
      %156 = arith.mulf %145, %155 : vector<1x43x128xf32>
      %157 = arith.addf %144, %156 : vector<1x43x128xf32>
      %158 = arith.index_cast %122 : i32 to index
      %c0_11 = arith.constant 0 : index
      %c0_12 = arith.constant 0 : index
      %159 = vector.load %arg4[%158, %c0_11, %c0_12] : memref<90x45x128xf32, #tpu.memory_space<vmem>>, vector<1x45x128xf32>
      %160 = vector.extract_strided_slice %159 {offsets = [0, 0, 0], sizes = [1, 43, 128], strides = [1, 1, 1]} : vector<1x45x128xf32> to vector<1x43x128xf32>
      %161 = vector.broadcast %6 : f32 to vector<1x43x128xf32>
      %162 = arith.mulf %160, %161 : vector<1x43x128xf32>
      %163 = arith.addf %148, %162 : vector<1x43x128xf32>
      %164 = vector.broadcast %31 : f32 to vector<1x43x128xf32>
      %165 = arith.mulf %160, %164 : vector<1x43x128xf32>
      %166 = arith.addf %151, %165 : vector<1x43x128xf32>
      %167 = vector.broadcast %5 : f32 to vector<1x43x128xf32>
      %168 = arith.mulf %160, %167 : vector<1x43x128xf32>
      %169 = arith.addf %154, %168 : vector<1x43x128xf32>
      %170 = vector.broadcast %30 : f32 to vector<1x43x128xf32>
      %171 = arith.mulf %160, %170 : vector<1x43x128xf32>
      %172 = arith.addf %157, %171 : vector<1x43x128xf32>
      %173 = vector.extract_strided_slice %159 {offsets = [0, 1, 0], sizes = [1, 43, 128], strides = [1, 1, 1]} : vector<1x45x128xf32> to vector<1x43x128xf32>
      %174 = vector.broadcast %8 : f32 to vector<1x43x128xf32>
      %175 = arith.mulf %173, %174 : vector<1x43x128xf32>
      %176 = arith.addf %163, %175 : vector<1x43x128xf32>
      %177 = vector.broadcast %33 : f32 to vector<1x43x128xf32>
      %178 = arith.mulf %173, %177 : vector<1x43x128xf32>
      %179 = arith.addf %166, %178 : vector<1x43x128xf32>
      %180 = vector.broadcast %7 : f32 to vector<1x43x128xf32>
      %181 = arith.mulf %173, %180 : vector<1x43x128xf32>
      %182 = arith.addf %169, %181 : vector<1x43x128xf32>
      %183 = vector.broadcast %32 : f32 to vector<1x43x128xf32>
      %184 = arith.mulf %173, %183 : vector<1x43x128xf32>
      %185 = arith.addf %172, %184 : vector<1x43x128xf32>
      %186 = vector.extract_strided_slice %159 {offsets = [0, 2, 0], sizes = [1, 43, 128], strides = [1, 1, 1]} : vector<1x45x128xf32> to vector<1x43x128xf32>
      %187 = vector.broadcast %9 : f32 to vector<1x43x128xf32>
      %188 = arith.mulf %186, %187 : vector<1x43x128xf32>
      %189 = arith.addf %182, %188 : vector<1x43x128xf32>
      %190 = vector.broadcast %34 : f32 to vector<1x43x128xf32>
      %191 = arith.mulf %186, %190 : vector<1x43x128xf32>
      %192 = arith.addf %185, %191 : vector<1x43x128xf32>
      %c2_i32_13 = arith.constant 2 : i32
      %193 = arith.addi %54, %c2_i32_13 : i32
      %194 = arith.index_cast %193 : i32 to index
      %c0_14 = arith.constant 0 : index
      %c0_15 = arith.constant 0 : index
      %195 = vector.load %arg3[%194, %c0_14, %c0_15] : memref<90x45x128xf32, #tpu.memory_space<vmem>>, vector<1x45x128xf32>
      %196 = vector.extract_strided_slice %195 {offsets = [0, 0, 0], sizes = [1, 43, 128], strides = [1, 1, 1]} : vector<1x45x128xf32> to vector<1x43x128xf32>
      %197 = vector.broadcast %10 : f32 to vector<1x43x128xf32>
      %198 = arith.mulf %196, %197 : vector<1x43x128xf32>
      %199 = arith.addf %176, %198 : vector<1x43x128xf32>
      %200 = vector.broadcast %35 : f32 to vector<1x43x128xf32>
      %201 = arith.mulf %196, %200 : vector<1x43x128xf32>
      %202 = arith.addf %179, %201 : vector<1x43x128xf32>
      %203 = vector.extract_strided_slice %195 {offsets = [0, 1, 0], sizes = [1, 43, 128], strides = [1, 1, 1]} : vector<1x45x128xf32> to vector<1x43x128xf32>
      %204 = vector.broadcast %12 : f32 to vector<1x43x128xf32>
      %205 = arith.mulf %203, %204 : vector<1x43x128xf32>
      %206 = arith.addf %199, %205 : vector<1x43x128xf32>
      %207 = vector.broadcast %37 : f32 to vector<1x43x128xf32>
      %208 = arith.mulf %203, %207 : vector<1x43x128xf32>
      %209 = arith.addf %202, %208 : vector<1x43x128xf32>
      %210 = vector.broadcast %11 : f32 to vector<1x43x128xf32>
      %211 = arith.mulf %203, %210 : vector<1x43x128xf32>
      %212 = arith.addf %189, %211 : vector<1x43x128xf32>
      %213 = vector.broadcast %36 : f32 to vector<1x43x128xf32>
      %214 = arith.mulf %203, %213 : vector<1x43x128xf32>
      %215 = arith.addf %192, %214 : vector<1x43x128xf32>
      %216 = vector.extract_strided_slice %195 {offsets = [0, 2, 0], sizes = [1, 43, 128], strides = [1, 1, 1]} : vector<1x45x128xf32> to vector<1x43x128xf32>
      %217 = vector.broadcast %14 : f32 to vector<1x43x128xf32>
      %218 = arith.mulf %216, %217 : vector<1x43x128xf32>
      %219 = arith.addf %206, %218 : vector<1x43x128xf32>
      %220 = vector.broadcast %39 : f32 to vector<1x43x128xf32>
      %221 = arith.mulf %216, %220 : vector<1x43x128xf32>
      %222 = arith.addf %209, %221 : vector<1x43x128xf32>
      %223 = vector.broadcast %13 : f32 to vector<1x43x128xf32>
      %224 = arith.mulf %216, %223 : vector<1x43x128xf32>
      %225 = arith.addf %212, %224 : vector<1x43x128xf32>
      %226 = vector.broadcast %38 : f32 to vector<1x43x128xf32>
      %227 = arith.mulf %216, %226 : vector<1x43x128xf32>
      %228 = arith.addf %215, %227 : vector<1x43x128xf32>
      %229 = arith.index_cast %193 : i32 to index
      %c0_16 = arith.constant 0 : index
      %c0_17 = arith.constant 0 : index
      %230 = vector.load %arg4[%229, %c0_16, %c0_17] : memref<90x45x128xf32, #tpu.memory_space<vmem>>, vector<1x45x128xf32>
      %231 = vector.extract_strided_slice %230 {offsets = [0, 0, 0], sizes = [1, 43, 128], strides = [1, 1, 1]} : vector<1x45x128xf32> to vector<1x43x128xf32>
      %232 = vector.broadcast %11 : f32 to vector<1x43x128xf32>
      %233 = arith.mulf %231, %232 : vector<1x43x128xf32>
      %234 = arith.addf %219, %233 : vector<1x43x128xf32>
      %235 = vector.broadcast %36 : f32 to vector<1x43x128xf32>
      %236 = arith.mulf %231, %235 : vector<1x43x128xf32>
      %237 = arith.addf %222, %236 : vector<1x43x128xf32>
      %238 = vector.broadcast %10 : f32 to vector<1x43x128xf32>
      %239 = arith.mulf %231, %238 : vector<1x43x128xf32>
      %240 = arith.addf %225, %239 : vector<1x43x128xf32>
      %241 = vector.broadcast %35 : f32 to vector<1x43x128xf32>
      %242 = arith.mulf %231, %241 : vector<1x43x128xf32>
      %243 = arith.addf %228, %242 : vector<1x43x128xf32>
      %244 = vector.extract_strided_slice %230 {offsets = [0, 1, 0], sizes = [1, 43, 128], strides = [1, 1, 1]} : vector<1x45x128xf32> to vector<1x43x128xf32>
      %245 = vector.broadcast %13 : f32 to vector<1x43x128xf32>
      %246 = arith.mulf %244, %245 : vector<1x43x128xf32>
      %247 = arith.addf %234, %246 : vector<1x43x128xf32>
      %248 = vector.broadcast %38 : f32 to vector<1x43x128xf32>
      %249 = arith.mulf %244, %248 : vector<1x43x128xf32>
      %250 = arith.addf %237, %249 : vector<1x43x128xf32>
      %251 = vector.broadcast %12 : f32 to vector<1x43x128xf32>
      %252 = arith.mulf %244, %251 : vector<1x43x128xf32>
      %253 = arith.addf %240, %252 : vector<1x43x128xf32>
      %254 = vector.broadcast %37 : f32 to vector<1x43x128xf32>
      %255 = arith.mulf %244, %254 : vector<1x43x128xf32>
      %256 = arith.addf %243, %255 : vector<1x43x128xf32>
      %257 = vector.extract_strided_slice %230 {offsets = [0, 2, 0], sizes = [1, 43, 128], strides = [1, 1, 1]} : vector<1x45x128xf32> to vector<1x43x128xf32>
      %258 = vector.broadcast %14 : f32 to vector<1x43x128xf32>
      %259 = arith.mulf %257, %258 : vector<1x43x128xf32>
      %260 = arith.addf %253, %259 : vector<1x43x128xf32>
      %261 = vector.broadcast %39 : f32 to vector<1x43x128xf32>
      %262 = arith.mulf %257, %261 : vector<1x43x128xf32>
      %263 = arith.addf %256, %262 : vector<1x43x128xf32>
      %c3_i32 = arith.constant 3 : i32
      %264 = arith.addi %54, %c3_i32 : i32
      %265 = arith.index_cast %264 : i32 to index
      %c0_18 = arith.constant 0 : index
      %c0_19 = arith.constant 0 : index
      %266 = vector.load %arg3[%265, %c0_18, %c0_19] : memref<90x45x128xf32, #tpu.memory_space<vmem>>, vector<1x45x128xf32>
      %267 = vector.extract_strided_slice %266 {offsets = [0, 0, 0], sizes = [1, 43, 128], strides = [1, 1, 1]} : vector<1x45x128xf32> to vector<1x43x128xf32>
      %268 = vector.broadcast %15 : f32 to vector<1x43x128xf32>
      %269 = arith.mulf %267, %268 : vector<1x43x128xf32>
      %270 = arith.addf %247, %269 : vector<1x43x128xf32>
      %271 = vector.broadcast %40 : f32 to vector<1x43x128xf32>
      %272 = arith.mulf %267, %271 : vector<1x43x128xf32>
      %273 = arith.addf %250, %272 : vector<1x43x128xf32>
      %274 = vector.extract_strided_slice %266 {offsets = [0, 1, 0], sizes = [1, 43, 128], strides = [1, 1, 1]} : vector<1x45x128xf32> to vector<1x43x128xf32>
      %275 = vector.broadcast %17 : f32 to vector<1x43x128xf32>
      %276 = arith.mulf %274, %275 : vector<1x43x128xf32>
      %277 = arith.addf %270, %276 : vector<1x43x128xf32>
      %278 = vector.broadcast %42 : f32 to vector<1x43x128xf32>
      %279 = arith.mulf %274, %278 : vector<1x43x128xf32>
      %280 = arith.addf %273, %279 : vector<1x43x128xf32>
      %281 = vector.broadcast %16 : f32 to vector<1x43x128xf32>
      %282 = arith.mulf %274, %281 : vector<1x43x128xf32>
      %283 = arith.addf %260, %282 : vector<1x43x128xf32>
      %284 = vector.broadcast %41 : f32 to vector<1x43x128xf32>
      %285 = arith.mulf %274, %284 : vector<1x43x128xf32>
      %286 = arith.addf %263, %285 : vector<1x43x128xf32>
      %287 = vector.extract_strided_slice %266 {offsets = [0, 2, 0], sizes = [1, 43, 128], strides = [1, 1, 1]} : vector<1x45x128xf32> to vector<1x43x128xf32>
      %288 = vector.broadcast %19 : f32 to vector<1x43x128xf32>
      %289 = arith.mulf %287, %288 : vector<1x43x128xf32>
      %290 = arith.addf %277, %289 : vector<1x43x128xf32>
      %291 = vector.broadcast %44 : f32 to vector<1x43x128xf32>
      %292 = arith.mulf %287, %291 : vector<1x43x128xf32>
      %293 = arith.addf %280, %292 : vector<1x43x128xf32>
      %294 = vector.broadcast %18 : f32 to vector<1x43x128xf32>
      %295 = arith.mulf %287, %294 : vector<1x43x128xf32>
      %296 = arith.addf %283, %295 : vector<1x43x128xf32>
      %297 = vector.broadcast %43 : f32 to vector<1x43x128xf32>
      %298 = arith.mulf %287, %297 : vector<1x43x128xf32>
      %299 = arith.addf %286, %298 : vector<1x43x128xf32>
      %300 = arith.index_cast %264 : i32 to index
      %c0_20 = arith.constant 0 : index
      %c0_21 = arith.constant 0 : index
      %301 = vector.load %arg4[%300, %c0_20, %c0_21] : memref<90x45x128xf32, #tpu.memory_space<vmem>>, vector<1x45x128xf32>
      %302 = vector.extract_strided_slice %301 {offsets = [0, 0, 0], sizes = [1, 43, 128], strides = [1, 1, 1]} : vector<1x45x128xf32> to vector<1x43x128xf32>
      %303 = vector.broadcast %16 : f32 to vector<1x43x128xf32>
      %304 = arith.mulf %302, %303 : vector<1x43x128xf32>
      %305 = arith.addf %290, %304 : vector<1x43x128xf32>
      %306 = vector.broadcast %41 : f32 to vector<1x43x128xf32>
      %307 = arith.mulf %302, %306 : vector<1x43x128xf32>
      %308 = arith.addf %293, %307 : vector<1x43x128xf32>
      %309 = vector.broadcast %15 : f32 to vector<1x43x128xf32>
      %310 = arith.mulf %302, %309 : vector<1x43x128xf32>
      %311 = arith.addf %296, %310 : vector<1x43x128xf32>
      %312 = vector.broadcast %40 : f32 to vector<1x43x128xf32>
      %313 = arith.mulf %302, %312 : vector<1x43x128xf32>
      %314 = arith.addf %299, %313 : vector<1x43x128xf32>
      %315 = vector.extract_strided_slice %301 {offsets = [0, 1, 0], sizes = [1, 43, 128], strides = [1, 1, 1]} : vector<1x45x128xf32> to vector<1x43x128xf32>
      %316 = vector.broadcast %18 : f32 to vector<1x43x128xf32>
      %317 = arith.mulf %315, %316 : vector<1x43x128xf32>
      %318 = arith.addf %305, %317 : vector<1x43x128xf32>
      %319 = vector.broadcast %43 : f32 to vector<1x43x128xf32>
      %320 = arith.mulf %315, %319 : vector<1x43x128xf32>
      %321 = arith.addf %308, %320 : vector<1x43x128xf32>
      %322 = vector.broadcast %17 : f32 to vector<1x43x128xf32>
      %323 = arith.mulf %315, %322 : vector<1x43x128xf32>
      %324 = arith.addf %311, %323 : vector<1x43x128xf32>
      %325 = vector.broadcast %42 : f32 to vector<1x43x128xf32>
      %326 = arith.mulf %315, %325 : vector<1x43x128xf32>
      %327 = arith.addf %314, %326 : vector<1x43x128xf32>
      %328 = vector.extract_strided_slice %301 {offsets = [0, 2, 0], sizes = [1, 43, 128], strides = [1, 1, 1]} : vector<1x45x128xf32> to vector<1x43x128xf32>
      %329 = vector.broadcast %19 : f32 to vector<1x43x128xf32>
      %330 = arith.mulf %328, %329 : vector<1x43x128xf32>
      %331 = arith.addf %324, %330 : vector<1x43x128xf32>
      %332 = vector.broadcast %44 : f32 to vector<1x43x128xf32>
      %333 = arith.mulf %328, %332 : vector<1x43x128xf32>
      %334 = arith.addf %327, %333 : vector<1x43x128xf32>
      %c4_i32 = arith.constant 4 : i32
      %335 = arith.addi %54, %c4_i32 : i32
      %336 = arith.index_cast %335 : i32 to index
      %c0_22 = arith.constant 0 : index
      %c0_23 = arith.constant 0 : index
      %337 = vector.load %arg3[%336, %c0_22, %c0_23] : memref<90x45x128xf32, #tpu.memory_space<vmem>>, vector<1x45x128xf32>
      %338 = vector.extract_strided_slice %337 {offsets = [0, 0, 0], sizes = [1, 43, 128], strides = [1, 1, 1]} : vector<1x45x128xf32> to vector<1x43x128xf32>
      %339 = vector.broadcast %20 : f32 to vector<1x43x128xf32>
      %340 = arith.mulf %338, %339 : vector<1x43x128xf32>
      %341 = arith.addf %318, %340 : vector<1x43x128xf32>
      %342 = vector.broadcast %45 : f32 to vector<1x43x128xf32>
      %343 = arith.mulf %338, %342 : vector<1x43x128xf32>
      %344 = arith.addf %321, %343 : vector<1x43x128xf32>
      %345 = vector.extract_strided_slice %337 {offsets = [0, 1, 0], sizes = [1, 43, 128], strides = [1, 1, 1]} : vector<1x45x128xf32> to vector<1x43x128xf32>
      %346 = vector.broadcast %22 : f32 to vector<1x43x128xf32>
      %347 = arith.mulf %345, %346 : vector<1x43x128xf32>
      %348 = arith.addf %341, %347 : vector<1x43x128xf32>
      %349 = vector.broadcast %47 : f32 to vector<1x43x128xf32>
      %350 = arith.mulf %345, %349 : vector<1x43x128xf32>
      %351 = arith.addf %344, %350 : vector<1x43x128xf32>
      %352 = vector.broadcast %21 : f32 to vector<1x43x128xf32>
      %353 = arith.mulf %345, %352 : vector<1x43x128xf32>
      %354 = arith.addf %331, %353 : vector<1x43x128xf32>
      %355 = vector.broadcast %46 : f32 to vector<1x43x128xf32>
      %356 = arith.mulf %345, %355 : vector<1x43x128xf32>
      %357 = arith.addf %334, %356 : vector<1x43x128xf32>
      %358 = vector.extract_strided_slice %337 {offsets = [0, 2, 0], sizes = [1, 43, 128], strides = [1, 1, 1]} : vector<1x45x128xf32> to vector<1x43x128xf32>
      %359 = vector.broadcast %24 : f32 to vector<1x43x128xf32>
      %360 = arith.mulf %358, %359 : vector<1x43x128xf32>
      %361 = arith.addf %348, %360 : vector<1x43x128xf32>
      %362 = vector.broadcast %49 : f32 to vector<1x43x128xf32>
      %363 = arith.mulf %358, %362 : vector<1x43x128xf32>
      %364 = arith.addf %351, %363 : vector<1x43x128xf32>
      %365 = vector.broadcast %23 : f32 to vector<1x43x128xf32>
      %366 = arith.mulf %358, %365 : vector<1x43x128xf32>
      %367 = arith.addf %354, %366 : vector<1x43x128xf32>
      %368 = vector.broadcast %48 : f32 to vector<1x43x128xf32>
      %369 = arith.mulf %358, %368 : vector<1x43x128xf32>
      %370 = arith.addf %357, %369 : vector<1x43x128xf32>
      %371 = arith.index_cast %335 : i32 to index
      %c0_24 = arith.constant 0 : index
      %c0_25 = arith.constant 0 : index
      %372 = vector.load %arg4[%371, %c0_24, %c0_25] : memref<90x45x128xf32, #tpu.memory_space<vmem>>, vector<1x45x128xf32>
      %373 = vector.extract_strided_slice %372 {offsets = [0, 0, 0], sizes = [1, 43, 128], strides = [1, 1, 1]} : vector<1x45x128xf32> to vector<1x43x128xf32>
      %374 = vector.broadcast %21 : f32 to vector<1x43x128xf32>
      %375 = arith.mulf %373, %374 : vector<1x43x128xf32>
      %376 = arith.addf %361, %375 : vector<1x43x128xf32>
      %377 = vector.broadcast %46 : f32 to vector<1x43x128xf32>
      %378 = arith.mulf %373, %377 : vector<1x43x128xf32>
      %379 = arith.addf %364, %378 : vector<1x43x128xf32>
      %380 = vector.broadcast %20 : f32 to vector<1x43x128xf32>
      %381 = arith.mulf %373, %380 : vector<1x43x128xf32>
      %382 = arith.addf %367, %381 : vector<1x43x128xf32>
      %383 = vector.broadcast %45 : f32 to vector<1x43x128xf32>
      %384 = arith.mulf %373, %383 : vector<1x43x128xf32>
      %385 = arith.addf %370, %384 : vector<1x43x128xf32>
      %386 = vector.extract_strided_slice %372 {offsets = [0, 1, 0], sizes = [1, 43, 128], strides = [1, 1, 1]} : vector<1x45x128xf32> to vector<1x43x128xf32>
      %387 = vector.broadcast %23 : f32 to vector<1x43x128xf32>
      %388 = arith.mulf %386, %387 : vector<1x43x128xf32>
      %389 = arith.addf %376, %388 : vector<1x43x128xf32>
      %390 = vector.broadcast %48 : f32 to vector<1x43x128xf32>
      %391 = arith.mulf %386, %390 : vector<1x43x128xf32>
      %392 = arith.addf %379, %391 : vector<1x43x128xf32>
      %393 = vector.broadcast %22 : f32 to vector<1x43x128xf32>
      %394 = arith.mulf %386, %393 : vector<1x43x128xf32>
      %395 = arith.addf %382, %394 : vector<1x43x128xf32>
      %396 = vector.broadcast %47 : f32 to vector<1x43x128xf32>
      %397 = arith.mulf %386, %396 : vector<1x43x128xf32>
      %398 = arith.addf %385, %397 : vector<1x43x128xf32>
      %399 = vector.extract_strided_slice %372 {offsets = [0, 2, 0], sizes = [1, 43, 128], strides = [1, 1, 1]} : vector<1x45x128xf32> to vector<1x43x128xf32>
      %400 = vector.broadcast %24 : f32 to vector<1x43x128xf32>
      %401 = arith.mulf %399, %400 : vector<1x43x128xf32>
      %402 = arith.addf %395, %401 : vector<1x43x128xf32>
      %403 = vector.broadcast %49 : f32 to vector<1x43x128xf32>
      %404 = arith.mulf %399, %403 : vector<1x43x128xf32>
      %405 = arith.addf %398, %404 : vector<1x43x128xf32>
      %406 = arith.maximumf %389, %402 : vector<1x43x128xf32>
      %407 = arith.maximumf %392, %405 : vector<1x43x128xf32>
      %c1_i32_26 = arith.constant 1 : i32
      %408 = arith.addi %54, %c1_i32_26 : i32
      %c0_i32_27 = arith.constant 0 : i32
      %409 = arith.addi %408, %c0_i32_27 : i32
      %410 = arith.index_cast %409 : i32 to index
      %c0_28 = arith.constant 0 : index
      %c0_29 = arith.constant 0 : index
      %411 = vector.load %arg3[%410, %c0_28, %c0_29] : memref<90x45x128xf32, #tpu.memory_space<vmem>>, vector<1x45x128xf32>
      %412 = vector.extract_strided_slice %411 {offsets = [0, 0, 0], sizes = [1, 43, 128], strides = [1, 1, 1]} : vector<1x45x128xf32> to vector<1x43x128xf32>
      %413 = vector.broadcast %0 : f32 to vector<1x43x128xf32>
      %414 = arith.mulf %412, %413 : vector<1x43x128xf32>
      %415 = vector.broadcast %25 : f32 to vector<1x43x128xf32>
      %416 = arith.mulf %412, %415 : vector<1x43x128xf32>
      %417 = vector.extract_strided_slice %411 {offsets = [0, 1, 0], sizes = [1, 43, 128], strides = [1, 1, 1]} : vector<1x45x128xf32> to vector<1x43x128xf32>
      %418 = vector.broadcast %2 : f32 to vector<1x43x128xf32>
      %419 = arith.mulf %417, %418 : vector<1x43x128xf32>
      %420 = arith.addf %414, %419 : vector<1x43x128xf32>
      %421 = vector.broadcast %27 : f32 to vector<1x43x128xf32>
      %422 = arith.mulf %417, %421 : vector<1x43x128xf32>
      %423 = arith.addf %416, %422 : vector<1x43x128xf32>
      %424 = vector.broadcast %1 : f32 to vector<1x43x128xf32>
      %425 = arith.mulf %417, %424 : vector<1x43x128xf32>
      %426 = vector.broadcast %26 : f32 to vector<1x43x128xf32>
      %427 = arith.mulf %417, %426 : vector<1x43x128xf32>
      %428 = vector.extract_strided_slice %411 {offsets = [0, 2, 0], sizes = [1, 43, 128], strides = [1, 1, 1]} : vector<1x45x128xf32> to vector<1x43x128xf32>
      %429 = vector.broadcast %4 : f32 to vector<1x43x128xf32>
      %430 = arith.mulf %428, %429 : vector<1x43x128xf32>
      %431 = arith.addf %420, %430 : vector<1x43x128xf32>
      %432 = vector.broadcast %29 : f32 to vector<1x43x128xf32>
      %433 = arith.mulf %428, %432 : vector<1x43x128xf32>
      %434 = arith.addf %423, %433 : vector<1x43x128xf32>
      %435 = vector.broadcast %3 : f32 to vector<1x43x128xf32>
      %436 = arith.mulf %428, %435 : vector<1x43x128xf32>
      %437 = arith.addf %425, %436 : vector<1x43x128xf32>
      %438 = vector.broadcast %28 : f32 to vector<1x43x128xf32>
      %439 = arith.mulf %428, %438 : vector<1x43x128xf32>
      %440 = arith.addf %427, %439 : vector<1x43x128xf32>
      %441 = arith.index_cast %409 : i32 to index
      %c0_30 = arith.constant 0 : index
      %c0_31 = arith.constant 0 : index
      %442 = vector.load %arg4[%441, %c0_30, %c0_31] : memref<90x45x128xf32, #tpu.memory_space<vmem>>, vector<1x45x128xf32>
      %443 = vector.extract_strided_slice %442 {offsets = [0, 0, 0], sizes = [1, 43, 128], strides = [1, 1, 1]} : vector<1x45x128xf32> to vector<1x43x128xf32>
      %444 = vector.broadcast %1 : f32 to vector<1x43x128xf32>
      %445 = arith.mulf %443, %444 : vector<1x43x128xf32>
      %446 = arith.addf %431, %445 : vector<1x43x128xf32>
      %447 = vector.broadcast %26 : f32 to vector<1x43x128xf32>
      %448 = arith.mulf %443, %447 : vector<1x43x128xf32>
      %449 = arith.addf %434, %448 : vector<1x43x128xf32>
      %450 = vector.broadcast %0 : f32 to vector<1x43x128xf32>
      %451 = arith.mulf %443, %450 : vector<1x43x128xf32>
      %452 = arith.addf %437, %451 : vector<1x43x128xf32>
      %453 = vector.broadcast %25 : f32 to vector<1x43x128xf32>
      %454 = arith.mulf %443, %453 : vector<1x43x128xf32>
      %455 = arith.addf %440, %454 : vector<1x43x128xf32>
      %456 = vector.extract_strided_slice %442 {offsets = [0, 1, 0], sizes = [1, 43, 128], strides = [1, 1, 1]} : vector<1x45x128xf32> to vector<1x43x128xf32>
      %457 = vector.broadcast %3 : f32 to vector<1x43x128xf32>
      %458 = arith.mulf %456, %457 : vector<1x43x128xf32>
      %459 = arith.addf %446, %458 : vector<1x43x128xf32>
      %460 = vector.broadcast %28 : f32 to vector<1x43x128xf32>
      %461 = arith.mulf %456, %460 : vector<1x43x128xf32>
      %462 = arith.addf %449, %461 : vector<1x43x128xf32>
      %463 = vector.broadcast %2 : f32 to vector<1x43x128xf32>
      %464 = arith.mulf %456, %463 : vector<1x43x128xf32>
      %465 = arith.addf %452, %464 : vector<1x43x128xf32>
      %466 = vector.broadcast %27 : f32 to vector<1x43x128xf32>
      %467 = arith.mulf %456, %466 : vector<1x43x128xf32>
      %468 = arith.addf %455, %467 : vector<1x43x128xf32>
      %469 = vector.extract_strided_slice %442 {offsets = [0, 2, 0], sizes = [1, 43, 128], strides = [1, 1, 1]} : vector<1x45x128xf32> to vector<1x43x128xf32>
      %470 = vector.broadcast %4 : f32 to vector<1x43x128xf32>
      %471 = arith.mulf %469, %470 : vector<1x43x128xf32>
      %472 = arith.addf %465, %471 : vector<1x43x128xf32>
      %473 = vector.broadcast %29 : f32 to vector<1x43x128xf32>
      %474 = arith.mulf %469, %473 : vector<1x43x128xf32>
      %475 = arith.addf %468, %474 : vector<1x43x128xf32>
      %c1_i32_32 = arith.constant 1 : i32
      %476 = arith.addi %408, %c1_i32_32 : i32
      %477 = arith.index_cast %476 : i32 to index
      %c0_33 = arith.constant 0 : index
      %c0_34 = arith.constant 0 : index
      %478 = vector.load %arg3[%477, %c0_33, %c0_34] : memref<90x45x128xf32, #tpu.memory_space<vmem>>, vector<1x45x128xf32>
      %479 = vector.extract_strided_slice %478 {offsets = [0, 0, 0], sizes = [1, 43, 128], strides = [1, 1, 1]} : vector<1x45x128xf32> to vector<1x43x128xf32>
      %480 = vector.broadcast %5 : f32 to vector<1x43x128xf32>
      %481 = arith.mulf %479, %480 : vector<1x43x128xf32>
      %482 = arith.addf %459, %481 : vector<1x43x128xf32>
      %483 = vector.broadcast %30 : f32 to vector<1x43x128xf32>
      %484 = arith.mulf %479, %483 : vector<1x43x128xf32>
      %485 = arith.addf %462, %484 : vector<1x43x128xf32>
      %486 = vector.extract_strided_slice %478 {offsets = [0, 1, 0], sizes = [1, 43, 128], strides = [1, 1, 1]} : vector<1x45x128xf32> to vector<1x43x128xf32>
      %487 = vector.broadcast %7 : f32 to vector<1x43x128xf32>
      %488 = arith.mulf %486, %487 : vector<1x43x128xf32>
      %489 = arith.addf %482, %488 : vector<1x43x128xf32>
      %490 = vector.broadcast %32 : f32 to vector<1x43x128xf32>
      %491 = arith.mulf %486, %490 : vector<1x43x128xf32>
      %492 = arith.addf %485, %491 : vector<1x43x128xf32>
      %493 = vector.broadcast %6 : f32 to vector<1x43x128xf32>
      %494 = arith.mulf %486, %493 : vector<1x43x128xf32>
      %495 = arith.addf %472, %494 : vector<1x43x128xf32>
      %496 = vector.broadcast %31 : f32 to vector<1x43x128xf32>
      %497 = arith.mulf %486, %496 : vector<1x43x128xf32>
      %498 = arith.addf %475, %497 : vector<1x43x128xf32>
      %499 = vector.extract_strided_slice %478 {offsets = [0, 2, 0], sizes = [1, 43, 128], strides = [1, 1, 1]} : vector<1x45x128xf32> to vector<1x43x128xf32>
      %500 = vector.broadcast %9 : f32 to vector<1x43x128xf32>
      %501 = arith.mulf %499, %500 : vector<1x43x128xf32>
      %502 = arith.addf %489, %501 : vector<1x43x128xf32>
      %503 = vector.broadcast %34 : f32 to vector<1x43x128xf32>
      %504 = arith.mulf %499, %503 : vector<1x43x128xf32>
      %505 = arith.addf %492, %504 : vector<1x43x128xf32>
      %506 = vector.broadcast %8 : f32 to vector<1x43x128xf32>
      %507 = arith.mulf %499, %506 : vector<1x43x128xf32>
      %508 = arith.addf %495, %507 : vector<1x43x128xf32>
      %509 = vector.broadcast %33 : f32 to vector<1x43x128xf32>
      %510 = arith.mulf %499, %509 : vector<1x43x128xf32>
      %511 = arith.addf %498, %510 : vector<1x43x128xf32>
      %512 = arith.index_cast %476 : i32 to index
      %c0_35 = arith.constant 0 : index
      %c0_36 = arith.constant 0 : index
      %513 = vector.load %arg4[%512, %c0_35, %c0_36] : memref<90x45x128xf32, #tpu.memory_space<vmem>>, vector<1x45x128xf32>
      %514 = vector.extract_strided_slice %513 {offsets = [0, 0, 0], sizes = [1, 43, 128], strides = [1, 1, 1]} : vector<1x45x128xf32> to vector<1x43x128xf32>
      %515 = vector.broadcast %6 : f32 to vector<1x43x128xf32>
      %516 = arith.mulf %514, %515 : vector<1x43x128xf32>
      %517 = arith.addf %502, %516 : vector<1x43x128xf32>
      %518 = vector.broadcast %31 : f32 to vector<1x43x128xf32>
      %519 = arith.mulf %514, %518 : vector<1x43x128xf32>
      %520 = arith.addf %505, %519 : vector<1x43x128xf32>
      %521 = vector.broadcast %5 : f32 to vector<1x43x128xf32>
      %522 = arith.mulf %514, %521 : vector<1x43x128xf32>
      %523 = arith.addf %508, %522 : vector<1x43x128xf32>
      %524 = vector.broadcast %30 : f32 to vector<1x43x128xf32>
      %525 = arith.mulf %514, %524 : vector<1x43x128xf32>
      %526 = arith.addf %511, %525 : vector<1x43x128xf32>
      %527 = vector.extract_strided_slice %513 {offsets = [0, 1, 0], sizes = [1, 43, 128], strides = [1, 1, 1]} : vector<1x45x128xf32> to vector<1x43x128xf32>
      %528 = vector.broadcast %8 : f32 to vector<1x43x128xf32>
      %529 = arith.mulf %527, %528 : vector<1x43x128xf32>
      %530 = arith.addf %517, %529 : vector<1x43x128xf32>
      %531 = vector.broadcast %33 : f32 to vector<1x43x128xf32>
      %532 = arith.mulf %527, %531 : vector<1x43x128xf32>
      %533 = arith.addf %520, %532 : vector<1x43x128xf32>
      %534 = vector.broadcast %7 : f32 to vector<1x43x128xf32>
      %535 = arith.mulf %527, %534 : vector<1x43x128xf32>
      %536 = arith.addf %523, %535 : vector<1x43x128xf32>
      %537 = vector.broadcast %32 : f32 to vector<1x43x128xf32>
      %538 = arith.mulf %527, %537 : vector<1x43x128xf32>
      %539 = arith.addf %526, %538 : vector<1x43x128xf32>
      %540 = vector.extract_strided_slice %513 {offsets = [0, 2, 0], sizes = [1, 43, 128], strides = [1, 1, 1]} : vector<1x45x128xf32> to vector<1x43x128xf32>
      %541 = vector.broadcast %9 : f32 to vector<1x43x128xf32>
      %542 = arith.mulf %540, %541 : vector<1x43x128xf32>
      %543 = arith.addf %536, %542 : vector<1x43x128xf32>
      %544 = vector.broadcast %34 : f32 to vector<1x43x128xf32>
      %545 = arith.mulf %540, %544 : vector<1x43x128xf32>
      %546 = arith.addf %539, %545 : vector<1x43x128xf32>
      %c2_i32_37 = arith.constant 2 : i32
      %547 = arith.addi %408, %c2_i32_37 : i32
      %548 = arith.index_cast %547 : i32 to index
      %c0_38 = arith.constant 0 : index
      %c0_39 = arith.constant 0 : index
      %549 = vector.load %arg3[%548, %c0_38, %c0_39] : memref<90x45x128xf32, #tpu.memory_space<vmem>>, vector<1x45x128xf32>
      %550 = vector.extract_strided_slice %549 {offsets = [0, 0, 0], sizes = [1, 43, 128], strides = [1, 1, 1]} : vector<1x45x128xf32> to vector<1x43x128xf32>
      %551 = vector.broadcast %10 : f32 to vector<1x43x128xf32>
      %552 = arith.mulf %550, %551 : vector<1x43x128xf32>
      %553 = arith.addf %530, %552 : vector<1x43x128xf32>
      %554 = vector.broadcast %35 : f32 to vector<1x43x128xf32>
      %555 = arith.mulf %550, %554 : vector<1x43x128xf32>
      %556 = arith.addf %533, %555 : vector<1x43x128xf32>
      %557 = vector.extract_strided_slice %549 {offsets = [0, 1, 0], sizes = [1, 43, 128], strides = [1, 1, 1]} : vector<1x45x128xf32> to vector<1x43x128xf32>
      %558 = vector.broadcast %12 : f32 to vector<1x43x128xf32>
      %559 = arith.mulf %557, %558 : vector<1x43x128xf32>
      %560 = arith.addf %553, %559 : vector<1x43x128xf32>
      %561 = vector.broadcast %37 : f32 to vector<1x43x128xf32>
      %562 = arith.mulf %557, %561 : vector<1x43x128xf32>
      %563 = arith.addf %556, %562 : vector<1x43x128xf32>
      %564 = vector.broadcast %11 : f32 to vector<1x43x128xf32>
      %565 = arith.mulf %557, %564 : vector<1x43x128xf32>
      %566 = arith.addf %543, %565 : vector<1x43x128xf32>
      %567 = vector.broadcast %36 : f32 to vector<1x43x128xf32>
      %568 = arith.mulf %557, %567 : vector<1x43x128xf32>
      %569 = arith.addf %546, %568 : vector<1x43x128xf32>
      %570 = vector.extract_strided_slice %549 {offsets = [0, 2, 0], sizes = [1, 43, 128], strides = [1, 1, 1]} : vector<1x45x128xf32> to vector<1x43x128xf32>
      %571 = vector.broadcast %14 : f32 to vector<1x43x128xf32>
      %572 = arith.mulf %570, %571 : vector<1x43x128xf32>
      %573 = arith.addf %560, %572 : vector<1x43x128xf32>
      %574 = vector.broadcast %39 : f32 to vector<1x43x128xf32>
      %575 = arith.mulf %570, %574 : vector<1x43x128xf32>
      %576 = arith.addf %563, %575 : vector<1x43x128xf32>
      %577 = vector.broadcast %13 : f32 to vector<1x43x128xf32>
      %578 = arith.mulf %570, %577 : vector<1x43x128xf32>
      %579 = arith.addf %566, %578 : vector<1x43x128xf32>
      %580 = vector.broadcast %38 : f32 to vector<1x43x128xf32>
      %581 = arith.mulf %570, %580 : vector<1x43x128xf32>
      %582 = arith.addf %569, %581 : vector<1x43x128xf32>
      %583 = arith.index_cast %547 : i32 to index
      %c0_40 = arith.constant 0 : index
      %c0_41 = arith.constant 0 : index
      %584 = vector.load %arg4[%583, %c0_40, %c0_41] : memref<90x45x128xf32, #tpu.memory_space<vmem>>, vector<1x45x128xf32>
      %585 = vector.extract_strided_slice %584 {offsets = [0, 0, 0], sizes = [1, 43, 128], strides = [1, 1, 1]} : vector<1x45x128xf32> to vector<1x43x128xf32>
      %586 = vector.broadcast %11 : f32 to vector<1x43x128xf32>
      %587 = arith.mulf %585, %586 : vector<1x43x128xf32>
      %588 = arith.addf %573, %587 : vector<1x43x128xf32>
      %589 = vector.broadcast %36 : f32 to vector<1x43x128xf32>
      %590 = arith.mulf %585, %589 : vector<1x43x128xf32>
      %591 = arith.addf %576, %590 : vector<1x43x128xf32>
      %592 = vector.broadcast %10 : f32 to vector<1x43x128xf32>
      %593 = arith.mulf %585, %592 : vector<1x43x128xf32>
      %594 = arith.addf %579, %593 : vector<1x43x128xf32>
      %595 = vector.broadcast %35 : f32 to vector<1x43x128xf32>
      %596 = arith.mulf %585, %595 : vector<1x43x128xf32>
      %597 = arith.addf %582, %596 : vector<1x43x128xf32>
      %598 = vector.extract_strided_slice %584 {offsets = [0, 1, 0], sizes = [1, 43, 128], strides = [1, 1, 1]} : vector<1x45x128xf32> to vector<1x43x128xf32>
      %599 = vector.broadcast %13 : f32 to vector<1x43x128xf32>
      %600 = arith.mulf %598, %599 : vector<1x43x128xf32>
      %601 = arith.addf %588, %600 : vector<1x43x128xf32>
      %602 = vector.broadcast %38 : f32 to vector<1x43x128xf32>
      %603 = arith.mulf %598, %602 : vector<1x43x128xf32>
      %604 = arith.addf %591, %603 : vector<1x43x128xf32>
      %605 = vector.broadcast %12 : f32 to vector<1x43x128xf32>
      %606 = arith.mulf %598, %605 : vector<1x43x128xf32>
      %607 = arith.addf %594, %606 : vector<1x43x128xf32>
      %608 = vector.broadcast %37 : f32 to vector<1x43x128xf32>
      %609 = arith.mulf %598, %608 : vector<1x43x128xf32>
      %610 = arith.addf %597, %609 : vector<1x43x128xf32>
      %611 = vector.extract_strided_slice %584 {offsets = [0, 2, 0], sizes = [1, 43, 128], strides = [1, 1, 1]} : vector<1x45x128xf32> to vector<1x43x128xf32>
      %612 = vector.broadcast %14 : f32 to vector<1x43x128xf32>
      %613 = arith.mulf %611, %612 : vector<1x43x128xf32>
      %614 = arith.addf %607, %613 : vector<1x43x128xf32>
      %615 = vector.broadcast %39 : f32 to vector<1x43x128xf32>
      %616 = arith.mulf %611, %615 : vector<1x43x128xf32>
      %617 = arith.addf %610, %616 : vector<1x43x128xf32>
      %c3_i32_42 = arith.constant 3 : i32
      %618 = arith.addi %408, %c3_i32_42 : i32
      %619 = arith.index_cast %618 : i32 to index
      %c0_43 = arith.constant 0 : index
      %c0_44 = arith.constant 0 : index
      %620 = vector.load %arg3[%619, %c0_43, %c0_44] : memref<90x45x128xf32, #tpu.memory_space<vmem>>, vector<1x45x128xf32>
      %621 = vector.extract_strided_slice %620 {offsets = [0, 0, 0], sizes = [1, 43, 128], strides = [1, 1, 1]} : vector<1x45x128xf32> to vector<1x43x128xf32>
      %622 = vector.broadcast %15 : f32 to vector<1x43x128xf32>
      %623 = arith.mulf %621, %622 : vector<1x43x128xf32>
      %624 = arith.addf %601, %623 : vector<1x43x128xf32>
      %625 = vector.broadcast %40 : f32 to vector<1x43x128xf32>
      %626 = arith.mulf %621, %625 : vector<1x43x128xf32>
      %627 = arith.addf %604, %626 : vector<1x43x128xf32>
      %628 = vector.extract_strided_slice %620 {offsets = [0, 1, 0], sizes = [1, 43, 128], strides = [1, 1, 1]} : vector<1x45x128xf32> to vector<1x43x128xf32>
      %629 = vector.broadcast %17 : f32 to vector<1x43x128xf32>
      %630 = arith.mulf %628, %629 : vector<1x43x128xf32>
      %631 = arith.addf %624, %630 : vector<1x43x128xf32>
      %632 = vector.broadcast %42 : f32 to vector<1x43x128xf32>
      %633 = arith.mulf %628, %632 : vector<1x43x128xf32>
      %634 = arith.addf %627, %633 : vector<1x43x128xf32>
      %635 = vector.broadcast %16 : f32 to vector<1x43x128xf32>
      %636 = arith.mulf %628, %635 : vector<1x43x128xf32>
      %637 = arith.addf %614, %636 : vector<1x43x128xf32>
      %638 = vector.broadcast %41 : f32 to vector<1x43x128xf32>
      %639 = arith.mulf %628, %638 : vector<1x43x128xf32>
      %640 = arith.addf %617, %639 : vector<1x43x128xf32>
      %641 = vector.extract_strided_slice %620 {offsets = [0, 2, 0], sizes = [1, 43, 128], strides = [1, 1, 1]} : vector<1x45x128xf32> to vector<1x43x128xf32>
      %642 = vector.broadcast %19 : f32 to vector<1x43x128xf32>
      %643 = arith.mulf %641, %642 : vector<1x43x128xf32>
      %644 = arith.addf %631, %643 : vector<1x43x128xf32>
      %645 = vector.broadcast %44 : f32 to vector<1x43x128xf32>
      %646 = arith.mulf %641, %645 : vector<1x43x128xf32>
      %647 = arith.addf %634, %646 : vector<1x43x128xf32>
      %648 = vector.broadcast %18 : f32 to vector<1x43x128xf32>
      %649 = arith.mulf %641, %648 : vector<1x43x128xf32>
      %650 = arith.addf %637, %649 : vector<1x43x128xf32>
      %651 = vector.broadcast %43 : f32 to vector<1x43x128xf32>
      %652 = arith.mulf %641, %651 : vector<1x43x128xf32>
      %653 = arith.addf %640, %652 : vector<1x43x128xf32>
      %654 = arith.index_cast %618 : i32 to index
      %c0_45 = arith.constant 0 : index
      %c0_46 = arith.constant 0 : index
      %655 = vector.load %arg4[%654, %c0_45, %c0_46] : memref<90x45x128xf32, #tpu.memory_space<vmem>>, vector<1x45x128xf32>
      %656 = vector.extract_strided_slice %655 {offsets = [0, 0, 0], sizes = [1, 43, 128], strides = [1, 1, 1]} : vector<1x45x128xf32> to vector<1x43x128xf32>
      %657 = vector.broadcast %16 : f32 to vector<1x43x128xf32>
      %658 = arith.mulf %656, %657 : vector<1x43x128xf32>
      %659 = arith.addf %644, %658 : vector<1x43x128xf32>
      %660 = vector.broadcast %41 : f32 to vector<1x43x128xf32>
      %661 = arith.mulf %656, %660 : vector<1x43x128xf32>
      %662 = arith.addf %647, %661 : vector<1x43x128xf32>
      %663 = vector.broadcast %15 : f32 to vector<1x43x128xf32>
      %664 = arith.mulf %656, %663 : vector<1x43x128xf32>
      %665 = arith.addf %650, %664 : vector<1x43x128xf32>
      %666 = vector.broadcast %40 : f32 to vector<1x43x128xf32>
      %667 = arith.mulf %656, %666 : vector<1x43x128xf32>
      %668 = arith.addf %653, %667 : vector<1x43x128xf32>
      %669 = vector.extract_strided_slice %655 {offsets = [0, 1, 0], sizes = [1, 43, 128], strides = [1, 1, 1]} : vector<1x45x128xf32> to vector<1x43x128xf32>
      %670 = vector.broadcast %18 : f32 to vector<1x43x128xf32>
      %671 = arith.mulf %669, %670 : vector<1x43x128xf32>
      %672 = arith.addf %659, %671 : vector<1x43x128xf32>
      %673 = vector.broadcast %43 : f32 to vector<1x43x128xf32>
      %674 = arith.mulf %669, %673 : vector<1x43x128xf32>
      %675 = arith.addf %662, %674 : vector<1x43x128xf32>
      %676 = vector.broadcast %17 : f32 to vector<1x43x128xf32>
      %677 = arith.mulf %669, %676 : vector<1x43x128xf32>
      %678 = arith.addf %665, %677 : vector<1x43x128xf32>
      %679 = vector.broadcast %42 : f32 to vector<1x43x128xf32>
      %680 = arith.mulf %669, %679 : vector<1x43x128xf32>
      %681 = arith.addf %668, %680 : vector<1x43x128xf32>
      %682 = vector.extract_strided_slice %655 {offsets = [0, 2, 0], sizes = [1, 43, 128], strides = [1, 1, 1]} : vector<1x45x128xf32> to vector<1x43x128xf32>
      %683 = vector.broadcast %19 : f32 to vector<1x43x128xf32>
      %684 = arith.mulf %682, %683 : vector<1x43x128xf32>
      %685 = arith.addf %678, %684 : vector<1x43x128xf32>
      %686 = vector.broadcast %44 : f32 to vector<1x43x128xf32>
      %687 = arith.mulf %682, %686 : vector<1x43x128xf32>
      %688 = arith.addf %681, %687 : vector<1x43x128xf32>
      %c4_i32_47 = arith.constant 4 : i32
      %689 = arith.addi %408, %c4_i32_47 : i32
      %690 = arith.index_cast %689 : i32 to index
      %c0_48 = arith.constant 0 : index
      %c0_49 = arith.constant 0 : index
      %691 = vector.load %arg3[%690, %c0_48, %c0_49] : memref<90x45x128xf32, #tpu.memory_space<vmem>>, vector<1x45x128xf32>
      %692 = vector.extract_strided_slice %691 {offsets = [0, 0, 0], sizes = [1, 43, 128], strides = [1, 1, 1]} : vector<1x45x128xf32> to vector<1x43x128xf32>
      %693 = vector.broadcast %20 : f32 to vector<1x43x128xf32>
      %694 = arith.mulf %692, %693 : vector<1x43x128xf32>
      %695 = arith.addf %672, %694 : vector<1x43x128xf32>
      %696 = vector.broadcast %45 : f32 to vector<1x43x128xf32>
      %697 = arith.mulf %692, %696 : vector<1x43x128xf32>
      %698 = arith.addf %675, %697 : vector<1x43x128xf32>
      %699 = vector.extract_strided_slice %691 {offsets = [0, 1, 0], sizes = [1, 43, 128], strides = [1, 1, 1]} : vector<1x45x128xf32> to vector<1x43x128xf32>
      %700 = vector.broadcast %22 : f32 to vector<1x43x128xf32>
      %701 = arith.mulf %699, %700 : vector<1x43x128xf32>
      %702 = arith.addf %695, %701 : vector<1x43x128xf32>
      %703 = vector.broadcast %47 : f32 to vector<1x43x128xf32>
      %704 = arith.mulf %699, %703 : vector<1x43x128xf32>
      %705 = arith.addf %698, %704 : vector<1x43x128xf32>
      %706 = vector.broadcast %21 : f32 to vector<1x43x128xf32>
      %707 = arith.mulf %699, %706 : vector<1x43x128xf32>
      %708 = arith.addf %685, %707 : vector<1x43x128xf32>
      %709 = vector.broadcast %46 : f32 to vector<1x43x128xf32>
      %710 = arith.mulf %699, %709 : vector<1x43x128xf32>
      %711 = arith.addf %688, %710 : vector<1x43x128xf32>
      %712 = vector.extract_strided_slice %691 {offsets = [0, 2, 0], sizes = [1, 43, 128], strides = [1, 1, 1]} : vector<1x45x128xf32> to vector<1x43x128xf32>
      %713 = vector.broadcast %24 : f32 to vector<1x43x128xf32>
      %714 = arith.mulf %712, %713 : vector<1x43x128xf32>
      %715 = arith.addf %702, %714 : vector<1x43x128xf32>
      %716 = vector.broadcast %49 : f32 to vector<1x43x128xf32>
      %717 = arith.mulf %712, %716 : vector<1x43x128xf32>
      %718 = arith.addf %705, %717 : vector<1x43x128xf32>
      %719 = vector.broadcast %23 : f32 to vector<1x43x128xf32>
      %720 = arith.mulf %712, %719 : vector<1x43x128xf32>
      %721 = arith.addf %708, %720 : vector<1x43x128xf32>
      %722 = vector.broadcast %48 : f32 to vector<1x43x128xf32>
      %723 = arith.mulf %712, %722 : vector<1x43x128xf32>
      %724 = arith.addf %711, %723 : vector<1x43x128xf32>
      %725 = arith.index_cast %689 : i32 to index
      %c0_50 = arith.constant 0 : index
      %c0_51 = arith.constant 0 : index
      %726 = vector.load %arg4[%725, %c0_50, %c0_51] : memref<90x45x128xf32, #tpu.memory_space<vmem>>, vector<1x45x128xf32>
      %727 = vector.extract_strided_slice %726 {offsets = [0, 0, 0], sizes = [1, 43, 128], strides = [1, 1, 1]} : vector<1x45x128xf32> to vector<1x43x128xf32>
      %728 = vector.broadcast %21 : f32 to vector<1x43x128xf32>
      %729 = arith.mulf %727, %728 : vector<1x43x128xf32>
      %730 = arith.addf %715, %729 : vector<1x43x128xf32>
      %731 = vector.broadcast %46 : f32 to vector<1x43x128xf32>
      %732 = arith.mulf %727, %731 : vector<1x43x128xf32>
      %733 = arith.addf %718, %732 : vector<1x43x128xf32>
      %734 = vector.broadcast %20 : f32 to vector<1x43x128xf32>
      %735 = arith.mulf %727, %734 : vector<1x43x128xf32>
      %736 = arith.addf %721, %735 : vector<1x43x128xf32>
      %737 = vector.broadcast %45 : f32 to vector<1x43x128xf32>
      %738 = arith.mulf %727, %737 : vector<1x43x128xf32>
      %739 = arith.addf %724, %738 : vector<1x43x128xf32>
      %740 = vector.extract_strided_slice %726 {offsets = [0, 1, 0], sizes = [1, 43, 128], strides = [1, 1, 1]} : vector<1x45x128xf32> to vector<1x43x128xf32>
      %741 = vector.broadcast %23 : f32 to vector<1x43x128xf32>
      %742 = arith.mulf %740, %741 : vector<1x43x128xf32>
      %743 = arith.addf %730, %742 : vector<1x43x128xf32>
      %744 = vector.broadcast %48 : f32 to vector<1x43x128xf32>
      %745 = arith.mulf %740, %744 : vector<1x43x128xf32>
      %746 = arith.addf %733, %745 : vector<1x43x128xf32>
      %747 = vector.broadcast %22 : f32 to vector<1x43x128xf32>
      %748 = arith.mulf %740, %747 : vector<1x43x128xf32>
      %749 = arith.addf %736, %748 : vector<1x43x128xf32>
      %750 = vector.broadcast %47 : f32 to vector<1x43x128xf32>
      %751 = arith.mulf %740, %750 : vector<1x43x128xf32>
      %752 = arith.addf %739, %751 : vector<1x43x128xf32>
      %753 = vector.extract_strided_slice %726 {offsets = [0, 2, 0], sizes = [1, 43, 128], strides = [1, 1, 1]} : vector<1x45x128xf32> to vector<1x43x128xf32>
      %754 = vector.broadcast %24 : f32 to vector<1x43x128xf32>
      %755 = arith.mulf %753, %754 : vector<1x43x128xf32>
      %756 = arith.addf %749, %755 : vector<1x43x128xf32>
      %757 = vector.broadcast %49 : f32 to vector<1x43x128xf32>
      %758 = arith.mulf %753, %757 : vector<1x43x128xf32>
      %759 = arith.addf %752, %758 : vector<1x43x128xf32>
      %760 = arith.maximumf %743, %756 : vector<1x43x128xf32>
      %761 = arith.maximumf %406, %760 : vector<1x43x128xf32>
      %762 = vector.broadcast %50 : f32 to vector<1x43x128xf32>
      %763 = arith.addf %761, %762 : vector<1x43x128xf32>
      %cst = arith.constant 0.000000e+00 : f32
      %764 = vector.broadcast %cst : f32 to vector<1x43x128xf32>
      %765 = arith.maximumf %763, %764 : vector<1x43x128xf32>
      %c0_52 = arith.constant 0 : index
      %766 = arith.index_cast %arg6 : i32 to index
      %c0_53 = arith.constant 0 : index
      %c0_54 = arith.constant 0 : index
      %767 = vector.load %arg5[%c0_52, %766, %c0_53, %c0_54] : memref<2x43x43x128xf32, #tpu.memory_space<vmem>>, vector<1x1x43x128xf32>
      %768 = vector.shape_cast %767 : vector<1x1x43x128xf32> to vector<1x43x128xf32>
      %769 = vector.shape_cast %765 : vector<1x43x128xf32> to vector<1x1x43x128xf32>
      tpu.vector_store %arg5[%c0_52, %766, %c0_53, %c0_54], %769 {strides = array<i32>} : memref<2x43x43x128xf32, #tpu.memory_space<vmem>>, vector<1x1x43x128xf32>,
      %770 = arith.maximumf %746, %759 : vector<1x43x128xf32>
      %771 = arith.maximumf %407, %770 : vector<1x43x128xf32>
      %772 = vector.broadcast %51 : f32 to vector<1x43x128xf32>
      %773 = arith.addf %771, %772 : vector<1x43x128xf32>
      %cst_55 = arith.constant 0.000000e+00 : f32
      %774 = vector.broadcast %cst_55 : f32 to vector<1x43x128xf32>
      %775 = arith.maximumf %773, %774 : vector<1x43x128xf32>
      %c1_56 = arith.constant 1 : index
      %776 = arith.index_cast %arg6 : i32 to index
      %c0_57 = arith.constant 0 : index
      %c0_58 = arith.constant 0 : index
      %777 = vector.load %arg5[%c1_56, %776, %c0_57, %c0_58] : memref<2x43x43x128xf32, #tpu.memory_space<vmem>>, vector<1x1x43x128xf32>
      %778 = vector.shape_cast %777 : vector<1x1x43x128xf32> to vector<1x43x128xf32>
      %779 = vector.shape_cast %775 : vector<1x43x128xf32> to vector<1x1x43x128xf32>
      tpu.vector_store %arg5[%c1_56, %776, %c0_57, %c0_58], %779 {strides = array<i32>} : memref<2x43x43x128xf32, #tpu.memory_space<vmem>>, vector<1x1x43x128xf32>,
    }
    %c43_i32_2 = arith.constant 43 : i32
    return
  }
  func.func @transform_0(%arg0: i32) -> i32 {
    %c0_i32 = arith.constant 0 : i32
    %c0_i32_0 = arith.constant 0 : i32
    return %c0_i32 : i32
  }
  func.func @transform_1(%arg0: i32) -> i32 {
    %c0_i32 = arith.constant 0 : i32
    %c0_i32_0 = arith.constant 0 : i32
    return %c0_i32 : i32
  }
  func.func @transform_2(%arg0: i32) -> (i32, i32, i32) {
    %c0_i32 = arith.constant 0 : i32
    %c0_i32_0 = arith.constant 0 : i32
    %c0_i32_1 = arith.constant 0 : i32
    return %c0_i32, %c0_i32_0, %arg0 : i32, i32, i32
  }
  func.func @transform_3(%arg0: i32) -> (i32, i32, i32) {
    %c0_i32 = arith.constant 0 : i32
    %c0_i32_0 = arith.constant 0 : i32
    %c0_i32_1 = arith.constant 0 : i32
    return %c0_i32, %c0_i32_0, %arg0 : i32, i32, i32
  }
  func.func @transform_4(%arg0: i32) -> (i32, i32, i32, i32) {
    %c0_i32 = arith.constant 0 : i32
    %c0_i32_0 = arith.constant 0 : i32
    %c0_i32_1 = arith.constant 0 : i32
    %c0_i32_2 = arith.constant 0 : i32
    return %c0_i32, %c0_i32_0, %c0_i32_1, %arg0 : i32, i32, i32, i32
  }
}

</mosaic_0001>

<llo_original>
// kernel: tpu_custom_call.1
$region0: #{tpu_custom_call.1}
  #allocation0 [shape = 'u32[]', space=smem, size = 0x4, offset = 0x4, fixed_abs, tag = 'smem constant byte address 0x4 - core index']
  #allocation1 [shape = 'u32[144,128]{1,0:T(1,128)}', space=vmem, size = 0x12000, scoped, tag = 'internal scratch']
  %s0 = inlined_call_operand.hbm [shape: f32[50], index: 0, kind: input, shape index: {}]
  %s1 = inlined_call_operand.hbm [shape: f32[2], index: 1, kind: input, shape index: {}]
  %s2 = inlined_call_operand.hbm [shape: f32[90,45,128], index: 2, kind: input, shape index: {}]
  %s3 = inlined_call_operand.hbm [shape: f32[90,45,128], index: 3, kind: input, shape index: {}]
  %s4 = inlined_call_operand.vmem [shape: f32[2,43,43,128], index: 4, kind: output, shape index: {}]
  %s5 = sld [smem:[#allocation0]]
  $region49: #{tpu_custom_call.1} parent=0
    _
  %s7 = ssub.s32 1, %s5
  %s8 = scalar_select 0, %s7, %s5
  $region1: #{tpu_custom_call.1} parent=0
    #allocation2 [shape = 'u8[512]{0}', space=smem, size = 0x200, scoped, tag = 'input window, operand 0, single buffered']
    #allocation3 [shape = 's32[1]{0}', space=sflag, size = 0x4, scoped, tag = 'scoped memory for tpu_custom_call.1']
    #allocation4 [shape = 's32[1]{0}', space=sflag, size = 0x4, scoped, tag = 'scoped memory for tpu_custom_call.1']
    #allocation5 [shape = 'u8[512]{0}', space=smem, size = 0x200, scoped, tag = 'input window, operand 1, single buffered']
    #allocation6 [shape = 's32[1]{0}', space=sflag, size = 0x4, scoped, tag = 'scoped memory for tpu_custom_call.1']
    #allocation7 [shape = 'u8[2211840]{0}', space=vmem, size = 0x21c000, scoped, tag = 'input window, operand 2, single buffered']
    #allocation8 [shape = 'u8[2211840]{0}', space=vmem, size = 0x21c000, scoped, tag = 'input window, operand 3, single buffered']
    #allocation9 [shape = 's32[1]{0}', space=sflag, size = 0x4, scoped, tag = 'scoped memory for tpu_custom_call.1']
    %9 = vsyncpa [#allocation4], 0
    %10 = vsyncpa [#allocation6], 0
    %11 = vsyncpa [#allocation3], 0
    %12 = vsyncpa [#allocation9], 0
    // Predicated region
    $region2: #{tpu_custom_call.1} parent=1 // pred_check
      _
    $region3: #{tpu_custom_call.1} parent=1 // pred_check_branch
      %14 = sbr.rel (0) target = $region5
    $region4: #{tpu_custom_call.1} parent=1 // pred_region
      %s16 = ssub.s32 16, 16
      %17 = vsyncadd [#allocation4], %s16
      %20 = dma.hbm_to_smem %s0, 16, [#allocation2], [#allocation4]
    $region5: #{tpu_custom_call.1} parent=1 // pred_fallthru
      _
    // Predicated region
    $region6: #{tpu_custom_call.1} parent=1 // pred_check
      _
    $region7: #{tpu_custom_call.1} parent=1 // pred_check_branch
      %22 = sbr.rel (0) target = $region9
    $region8: #{tpu_custom_call.1} parent=1 // pred_region
      %s24 = ssub.s32 16, 16
      %25 = vsyncadd [#allocation6], %s24
      %28 = dma.hbm_to_smem %s1, 16, [#allocation5], [#allocation6]
    $region9: #{tpu_custom_call.1} parent=1 // pred_fallthru
      _
    // Predicated region
    $region10: #{tpu_custom_call.1} parent=1 // pred_check
      _
    $region11: #{tpu_custom_call.1} parent=1 // pred_check_branch
      %30 = sbr.rel (0) target = $region13
    $region12: #{tpu_custom_call.1} parent=1 // pred_region
      %s32 = ssub.s32 69120, 69120
      %33 = vsyncadd [#allocation3], %s32
      %s34 = sshll.u32 [#allocation7], 4
      %s35 = int_to_ptr.vmem [resolvable:$true] %s34
      %40 = dma.hbm_to_vmem [thread:$0]  %s2, 69120, %s35, [#allocation3], 128, 128, 8
    $region13: #{tpu_custom_call.1} parent=1 // pred_fallthru
      _
    // Predicated region
    $region14: #{tpu_custom_call.1} parent=1 // pred_check
      _
    $region15: #{tpu_custom_call.1} parent=1 // pred_check_branch
      %42 = sbr.rel (0) target = $region17
    $region16: #{tpu_custom_call.1} parent=1 // pred_region
      %s44 = ssub.s32 69120, 69120
      %45 = vsyncadd [#allocation9], %s44
      %s46 = sshll.u32 [#allocation8], 4
      %s47 = int_to_ptr.vmem [resolvable:$true] %s46
      %52 = dma.hbm_to_vmem [thread:$0]  %s3, 69120, %s47, [#allocation9], 128, 128, 8
    $region17: #{tpu_custom_call.1} parent=1 // pred_fallthru
      _
    // Predicated region
    $region18: #{tpu_custom_call.1} parent=1 // pred_check
      _
    $region19: #{tpu_custom_call.1} parent=1 // pred_check_branch
      %54 = sbr.rel (0) target = $region21
    $region20: #{tpu_custom_call.1} parent=1 // pred_region
      %55 = dma.done [#allocation4], 16
    $region21: #{tpu_custom_call.1} parent=1 // pred_fallthru
      _
    // Predicated region
    $region22: #{tpu_custom_call.1} parent=1 // pred_check
      _
    $region23: #{tpu_custom_call.1} parent=1 // pred_check_branch
      %57 = sbr.rel (0) target = $region25
    $region24: #{tpu_custom_call.1} parent=1 // pred_region
      %58 = dma.done [#allocation6], 16
    $region25: #{tpu_custom_call.1} parent=1 // pred_fallthru
      _
    // Predicated region
    $region26: #{tpu_custom_call.1} parent=1 // pred_check
      _
    $region27: #{tpu_custom_call.1} parent=1 // pred_check_branch
      %60 = sbr.rel (0) target = $region29
    $region28: #{tpu_custom_call.1} parent=1 // pred_region
      %61 = dma.done [#allocation3], 69120
    $region29: #{tpu_custom_call.1} parent=1 // pred_fallthru
      _
    // Predicated region
    $region30: #{tpu_custom_call.1} parent=1 // pred_check
      _
    $region31: #{tpu_custom_call.1} parent=1 // pred_check_branch
      %63 = sbr.rel (0) target = $region33
    $region32: #{tpu_custom_call.1} parent=1 // pred_region
      %64 = dma.done [#allocation9], 69120
    $region33: #{tpu_custom_call.1} parent=1 // pred_fallthru
      _
    %65 = sfence
    %s66 = sld [smem:[#allocation2]]
    %s67 = sld [smem:[#allocation2 + $0x1]]
    %s68 = sld [smem:[#allocation2 + $0x2]]
    %s69 = sld [smem:[#allocation2 + $0x3]]
    %s70 = sld [smem:[#allocation2 + $0x4]]
    %s71 = sld [smem:[#allocation2 + $0x5]]
    %s72 = sld [smem:[#allocation2 + $0x6]]
    %s73 = sld [smem:[#allocation2 + $0x7]]
    %s74 = sld [smem:[#allocation2 + $0x8]]
    %s75 = sld [smem:[#allocation2 + $0x9]]
    %s76 = sld [smem:[#allocation2 + $0xa]]
    %s77 = sld [smem:[#allocation2 + $0xb]]
    %s78 = sld [smem:[#allocation2 + $0xc]]
    %s79 = sld [smem:[#allocation2 + $0xd]]
    %s80 = sld [smem:[#allocation2 + $0xe]]
    %s81 = sld [smem:[#allocation2 + $0xf]]
    %s82 = sld [smem:[#allocation2 + $0x10]]
    %s83 = sld [smem:[#allocation2 + $0x11]]
    %s84 = sld [smem:[#allocation2 + $0x12]]
    %s85 = sld [smem:[#allocation2 + $0x13]]
    %s86 = sld [smem:[#allocation2 + $0x14]]
    %s87 = sld [smem:[#allocation2 + $0x15]]
    %s88 = sld [smem:[#allocation2 + $0x16]]
    %s89 = sld [smem:[#allocation2 + $0x17]]
    %s90 = sld [smem:[#allocation2 + $0x18]]
    %s91 = sld [smem:[#allocation2 + $0x19]]
    %s92 = sld [smem:[#allocation2 + $0x1a]]
    %s93 = sld [smem:[#allocation2 + $0x1b]]
    %s94 = sld [smem:[#allocation2 + $0x1c]]
    %s95 = sld [smem:[#allocation2 + $0x1d]]
    %s96 = sld [smem:[#allocation2 + $0x1e]]
    %s97 = sld [smem:[#allocation2 + $0x1f]]
    %s98 = sld [smem:[#allocation2 + $0x20]]
    %s99 = sld [smem:[#allocation2 + $0x21]]
    %s100 = sld [smem:[#allocation2 + $0x22]]
    %s101 = sld [smem:[#allocation2 + $0x23]]
    %s102 = sld [smem:[#allocation2 + $0x24]]
    %s103 = sld [smem:[#allocation2 + $0x25]]
    %s104 = sld [smem:[#allocation2 + $0x26]]
    %s105 = sld [smem:[#allocation2 + $0x27]]
    %s106 = sld [smem:[#allocation2 + $0x28]]
    %s107 = sld [smem:[#allocation2 + $0x29]]
    %s108 = sld [smem:[#allocation2 + $0x2a]]
    %s109 = sld [smem:[#allocation2 + $0x2b]]
    %s110 = sld [smem:[#allocation2 + $0x2c]]
    %s111 = sld [smem:[#allocation2 + $0x2d]]
    %s112 = sld [smem:[#allocation2 + $0x2e]]
    %s113 = sld [smem:[#allocation2 + $0x2f]]
    %s114 = sld [smem:[#allocation2 + $0x30]]
    %s115 = sld [smem:[#allocation2 + $0x31]]
    %s116 = sld [smem:[#allocation5]]
    %s117 = sld [smem:[#allocation5 + $0x1]]
    loop: start=0, step=1, limit=43
    $region34: #{tpu_custom_call.1} parent=1 // loop_pre_header
      _
    $region35: #{tpu_custom_call.1} parent=1 // loop_header
      %s119 = sphi 0, %s123
      %p120 = scmp.ge.s32.totalorder %s119, 43
    $region36: #{tpu_custom_call.1} parent=1 // loop_header_branch
      %122 = sbr.rel (%p120) target = $region40
    $region37: #{tpu_custom_call.1} parent=1 // loop_body
      %s124 = smul.u32 %s119, 2
      %s125 = smul.u32 %s124, 48
      %s126 = scalar_lea.vmem [#allocation7], %s125
      %v127 = vld [vmem:[%s126] sm:$0xff]
      %v128 = vld [vmem:[%s126 + $0x8] sm:$0xff]
      %v129 = vld [vmem:[%s126 + $0x10] sm:$0xff]
      %v130 = vld [vmem:[%s126 + $0x18] sm:$0xff]
      %v131 = vld [vmem:[%s126 + $0x20] sm:$0xff]
      %v132 = vld [vmem:[%s126 + $0x28] sm:$0x1f]
      %v133 = vstv %s66
      %v134 = vmul.f32 %v127, %v133
      %v135 = vmul.f32 %v128, %v133
      %v136 = vmul.f32 %v129, %v133
      %v137 = vmul.f32 %v130, %v133
      %v138 = vmul.f32 %v131, %v133
      %v139 = vmul.f32 %v132, %v133
      %v140 = vstv %s91
      %v141 = vmul.f32 %v127, %v140
      %v142 = vmul.f32 %v128, %v140
      %v143 = vmul.f32 %v129, %v140
      %v144 = vmul.f32 %v130, %v140
      %v145 = vmul.f32 %v131, %v140
      %v146 = vmul.f32 %v132, %v140
      %v147 = vstv %s68
      %v148 = vmul.f32 %v127, %v147
      %v149 = vmul.f32 %v128, %v147
      %v150 = vmul.f32 %v129, %v147
      %v151 = vmul.f32 %v130, %v147
      %v152 = vmul.f32 %v131, %v147
      %v153 = vmul.f32 %v132, %v147
      %vm160 = vcmask 1046528
      %v161 = vrot.slane %v148, 1
      %v162 = vrot.slane %v149, 1
      %v163 = vsel %vm160, %v161, %v162
      %v164 = vrot.slane %v150, 1
      %v165 = vsel %vm160, %v162, %v164
      %v166 = vrot.slane %v151, 1
      %v167 = vsel %vm160, %v164, %v166
      %v168 = vrot.slane %v152, 1
      %v169 = vsel %vm160, %v166, %v168
      %v170 = vrot.slane %v153, 1
      %v171 = vsel %vm160, %v168, %v170
      %v178 = vadd.f32 %v134, %v163
      %v179 = vadd.f32 %v135, %v165
      %v180 = vadd.f32 %v136, %v167
      %v181 = vadd.f32 %v137, %v169
      %v182 = vadd.f32 %v138, %v171
      %v183 = vadd.f32 %v139, %v170
      %v184 = vstv %s93
      %v185 = vmul.f32 %v127, %v184
      %v186 = vmul.f32 %v128, %v184
      %v187 = vmul.f32 %v129, %v184
      %v188 = vmul.f32 %v130, %v184
      %v189 = vmul.f32 %v131, %v184
      %v190 = vmul.f32 %v132, %v184
      %v197 = vrot.slane %v185, 1
      %v198 = vrot.slane %v186, 1
      %v199 = vsel %vm160, %v197, %v198
      %v200 = vrot.slane %v187, 1
      %v201 = vsel %vm160, %v198, %v200
      %v202 = vrot.slane %v188, 1
      %v203 = vsel %vm160, %v200, %v202
      %v204 = vrot.slane %v189, 1
      %v205 = vsel %vm160, %v202, %v204
      %v206 = vrot.slane %v190, 1
      %v207 = vsel %vm160, %v204, %v206
      %v214 = vadd.f32 %v141, %v199
      %v215 = vadd.f32 %v142, %v201
      %v216 = vadd.f32 %v143, %v203
      %v217 = vadd.f32 %v144, %v205
      %v218 = vadd.f32 %v145, %v207
      %v219 = vadd.f32 %v146, %v206
      %v220 = vstv %s67
      %v221 = vmul.f32 %v127, %v220
      %v222 = vmul.f32 %v128, %v220
      %v223 = vmul.f32 %v129, %v220
      %v224 = vmul.f32 %v130, %v220
      %v225 = vmul.f32 %v131, %v220
      %v226 = vmul.f32 %v132, %v220
      %v227 = vstv %s92
      %v228 = vmul.f32 %v127, %v227
      %v229 = vmul.f32 %v128, %v227
      %v230 = vmul.f32 %v129, %v227
      %v231 = vmul.f32 %v130, %v227
      %v232 = vmul.f32 %v131, %v227
      %v233 = vmul.f32 %v132, %v227
      %v234 = vstv %s70
      %v235 = vmul.f32 %v127, %v234
      %v236 = vmul.f32 %v128, %v234
      %v237 = vmul.f32 %v129, %v234
      %v238 = vmul.f32 %v130, %v234
      %v239 = vmul.f32 %v131, %v234
      %v240 = vmul.f32 %v132, %v234
      %vm247 = vcmask 1045504
      %v248 = vrot.slane %v235, 2
      %v249 = vrot.slane %v236, 2
      %v250 = vsel %vm247, %v248, %v249
      %v251 = vrot.slane %v237, 2
      %v252 = vsel %vm247, %v249, %v251
      %v253 = vrot.slane %v238, 2
      %v254 = vsel %vm247, %v251, %v253
      %v255 = vrot.slane %v239, 2
      %v256 = vsel %vm247, %v253, %v255
      %v257 = vrot.slane %v240, 2
      %v258 = vsel %vm247, %v255, %v257
      %v265 = vadd.f32 %v178, %v250
      %v266 = vadd.f32 %v179, %v252
      %v267 = vadd.f32 %v180, %v254
      %v268 = vadd.f32 %v181, %v256
      %v269 = vadd.f32 %v182, %v258
      %v270 = vadd.f32 %v183, %v257
      %v271 = vstv %s95
      %v272 = vmul.f32 %v127, %v271
      %v273 = vmul.f32 %v128, %v271
      %v274 = vmul.f32 %v129, %v271
      %v275 = vmul.f32 %v130, %v271
      %v276 = vmul.f32 %v131, %v271
      %v277 = vmul.f32 %v132, %v271
      %v284 = vrot.slane %v272, 2
      %v285 = vrot.slane %v273, 2
      %v286 = vsel %vm247, %v284, %v285
      %v287 = vrot.slane %v274, 2
      %v288 = vsel %vm247, %v285, %v287
      %v289 = vrot.slane %v275, 2
      %v290 = vsel %vm247, %v287, %v289
      %v291 = vrot.slane %v276, 2
      %v292 = vsel %vm247, %v289, %v291
      %v293 = vrot.slane %v277, 2
      %v294 = vsel %vm247, %v291, %v293
      %v301 = vadd.f32 %v214, %v286
      %v302 = vadd.f32 %v215, %v288
      %v303 = vadd.f32 %v216, %v290
      %v304 = vadd.f32 %v217, %v292
      %v305 = vadd.f32 %v218, %v294
      %v306 = vadd.f32 %v219, %v293
      %v307 = vstv %s69
      %v308 = vmul.f32 %v127, %v307
      %v309 = vmul.f32 %v128, %v307
      %v310 = vmul.f32 %v129, %v307
      %v311 = vmul.f32 %v130, %v307
      %v312 = vmul.f32 %v131, %v307
      %v313 = vmul.f32 %v132, %v307
      %v320 = vrot.slane %v308, 1
      %v321 = vrot.slane %v309, 1
      %v322 = vsel %vm160, %v320, %v321
      %v323 = vrot.slane %v310, 1
      %v324 = vsel %vm160, %v321, %v323
      %v325 = vrot.slane %v311, 1
      %v326 = vsel %vm160, %v323, %v325
      %v327 = vrot.slane %v312, 1
      %v328 = vsel %vm160, %v325, %v327
      %v329 = vrot.slane %v313, 1
      %v330 = vsel %vm160, %v327, %v329
      %v337 = vadd.f32 %v221, %v322
      %v338 = vadd.f32 %v222, %v324
      %v339 = vadd.f32 %v223, %v326
      %v340 = vadd.f32 %v224, %v328
      %v341 = vadd.f32 %v225, %v330
      %v342 = vadd.f32 %v226, %v329
      %v343 = vstv %s94
      %v344 = vmul.f32 %v127, %v343
      %v345 = vmul.f32 %v128, %v343
      %v346 = vmul.f32 %v129, %v343
      %v347 = vmul.f32 %v130, %v343
      %v348 = vmul.f32 %v131, %v343
      %v349 = vmul.f32 %v132, %v343
      %v356 = vrot.slane %v344, 1
      %v357 = vrot.slane %v345, 1
      %v358 = vsel %vm160, %v356, %v357
      %v359 = vrot.slane %v346, 1
      %v360 = vsel %vm160, %v357, %v359
      %v361 = vrot.slane %v347, 1
      %v362 = vsel %vm160, %v359, %v361
      %v363 = vrot.slane %v348, 1
      %v364 = vsel %vm160, %v361, %v363
      %v365 = vrot.slane %v349, 1
      %v366 = vsel %vm160, %v363, %v365
      %v373 = vadd.f32 %v228, %v358
      %v374 = vadd.f32 %v229, %v360
      %v375 = vadd.f32 %v230, %v362
      %v376 = vadd.f32 %v231, %v364
      %v377 = vadd.f32 %v232, %v366
      %v378 = vadd.f32 %v233, %v365
      %s379 = scalar_lea.vmem [#allocation8], %s125
      %v380 = vld [vmem:[%s379] sm:$0xff]
      %v381 = vld [vmem:[%s379 + $0x8] sm:$0xff]
      %v382 = vld [vmem:[%s379 + $0x10] sm:$0xff]
      %v383 = vld [vmem:[%s379 + $0x18] sm:$0xff]
      %v384 = vld [vmem:[%s379 + $0x20] sm:$0xff]
      %v385 = vld [vmem:[%s379 + $0x28] sm:$0x1f]
      %v386 = vmul.f32 %v380, %v220
      %v387 = vmul.f32 %v381, %v220
      %v388 = vmul.f32 %v382, %v220
      %v389 = vmul.f32 %v383, %v220
      %v390 = vmul.f32 %v384, %v220
      %v391 = vmul.f32 %v385, %v220
      %v392 = vadd.f32 %v265, %v386
      %v393 = vadd.f32 %v266, %v387
      %v394 = vadd.f32 %v267, %v388
      %v395 = vadd.f32 %v268, %v389
      %v396 = vadd.f32 %v269, %v390
      %v397 = vadd.f32 %v270, %v391
      %v398 = vmul.f32 %v380, %v227
      %v399 = vmul.f32 %v381, %v227
      %v400 = vmul.f32 %v382, %v227
      %v401 = vmul.f32 %v383, %v227
      %v402 = vmul.f32 %v384, %v227
      %v403 = vmul.f32 %v385, %v227
      %v404 = vadd.f32 %v301, %v398
      %v405 = vadd.f32 %v302, %v399
      %v406 = vadd.f32 %v303, %v400
      %v407 = vadd.f32 %v304, %v401
      %v408 = vadd.f32 %v305, %v402
      %v409 = vadd.f32 %v306, %v403
      %v410 = vmul.f32 %v380, %v133
      %v411 = vmul.f32 %v381, %v133
      %v412 = vmul.f32 %v382, %v133
      %v413 = vmul.f32 %v383, %v133
      %v414 = vmul.f32 %v384, %v133
      %v415 = vmul.f32 %v385, %v133
      %vm422 = vcmask 1040384
      %v423 = vrot.slane %v410, 7
      %v424 = vrot.slane %v411, 7
      %v425 = vsel %vm422, %v423, %v424
      %v426 = vrot.slane %v412, 7
      %v427 = vsel %vm422, %v424, %v426
      %v428 = vrot.slane %v413, 7
      %v429 = vsel %vm422, %v426, %v428
      %v430 = vrot.slane %v414, 7
      %v431 = vsel %vm422, %v428, %v430
      %v432 = vrot.slane %v415, 7
      %v433 = vsel %vm422, %v430, %v432
      %v440 = vadd.f32 %v337, %v423
      %v441 = vadd.f32 %v338, %v425
      %v442 = vadd.f32 %v339, %v427
      %v443 = vadd.f32 %v340, %v429
      %v444 = vadd.f32 %v341, %v431
      %v445 = vadd.f32 %v342, %v433
      %v446 = vmul.f32 %v380, %v140
      %v447 = vmul.f32 %v381, %v140
      %v448 = vmul.f32 %v382, %v140
      %v449 = vmul.f32 %v383, %v140
      %v450 = vmul.f32 %v384, %v140
      %v451 = vmul.f32 %v385, %v140
      %v458 = vrot.slane %v446, 7
      %v459 = vrot.slane %v447, 7
      %v460 = vsel %vm422, %v458, %v459
      %v461 = vrot.slane %v448, 7
      %v462 = vsel %vm422, %v459, %v461
      %v463 = vrot.slane %v449, 7
      %v464 = vsel %vm422, %v461, %v463
      %v465 = vrot.slane %v450, 7
      %v466 = vsel %vm422, %v463, %v465
      %v467 = vrot.slane %v451, 7
      %v468 = vsel %vm422, %v465, %v467
      %v475 = vadd.f32 %v373, %v458
      %v476 = vadd.f32 %v374, %v460
      %v477 = vadd.f32 %v375, %v462
      %v478 = vadd.f32 %v376, %v464
      %v479 = vadd.f32 %v377, %v466
      %v480 = vadd.f32 %v378, %v468
      %v481 = vmul.f32 %v380, %v307
      %v482 = vmul.f32 %v381, %v307
      %v483 = vmul.f32 %v382, %v307
      %v484 = vmul.f32 %v383, %v307
      %v485 = vmul.f32 %v384, %v307
      %v486 = vmul.f32 %v385, %v307
      %v493 = vrot.slane %v481, 1
      %v494 = vrot.slane %v482, 1
      %v495 = vsel %vm160, %v493, %v494
      %v496 = vrot.slane %v483, 1
      %v497 = vsel %vm160, %v494, %v496
      %v498 = vrot.slane %v484, 1
      %v499 = vsel %vm160, %v496, %v498
      %v500 = vrot.slane %v485, 1
      %v501 = vsel %vm160, %v498, %v500
      %v502 = vrot.slane %v486, 1
      %v503 = vsel %vm160, %v500, %v502
      %v510 = vadd.f32 %v392, %v495
      %v511 = vadd.f32 %v393, %v497
      %v512 = vadd.f32 %v394, %v499
      %v513 = vadd.f32 %v395, %v501
      %v514 = vadd.f32 %v396, %v503
      %v515 = vadd.f32 %v397, %v502
      %v516 = vmul.f32 %v380, %v343
      %v517 = vmul.f32 %v381, %v343
      %v518 = vmul.f32 %v382, %v343
      %v519 = vmul.f32 %v383, %v343
      %v520 = vmul.f32 %v384, %v343
      %v521 = vmul.f32 %v385, %v343
      %v528 = vrot.slane %v516, 1
      %v529 = vrot.slane %v517, 1
      %v530 = vsel %vm160, %v528, %v529
      %v531 = vrot.slane %v518, 1
      %v532 = vsel %vm160, %v529, %v531
      %v533 = vrot.slane %v519, 1
      %v534 = vsel %vm160, %v531, %v533
      %v535 = vrot.slane %v520, 1
      %v536 = vsel %vm160, %v533, %v535
      %v537 = vrot.slane %v521, 1
      %v538 = vsel %vm160, %v535, %v537
      %v545 = vadd.f32 %v404, %v530
      %v546 = vadd.f32 %v405, %v532
      %v547 = vadd.f32 %v406, %v534
      %v548 = vadd.f32 %v407, %v536
      %v549 = vadd.f32 %v408, %v538
      %v550 = vadd.f32 %v409, %v537
      %v551 = vmul.f32 %v380, %v147
      %v552 = vmul.f32 %v381, %v147
      %v553 = vmul.f32 %v382, %v147
      %v554 = vmul.f32 %v383, %v147
      %v555 = vmul.f32 %v384, %v147
      %v556 = vmul.f32 %v385, %v147
      %v557 = vadd.f32 %v440, %v551
      %v558 = vadd.f32 %v441, %v552
      %v559 = vadd.f32 %v442, %v553
      %v560 = vadd.f32 %v443, %v554
      %v561 = vadd.f32 %v444, %v555
      %v562 = vadd.f32 %v445, %v556
      %v563 = vmul.f32 %v380, %v184
      %v564 = vmul.f32 %v381, %v184
      %v565 = vmul.f32 %v382, %v184
      %v566 = vmul.f32 %v383, %v184
      %v567 = vmul.f32 %v384, %v184
      %v568 = vmul.f32 %v385, %v184
      %v569 = vadd.f32 %v475, %v563
      %v570 = vadd.f32 %v476, %v564
      %v571 = vadd.f32 %v477, %v565
      %v572 = vadd.f32 %v478, %v566
      %v573 = vadd.f32 %v479, %v567
      %v574 = vadd.f32 %v480, %v568
      %v575 = vmul.f32 %v380, %v234
      %v576 = vmul.f32 %v381, %v234
      %v577 = vmul.f32 %v382, %v234
      %v578 = vmul.f32 %v383, %v234
      %v579 = vmul.f32 %v384, %v234
      %v580 = vmul.f32 %v385, %v234
      %v587 = vrot.slane %v575, 1
      %v588 = vrot.slane %v576, 1
      %v589 = vsel %vm160, %v587, %v588
      %v590 = vrot.slane %v577, 1
      %v591 = vsel %vm160, %v588, %v590
      %v592 = vrot.slane %v578, 1
      %v593 = vsel %vm160, %v590, %v592
      %v594 = vrot.slane %v579, 1
      %v595 = vsel %vm160, %v592, %v594
      %v596 = vrot.slane %v580, 1
      %v597 = vsel %vm160, %v594, %v596
      %v604 = vadd.f32 %v557, %v589
      %v605 = vadd.f32 %v558, %v591
      %v606 = vadd.f32 %v559, %v593
      %v607 = vadd.f32 %v560, %v595
      %v608 = vadd.f32 %v561, %v597
      %v609 = vadd.f32 %v562, %v596
      %v610 = vmul.f32 %v380, %v271
      %v611 = vmul.f32 %v381, %v271
      %v612 = vmul.f32 %v382, %v271
      %v613 = vmul.f32 %v383, %v271
      %v614 = vmul.f32 %v384, %v271
      %v615 = vmul.f32 %v385, %v271
      %v622 = vrot.slane %v610, 1
      %v623 = vrot.slane %v611, 1
      %v624 = vsel %vm160, %v622, %v623
      %v625 = vrot.slane %v612, 1
      %v626 = vsel %vm160, %v623, %v625
      %v627 = vrot.slane %v613, 1
      %v628 = vsel %vm160, %v625, %v627
      %v629 = vrot.slane %v614, 1
      %v630 = vsel %vm160, %v627, %v629
      %v631 = vrot.slane %v615, 1
      %v632 = vsel %vm160, %v629, %v631
      %v639 = vadd.f32 %v569, %v624
      %v640 = vadd.f32 %v570, %v626
      %v641 = vadd.f32 %v571, %v628
      %v642 = vadd.f32 %v572, %v630
      %v643 = vadd.f32 %v573, %v632
      %v644 = vadd.f32 %v574, %v631
      %s645 = sadd.s32 %s124, 1
      %s646 = smul.u32 %s645, 48
      %s647 = scalar_lea.vmem [#allocation7], %s646
      %v648 = vld [vmem:[%s647] sm:$0xff]
      %v649 = vld [vmem:[%s647 + $0x8] sm:$0xff]
      %v650 = vld [vmem:[%s647 + $0x10] sm:$0xff]
      %v651 = vld [vmem:[%s647 + $0x18] sm:$0xff]
      %v652 = vld [vmem:[%s647 + $0x20] sm:$0xff]
      %v653 = vld [vmem:[%s647 + $0x28] sm:$0x1f]
      %v654 = vstv %s71
      %v655 = vmul.f32 %v648, %v654
      %v656 = vmul.f32 %v649, %v654
      %v657 = vmul.f32 %v650, %v654
      %v658 = vmul.f32 %v651, %v654
      %v659 = vmul.f32 %v652, %v654
      %v660 = vmul.f32 %v653, %v654
      %v661 = vadd.f32 %v510, %v655
      %v662 = vadd.f32 %v511, %v656
      %v663 = vadd.f32 %v512, %v657
      %v664 = vadd.f32 %v513, %v658
      %v665 = vadd.f32 %v514, %v659
      %v666 = vadd.f32 %v515, %v660
      %v667 = vstv %s96
      %v668 = vmul.f32 %v648, %v667
      %v669 = vmul.f32 %v649, %v667
      %v670 = vmul.f32 %v650, %v667
      %v671 = vmul.f32 %v651, %v667
      %v672 = vmul.f32 %v652, %v667
      %v673 = vmul.f32 %v653, %v667
      %v674 = vadd.f32 %v545, %v668
      %v675 = vadd.f32 %v546, %v669
      %v676 = vadd.f32 %v547, %v670
      %v677 = vadd.f32 %v548, %v671
      %v678 = vadd.f32 %v549, %v672
      %v679 = vadd.f32 %v550, %v673
      %v680 = vstv %s73
      %v681 = vmul.f32 %v648, %v680
      %v682 = vmul.f32 %v649, %v680
      %v683 = vmul.f32 %v650, %v680
      %v684 = vmul.f32 %v651, %v680
      %v685 = vmul.f32 %v652, %v680
      %v686 = vmul.f32 %v653, %v680
      %v693 = vrot.slane %v681, 1
      %v694 = vrot.slane %v682, 1
      %v695 = vsel %vm160, %v693, %v694
      %v696 = vrot.slane %v683, 1
      %v697 = vsel %vm160, %v694, %v696
      %v698 = vrot.slane %v684, 1
      %v699 = vsel %vm160, %v696, %v698
      %v700 = vrot.slane %v685, 1
      %v701 = vsel %vm160, %v698, %v700
      %v702 = vrot.slane %v686, 1
      %v703 = vsel %vm160, %v700, %v702
      %v710 = vadd.f32 %v661, %v695
      %v711 = vadd.f32 %v662, %v697
      %v712 = vadd.f32 %v663, %v699
      %v713 = vadd.f32 %v664, %v701
      %v714 = vadd.f32 %v665, %v703
      %v715 = vadd.f32 %v666, %v702
      %v716 = vstv %s98
      %v717 = vmul.f32 %v648, %v716
      %v718 = vmul.f32 %v649, %v716
      %v719 = vmul.f32 %v650, %v716
      %v720 = vmul.f32 %v651, %v716
      %v721 = vmul.f32 %v652, %v716
      %v722 = vmul.f32 %v653, %v716
      %v729 = vrot.slane %v717, 1
      %v730 = vrot.slane %v718, 1
      %v731 = vsel %vm160, %v729, %v730
      %v732 = vrot.slane %v719, 1
      %v733 = vsel %vm160, %v730, %v732
      %v734 = vrot.slane %v720, 1
      %v735 = vsel %vm160, %v732, %v734
      %v736 = vrot.slane %v721, 1
      %v737 = vsel %vm160, %v734, %v736
      %v738 = vrot.slane %v722, 1
      %v739 = vsel %vm160, %v736, %v738
      %v746 = vadd.f32 %v674, %v731
      %v747 = vadd.f32 %v675, %v733
      %v748 = vadd.f32 %v676, %v735
      %v749 = vadd.f32 %v677, %v737
      %v750 = vadd.f32 %v678, %v739
      %v751 = vadd.f32 %v679, %v738
      %v752 = vstv %s72
      %v753 = vmul.f32 %v648, %v752
      %v754 = vmul.f32 %v649, %v752
      %v755 = vmul.f32 %v650, %v752
      %v756 = vmul.f32 %v651, %v752
      %v757 = vmul.f32 %v652, %v752
      %v758 = vmul.f32 %v653, %v752
      %v759 = vadd.f32 %v604, %v753
      %v760 = vadd.f32 %v605, %v754
      %v761 = vadd.f32 %v606, %v755
      %v762 = vadd.f32 %v607, %v756
      %v763 = vadd.f32 %v608, %v757
      %v764 = vadd.f32 %v609, %v758
      %v765 = vstv %s97
      %v766 = vmul.f32 %v648, %v765
      %v767 = vmul.f32 %v649, %v765
      %v768 = vmul.f32 %v650, %v765
      %v769 = vmul.f32 %v651, %v765
      %v770 = vmul.f32 %v652, %v765
      %v771 = vmul.f32 %v653, %v765
      %v772 = vadd.f32 %v639, %v766
      %v773 = vadd.f32 %v640, %v767
      %v774 = vadd.f32 %v641, %v768
      %v775 = vadd.f32 %v642, %v769
      %v776 = vadd.f32 %v643, %v770
      %v777 = vadd.f32 %v644, %v771
      %v778 = vstv %s75
      %v779 = vmul.f32 %v648, %v778
      %v780 = vmul.f32 %v649, %v778
      %v781 = vmul.f32 %v650, %v778
      %v782 = vmul.f32 %v651, %v778
      %v783 = vmul.f32 %v652, %v778
      %v784 = vmul.f32 %v653, %v778
      %v791 = vrot.slane %v779, 2
      %v792 = vrot.slane %v780, 2
      %v793 = vsel %vm247, %v791, %v792
      %v794 = vrot.slane %v781, 2
      %v795 = vsel %vm247, %v792, %v794
      %v796 = vrot.slane %v782, 2
      %v797 = vsel %vm247, %v794, %v796
      %v798 = vrot.slane %v783, 2
      %v799 = vsel %vm247, %v796, %v798
      %v800 = vrot.slane %v784, 2
      %v801 = vsel %vm247, %v798, %v800
      %v808 = vadd.f32 %v710, %v793
      %v809 = vadd.f32 %v711, %v795
      %v810 = vadd.f32 %v712, %v797
      %v811 = vadd.f32 %v713, %v799
      %v812 = vadd.f32 %v714, %v801
      %v813 = vadd.f32 %v715, %v800
      %v814 = vstv %s100
      %v815 = vmul.f32 %v648, %v814
      %v816 = vmul.f32 %v649, %v814
      %v817 = vmul.f32 %v650, %v814
      %v818 = vmul.f32 %v651, %v814
      %v819 = vmul.f32 %v652, %v814
      %v820 = vmul.f32 %v653, %v814
      %v827 = vrot.slane %v815, 2
      %v828 = vrot.slane %v816, 2
      %v829 = vsel %vm247, %v827, %v828
      %v830 = vrot.slane %v817, 2
      %v831 = vsel %vm247, %v828, %v830
      %v832 = vrot.slane %v818, 2
      %v833 = vsel %vm247, %v830, %v832
      %v834 = vrot.slane %v819, 2
      %v835 = vsel %vm247, %v832, %v834
      %v836 = vrot.slane %v820, 2
      %v837 = vsel %vm247, %v834, %v836
      %v844 = vadd.f32 %v746, %v829
      %v845 = vadd.f32 %v747, %v831
      %v846 = vadd.f32 %v748, %v833
      %v847 = vadd.f32 %v749, %v835
      %v848 = vadd.f32 %v750, %v837
      %v849 = vadd.f32 %v751, %v836
      %v850 = vstv %s74
      %v851 = vmul.f32 %v648, %v850
      %v852 = vmul.f32 %v649, %v850
      %v853 = vmul.f32 %v650, %v850
      %v854 = vmul.f32 %v651, %v850
      %v855 = vmul.f32 %v652, %v850
      %v856 = vmul.f32 %v653, %v850
      %v863 = vrot.slane %v851, 1
      %v864 = vrot.slane %v852, 1
      %v865 = vsel %vm160, %v863, %v864
      %v866 = vrot.slane %v853, 1
      %v867 = vsel %vm160, %v864, %v866
      %v868 = vrot.slane %v854, 1
      %v869 = vsel %vm160, %v866, %v868
      %v870 = vrot.slane %v855, 1
      %v871 = vsel %vm160, %v868, %v870
      %v872 = vrot.slane %v856, 1
      %v873 = vsel %vm160, %v870, %v872
      %v880 = vadd.f32 %v759, %v865
      %v881 = vadd.f32 %v760, %v867
      %v882 = vadd.f32 %v761, %v869
      %v883 = vadd.f32 %v762, %v871
      %v884 = vadd.f32 %v763, %v873
      %v885 = vadd.f32 %v764, %v872
      %v886 = vstv %s99
      %v887 = vmul.f32 %v648, %v886
      %v888 = vmul.f32 %v649, %v886
      %v889 = vmul.f32 %v650, %v886
      %v890 = vmul.f32 %v651, %v886
      %v891 = vmul.f32 %v652, %v886
      %v892 = vmul.f32 %v653, %v886
      %v899 = vrot.slane %v887, 1
      %v900 = vrot.slane %v888, 1
      %v901 = vsel %vm160, %v899, %v900
      %v902 = vrot.slane %v889, 1
      %v903 = vsel %vm160, %v900, %v902
      %v904 = vrot.slane %v890, 1
      %v905 = vsel %vm160, %v902, %v904
      %v906 = vrot.slane %v891, 1
      %v907 = vsel %vm160, %v904, %v906
      %v908 = vrot.slane %v892, 1
      %v909 = vsel %vm160, %v906, %v908
      %v916 = vadd.f32 %v772, %v901
      %v917 = vadd.f32 %v773, %v903
      %v918 = vadd.f32 %v774, %v905
      %v919 = vadd.f32 %v775, %v907
      %v920 = vadd.f32 %v776, %v909
      %v921 = vadd.f32 %v777, %v908
      %s922 = scalar_lea.vmem [#allocation8], %s646
      %v923 = vld [vmem:[%s922] sm:$0xff]
      %v924 = vld [vmem:[%s922 + $0x8] sm:$0xff]
      %v925 = vld [vmem:[%s922 + $0x10] sm:$0xff]
      %v926 = vld [vmem:[%s922 + $0x18] sm:$0xff]
      %v927 = vld [vmem:[%s922 + $0x20] sm:$0xff]
      %v928 = vld [vmem:[%s922 + $0x28] sm:$0x1f]
      %v929 = vmul.f32 %v923, %v752
      %v930 = vmul.f32 %v924, %v752
      %v931 = vmul.f32 %v925, %v752
      %v932 = vmul.f32 %v926, %v752
      %v933 = vmul.f32 %v927, %v752
      %v934 = vmul.f32 %v928, %v752
      %v935 = vadd.f32 %v808, %v929
      %v936 = vadd.f32 %v809, %v930
      %v937 = vadd.f32 %v810, %v931
      %v938 = vadd.f32 %v811, %v932
      %v939 = vadd.f32 %v812, %v933
      %v940 = vadd.f32 %v813, %v934
      %v941 = vmul.f32 %v923, %v765
      %v942 = vmul.f32 %v924, %v765
      %v943 = vmul.f32 %v925, %v765
      %v944 = vmul.f32 %v926, %v765
      %v945 = vmul.f32 %v927, %v765
      %v946 = vmul.f32 %v928, %v765
      %v947 = vadd.f32 %v844, %v941
      %v948 = vadd.f32 %v845, %v942
      %v949 = vadd.f32 %v846, %v943
      %v950 = vadd.f32 %v847, %v944
      %v951 = vadd.f32 %v848, %v945
      %v952 = vadd.f32 %v849, %v946
      %v953 = vmul.f32 %v923, %v654
      %v954 = vmul.f32 %v924, %v654
      %v955 = vmul.f32 %v925, %v654
      %v956 = vmul.f32 %v926, %v654
      %v957 = vmul.f32 %v927, %v654
      %v958 = vmul.f32 %v928, %v654
      %v965 = vrot.slane %v953, 7
      %v966 = vrot.slane %v954, 7
      %v967 = vsel %vm422, %v965, %v966
      %v968 = vrot.slane %v955, 7
      %v969 = vsel %vm422, %v966, %v968
      %v970 = vrot.slane %v956, 7
      %v971 = vsel %vm422, %v968, %v970
      %v972 = vrot.slane %v957, 7
      %v973 = vsel %vm422, %v970, %v972
      %v974 = vrot.slane %v958, 7
      %v975 = vsel %vm422, %v972, %v974
      %v982 = vadd.f32 %v880, %v965
      %v983 = vadd.f32 %v881, %v967
      %v984 = vadd.f32 %v882, %v969
      %v985 = vadd.f32 %v883, %v971
      %v986 = vadd.f32 %v884, %v973
      %v987 = vadd.f32 %v885, %v975
      %v988 = vmul.f32 %v923, %v667
      %v989 = vmul.f32 %v924, %v667
      %v990 = vmul.f32 %v925, %v667
      %v991 = vmul.f32 %v926, %v667
      %v992 = vmul.f32 %v927, %v667
      %v993 = vmul.f32 %v928, %v667
      %v1000 = vrot.slane %v988, 7
      %v1001 = vrot.slane %v989, 7
      %v1002 = vsel %vm422, %v1000, %v1001
      %v1003 = vrot.slane %v990, 7
      %v1004 = vsel %vm422, %v1001, %v1003
      %v1005 = vrot.slane %v991, 7
      %v1006 = vsel %vm422, %v1003, %v1005
      %v1007 = vrot.slane %v992, 7
      %v1008 = vsel %vm422, %v1005, %v1007
      %v1009 = vrot.slane %v993, 7
      %v1010 = vsel %vm422, %v1007, %v1009
      %v1017 = vadd.f32 %v916, %v1000
      %v1018 = vadd.f32 %v917, %v1002
      %v1019 = vadd.f32 %v918, %v1004
      %v1020 = vadd.f32 %v919, %v1006
      %v1021 = vadd.f32 %v920, %v1008
      %v1022 = vadd.f32 %v921, %v1010
      %v1023 = vmul.f32 %v923, %v850
      %v1024 = vmul.f32 %v924, %v850
      %v1025 = vmul.f32 %v925, %v850
      %v1026 = vmul.f32 %v926, %v850
      %v1027 = vmul.f32 %v927, %v850
      %v1028 = vmul.f32 %v928, %v850
      %v1035 = vrot.slane %v1023, 1
      %v1036 = vrot.slane %v1024, 1
      %v1037 = vsel %vm160, %v1035, %v1036
      %v1038 = vrot.slane %v1025, 1
      %v1039 = vsel %vm160, %v1036, %v1038
      %v1040 = vrot.slane %v1026, 1
      %v1041 = vsel %vm160, %v1038, %v1040
      %v1042 = vrot.slane %v1027, 1
      %v1043 = vsel %vm160, %v1040, %v1042
      %v1044 = vrot.slane %v1028, 1
      %v1045 = vsel %vm160, %v1042, %v1044
      %v1052 = vadd.f32 %v935, %v1037
      %v1053 = vadd.f32 %v936, %v1039
      %v1054 = vadd.f32 %v937, %v1041
      %v1055 = vadd.f32 %v938, %v1043
      %v1056 = vadd.f32 %v939, %v1045
      %v1057 = vadd.f32 %v940, %v1044
      %v1058 = vmul.f32 %v923, %v886
      %v1059 = vmul.f32 %v924, %v886
      %v1060 = vmul.f32 %v925, %v886
      %v1061 = vmul.f32 %v926, %v886
      %v1062 = vmul.f32 %v927, %v886
      %v1063 = vmul.f32 %v928, %v886
      %v1070 = vrot.slane %v1058, 1
      %v1071 = vrot.slane %v1059, 1
      %v1072 = vsel %vm160, %v1070, %v1071
      %v1073 = vrot.slane %v1060, 1
      %v1074 = vsel %vm160, %v1071, %v1073
      %v1075 = vrot.slane %v1061, 1
      %v1076 = vsel %vm160, %v1073, %v1075
      %v1077 = vrot.slane %v1062, 1
      %v1078 = vsel %vm160, %v1075, %v1077
      %v1079 = vrot.slane %v1063, 1
      %v1080 = vsel %vm160, %v1077, %v1079
      %v1087 = vadd.f32 %v947, %v1072
      %v1088 = vadd.f32 %v948, %v1074
      %v1089 = vadd.f32 %v949, %v1076
      %v1090 = vadd.f32 %v950, %v1078
      %v1091 = vadd.f32 %v951, %v1080
      %v1092 = vadd.f32 %v952, %v1079
      %v1093 = vmul.f32 %v923, %v680
      %v1094 = vmul.f32 %v924, %v680
      %v1095 = vmul.f32 %v925, %v680
      %v1096 = vmul.f32 %v926, %v680
      %v1097 = vmul.f32 %v927, %v680
      %v1098 = vmul.f32 %v928, %v680
      %v1099 = vadd.f32 %v982, %v1093
      %v1100 = vadd.f32 %v983, %v1094
      %v1101 = vadd.f32 %v984, %v1095
      %v1102 = vadd.f32 %v985, %v1096
      %v1103 = vadd.f32 %v986, %v1097
      %v1104 = vadd.f32 %v987, %v1098
      %v1105 = vmul.f32 %v923, %v716
      %v1106 = vmul.f32 %v924, %v716
      %v1107 = vmul.f32 %v925, %v716
      %v1108 = vmul.f32 %v926, %v716
      %v1109 = vmul.f32 %v927, %v716
      %v1110 = vmul.f32 %v928, %v716
      %v1111 = vadd.f32 %v1017, %v1105
      %v1112 = vadd.f32 %v1018, %v1106
      %v1113 = vadd.f32 %v1019, %v1107
      %v1114 = vadd.f32 %v1020, %v1108
      %v1115 = vadd.f32 %v1021, %v1109
      %v1116 = vadd.f32 %v1022, %v1110
      %v1117 = vmul.f32 %v923, %v778
      %v1118 = vmul.f32 %v924, %v778
      %v1119 = vmul.f32 %v925, %v778
      %v1120 = vmul.f32 %v926, %v778
      %v1121 = vmul.f32 %v927, %v778
      %v1122 = vmul.f32 %v928, %v778
      %v1129 = vrot.slane %v1117, 1
      %v1130 = vrot.slane %v1118, 1
      %v1131 = vsel %vm160, %v1129, %v1130
      %v1132 = vrot.slane %v1119, 1
      %v1133 = vsel %vm160, %v1130, %v1132
      %v1134 = vrot.slane %v1120, 1
      %v1135 = vsel %vm160, %v1132, %v1134
      %v1136 = vrot.slane %v1121, 1
      %v1137 = vsel %vm160, %v1134, %v1136
      %v1138 = vrot.slane %v1122, 1
      %v1139 = vsel %vm160, %v1136, %v1138
      %v1146 = vadd.f32 %v1099, %v1131
      %v1147 = vadd.f32 %v1100, %v1133
      %v1148 = vadd.f32 %v1101, %v1135
      %v1149 = vadd.f32 %v1102, %v1137
      %v1150 = vadd.f32 %v1103, %v1139
      %v1151 = vadd.f32 %v1104, %v1138
      %v1152 = vmul.f32 %v923, %v814
      %v1153 = vmul.f32 %v924, %v814
      %v1154 = vmul.f32 %v925, %v814
      %v1155 = vmul.f32 %v926, %v814
      %v1156 = vmul.f32 %v927, %v814
      %v1157 = vmul.f32 %v928, %v814
      %v1164 = vrot.slane %v1152, 1
      %v1165 = vrot.slane %v1153, 1
      %v1166 = vsel %vm160, %v1164, %v1165
      %v1167 = vrot.slane %v1154, 1
      %v1168 = vsel %vm160, %v1165, %v1167
      %v1169 = vrot.slane %v1155, 1
      %v1170 = vsel %vm160, %v1167, %v1169
      %v1171 = vrot.slane %v1156, 1
      %v1172 = vsel %vm160, %v1169, %v1171
      %v1173 = vrot.slane %v1157, 1
      %v1174 = vsel %vm160, %v1171, %v1173
      %v1181 = vadd.f32 %v1111, %v1166
      %v1182 = vadd.f32 %v1112, %v1168
      %v1183 = vadd.f32 %v1113, %v1170
      %v1184 = vadd.f32 %v1114, %v1172
      %v1185 = vadd.f32 %v1115, %v1174
      %v1186 = vadd.f32 %v1116, %v1173
      %s1187 = sadd.s32 %s124, 2
      %s1188 = smul.u32 %s1187, 48
      %s1189 = scalar_lea.vmem [#allocation7], %s1188
      %v1190 = vld [vmem:[%s1189] sm:$0xff]
      %v1191 = vld [vmem:[%s1189 + $0x8] sm:$0xff]
      %v1192 = vld [vmem:[%s1189 + $0x10] sm:$0xff]
      %v1193 = vld [vmem:[%s1189 + $0x18] sm:$0xff]
      %v1194 = vld [vmem:[%s1189 + $0x20] sm:$0xff]
      %v1195 = vld [vmem:[%s1189 + $0x28] sm:$0x1f]
      %v1196 = vstv %s76
      %v1197 = vmul.f32 %v1190, %v1196
      %v1198 = vmul.f32 %v1191, %v1196
      %v1199 = vmul.f32 %v1192, %v1196
      %v1200 = vmul.f32 %v1193, %v1196
      %v1201 = vmul.f32 %v1194, %v1196
      %v1202 = vmul.f32 %v1195, %v1196
      %v1203 = vadd.f32 %v1052, %v1197
      %v1204 = vadd.f32 %v1053, %v1198
      %v1205 = vadd.f32 %v1054, %v1199
      %v1206 = vadd.f32 %v1055, %v1200
      %v1207 = vadd.f32 %v1056, %v1201
      %v1208 = vadd.f32 %v1057, %v1202
      %v1209 = vstv %s101
      %v1210 = vmul.f32 %v1190, %v1209
      %v1211 = vmul.f32 %v1191, %v1209
      %v1212 = vmul.f32 %v1192, %v1209
      %v1213 = vmul.f32 %v1193, %v1209
      %v1214 = vmul.f32 %v1194, %v1209
      %v1215 = vmul.f32 %v1195, %v1209
      %v1216 = vadd.f32 %v1087, %v1210
      %v1217 = vadd.f32 %v1088, %v1211
      %v1218 = vadd.f32 %v1089, %v1212
      %v1219 = vadd.f32 %v1090, %v1213
      %v1220 = vadd.f32 %v1091, %v1214
      %v1221 = vadd.f32 %v1092, %v1215
      %v1222 = vstv %s78
      %v1223 = vmul.f32 %v1190, %v1222
      %v1224 = vmul.f32 %v1191, %v1222
      %v1225 = vmul.f32 %v1192, %v1222
      %v1226 = vmul.f32 %v1193, %v1222
      %v1227 = vmul.f32 %v1194, %v1222
      %v1228 = vmul.f32 %v1195, %v1222
      %v1235 = vrot.slane %v1223, 1
      %v1236 = vrot.slane %v1224, 1
      %v1237 = vsel %vm160, %v1235, %v1236
      %v1238 = vrot.slane %v1225, 1
      %v1239 = vsel %vm160, %v1236, %v1238
      %v1240 = vrot.slane %v1226, 1
      %v1241 = vsel %vm160, %v1238, %v1240
      %v1242 = vrot.slane %v1227, 1
      %v1243 = vsel %vm160, %v1240, %v1242
      %v1244 = vrot.slane %v1228, 1
      %v1245 = vsel %vm160, %v1242, %v1244
      %v1252 = vadd.f32 %v1203, %v1237
      %v1253 = vadd.f32 %v1204, %v1239
      %v1254 = vadd.f32 %v1205, %v1241
      %v1255 = vadd.f32 %v1206, %v1243
      %v1256 = vadd.f32 %v1207, %v1245
      %v1257 = vadd.f32 %v1208, %v1244
      %v1258 = vstv %s103
      %v1259 = vmul.f32 %v1190, %v1258
      %v1260 = vmul.f32 %v1191, %v1258
      %v1261 = vmul.f32 %v1192, %v1258
      %v1262 = vmul.f32 %v1193, %v1258
      %v1263 = vmul.f32 %v1194, %v1258
      %v1264 = vmul.f32 %v1195, %v1258
      %v1271 = vrot.slane %v1259, 1
      %v1272 = vrot.slane %v1260, 1
      %v1273 = vsel %vm160, %v1271, %v1272
      %v1274 = vrot.slane %v1261, 1
      %v1275 = vsel %vm160, %v1272, %v1274
      %v1276 = vrot.slane %v1262, 1
      %v1277 = vsel %vm160, %v1274, %v1276
      %v1278 = vrot.slane %v1263, 1
      %v1279 = vsel %vm160, %v1276, %v1278
      %v1280 = vrot.slane %v1264, 1
      %v1281 = vsel %vm160, %v1278, %v1280
      %v1288 = vadd.f32 %v1216, %v1273
      %v1289 = vadd.f32 %v1217, %v1275
      %v1290 = vadd.f32 %v1218, %v1277
      %v1291 = vadd.f32 %v1219, %v1279
      %v1292 = vadd.f32 %v1220, %v1281
      %v1293 = vadd.f32 %v1221, %v1280
      %v1294 = vstv %s77
      %v1295 = vmul.f32 %v1190, %v1294
      %v1296 = vmul.f32 %v1191, %v1294
      %v1297 = vmul.f32 %v1192, %v1294
      %v1298 = vmul.f32 %v1193, %v1294
      %v1299 = vmul.f32 %v1194, %v1294
      %v1300 = vmul.f32 %v1195, %v1294
      %v1301 = vadd.f32 %v1146, %v1295
      %v1302 = vadd.f32 %v1147, %v1296
      %v1303 = vadd.f32 %v1148, %v1297
      %v1304 = vadd.f32 %v1149, %v1298
      %v1305 = vadd.f32 %v1150, %v1299
      %v1306 = vadd.f32 %v1151, %v1300
      %v1307 = vstv %s102
      %v1308 = vmul.f32 %v1190, %v1307
      %v1309 = vmul.f32 %v1191, %v1307
      %v1310 = vmul.f32 %v1192, %v1307
      %v1311 = vmul.f32 %v1193, %v1307
      %v1312 = vmul.f32 %v1194, %v1307
      %v1313 = vmul.f32 %v1195, %v1307
      %v1314 = vadd.f32 %v1181, %v1308
      %v1315 = vadd.f32 %v1182, %v1309
      %v1316 = vadd.f32 %v1183, %v1310
      %v1317 = vadd.f32 %v1184, %v1311
      %v1318 = vadd.f32 %v1185, %v1312
      %v1319 = vadd.f32 %v1186, %v1313
      %v1320 = vstv %s80
      %v1321 = vmul.f32 %v1190, %v1320
      %v1322 = vmul.f32 %v1191, %v1320
      %v1323 = vmul.f32 %v1192, %v1320
      %v1324 = vmul.f32 %v1193, %v1320
      %v1325 = vmul.f32 %v1194, %v1320
      %v1326 = vmul.f32 %v1195, %v1320
      %v1333 = vrot.slane %v1321, 2
      %v1334 = vrot.slane %v1322, 2
      %v1335 = vsel %vm247, %v1333, %v1334
      %v1336 = vrot.slane %v1323, 2
      %v1337 = vsel %vm247, %v1334, %v1336
      %v1338 = vrot.slane %v1324, 2
      %v1339 = vsel %vm247, %v1336, %v1338
      %v1340 = vrot.slane %v1325, 2
      %v1341 = vsel %vm247, %v1338, %v1340
      %v1342 = vrot.slane %v1326, 2
      %v1343 = vsel %vm247, %v1340, %v1342
      %v1350 = vadd.f32 %v1252, %v1335
      %v1351 = vadd.f32 %v1253, %v1337
      %v1352 = vadd.f32 %v1254, %v1339
      %v1353 = vadd.f32 %v1255, %v1341
      %v1354 = vadd.f32 %v1256, %v1343
      %v1355 = vadd.f32 %v1257, %v1342
      %v1356 = vstv %s105
      %v1357 = vmul.f32 %v1190, %v1356
      %v1358 = vmul.f32 %v1191, %v1356
      %v1359 = vmul.f32 %v1192, %v1356
      %v1360 = vmul.f32 %v1193, %v1356
      %v1361 = vmul.f32 %v1194, %v1356
      %v1362 = vmul.f32 %v1195, %v1356
      %v1369 = vrot.slane %v1357, 2
      %v1370 = vrot.slane %v1358, 2
      %v1371 = vsel %vm247, %v1369, %v1370
      %v1372 = vrot.slane %v1359, 2
      %v1373 = vsel %vm247, %v1370, %v1372
      %v1374 = vrot.slane %v1360, 2
      %v1375 = vsel %vm247, %v1372, %v1374
      %v1376 = vrot.slane %v1361, 2
      %v1377 = vsel %vm247, %v1374, %v1376
      %v1378 = vrot.slane %v1362, 2
      %v1379 = vsel %vm247, %v1376, %v1378
      %v1386 = vadd.f32 %v1288, %v1371
      %v1387 = vadd.f32 %v1289, %v1373
      %v1388 = vadd.f32 %v1290, %v1375
      %v1389 = vadd.f32 %v1291, %v1377
      %v1390 = vadd.f32 %v1292, %v1379
      %v1391 = vadd.f32 %v1293, %v1378
      %v1392 = vstv %s79
      %v1393 = vmul.f32 %v1190, %v1392
      %v1394 = vmul.f32 %v1191, %v1392
      %v1395 = vmul.f32 %v1192, %v1392
      %v1396 = vmul.f32 %v1193, %v1392
      %v1397 = vmul.f32 %v1194, %v1392
      %v1398 = vmul.f32 %v1195, %v1392
      %v1405 = vrot.slane %v1393, 1
      %v1406 = vrot.slane %v1394, 1
      %v1407 = vsel %vm160, %v1405, %v1406
      %v1408 = vrot.slane %v1395, 1
      %v1409 = vsel %vm160, %v1406, %v1408
      %v1410 = vrot.slane %v1396, 1
      %v1411 = vsel %vm160, %v1408, %v1410
      %v1412 = vrot.slane %v1397, 1
      %v1413 = vsel %vm160, %v1410, %v1412
      %v1414 = vrot.slane %v1398, 1
      %v1415 = vsel %vm160, %v1412, %v1414
      %v1422 = vadd.f32 %v1301, %v1407
      %v1423 = vadd.f32 %v1302, %v1409
      %v1424 = vadd.f32 %v1303, %v1411
      %v1425 = vadd.f32 %v1304, %v1413
      %v1426 = vadd.f32 %v1305, %v1415
      %v1427 = vadd.f32 %v1306, %v1414
      %v1428 = vstv %s104
      %v1429 = vmul.f32 %v1190, %v1428
      %v1430 = vmul.f32 %v1191, %v1428
      %v1431 = vmul.f32 %v1192, %v1428
      %v1432 = vmul.f32 %v1193, %v1428
      %v1433 = vmul.f32 %v1194, %v1428
      %v1434 = vmul.f32 %v1195, %v1428
      %v1441 = vrot.slane %v1429, 1
      %v1442 = vrot.slane %v1430, 1
      %v1443 = vsel %vm160, %v1441, %v1442
      %v1444 = vrot.slane %v1431, 1
      %v1445 = vsel %vm160, %v1442, %v1444
      %v1446 = vrot.slane %v1432, 1
      %v1447 = vsel %vm160, %v1444, %v1446
      %v1448 = vrot.slane %v1433, 1
      %v1449 = vsel %vm160, %v1446, %v1448
      %v1450 = vrot.slane %v1434, 1
      %v1451 = vsel %vm160, %v1448, %v1450
      %v1458 = vadd.f32 %v1314, %v1443
      %v1459 = vadd.f32 %v1315, %v1445
      %v1460 = vadd.f32 %v1316, %v1447
      %v1461 = vadd.f32 %v1317, %v1449
      %v1462 = vadd.f32 %v1318, %v1451
      %v1463 = vadd.f32 %v1319, %v1450
      %s1464 = scalar_lea.vmem [#allocation8], %s1188
      %v1465 = vld [vmem:[%s1464] sm:$0xff]
      %v1466 = vld [vmem:[%s1464 + $0x8] sm:$0xff]
      %v1467 = vld [vmem:[%s1464 + $0x10] sm:$0xff]
      %v1468 = vld [vmem:[%s1464 + $0x18] sm:$0xff]
      %v1469 = vld [vmem:[%s1464 + $0x20] sm:$0xff]
      %v1470 = vld [vmem:[%s1464 + $0x28] sm:$0x1f]
      %v1471 = vmul.f32 %v1465, %v1294
      %v1472 = vmul.f32 %v1466, %v1294
      %v1473 = vmul.f32 %v1467, %v1294
      %v1474 = vmul.f32 %v1468, %v1294
      %v1475 = vmul.f32 %v1469, %v1294
      %v1476 = vmul.f32 %v1470, %v1294
      %v1477 = vadd.f32 %v1350, %v1471
      %v1478 = vadd.f32 %v1351, %v1472
      %v1479 = vadd.f32 %v1352, %v1473
      %v1480 = vadd.f32 %v1353, %v1474
      %v1481 = vadd.f32 %v1354, %v1475
      %v1482 = vadd.f32 %v1355, %v1476
      %v1483 = vmul.f32 %v1465, %v1307
      %v1484 = vmul.f32 %v1466, %v1307
      %v1485 = vmul.f32 %v1467, %v1307
      %v1486 = vmul.f32 %v1468, %v1307
      %v1487 = vmul.f32 %v1469, %v1307
      %v1488 = vmul.f32 %v1470, %v1307
      %v1489 = vadd.f32 %v1386, %v1483
      %v1490 = vadd.f32 %v1387, %v1484
      %v1491 = vadd.f32 %v1388, %v1485
      %v1492 = vadd.f32 %v1389, %v1486
      %v1493 = vadd.f32 %v1390, %v1487
      %v1494 = vadd.f32 %v1391, %v1488
      %v1495 = vmul.f32 %v1465, %v1196
      %v1496 = vmul.f32 %v1466, %v1196
      %v1497 = vmul.f32 %v1467, %v1196
      %v1498 = vmul.f32 %v1468, %v1196
      %v1499 = vmul.f32 %v1469, %v1196
      %v1500 = vmul.f32 %v1470, %v1196
      %v1507 = vrot.slane %v1495, 7
      %v1508 = vrot.slane %v1496, 7
      %v1509 = vsel %vm422, %v1507, %v1508
      %v1510 = vrot.slane %v1497, 7
      %v1511 = vsel %vm422, %v1508, %v1510
      %v1512 = vrot.slane %v1498, 7
      %v1513 = vsel %vm422, %v1510, %v1512
      %v1514 = vrot.slane %v1499, 7
      %v1515 = vsel %vm422, %v1512, %v1514
      %v1516 = vrot.slane %v1500, 7
      %v1517 = vsel %vm422, %v1514, %v1516
      %v1524 = vadd.f32 %v1422, %v1507
      %v1525 = vadd.f32 %v1423, %v1509
      %v1526 = vadd.f32 %v1424, %v1511
      %v1527 = vadd.f32 %v1425, %v1513
      %v1528 = vadd.f32 %v1426, %v1515
      %v1529 = vadd.f32 %v1427, %v1517
      %v1530 = vmul.f32 %v1465, %v1209
      %v1531 = vmul.f32 %v1466, %v1209
      %v1532 = vmul.f32 %v1467, %v1209
      %v1533 = vmul.f32 %v1468, %v1209
      %v1534 = vmul.f32 %v1469, %v1209
      %v1535 = vmul.f32 %v1470, %v1209
      %v1542 = vrot.slane %v1530, 7
      %v1543 = vrot.slane %v1531, 7
      %v1544 = vsel %vm422, %v1542, %v1543
      %v1545 = vrot.slane %v1532, 7
      %v1546 = vsel %vm422, %v1543, %v1545
      %v1547 = vrot.slane %v1533, 7
      %v1548 = vsel %vm422, %v1545, %v1547
      %v1549 = vrot.slane %v1534, 7
      %v1550 = vsel %vm422, %v1547, %v1549
      %v1551 = vrot.slane %v1535, 7
      %v1552 = vsel %vm422, %v1549, %v1551
      %v1559 = vadd.f32 %v1458, %v1542
      %v1560 = vadd.f32 %v1459, %v1544
      %v1561 = vadd.f32 %v1460, %v1546
      %v1562 = vadd.f32 %v1461, %v1548
      %v1563 = vadd.f32 %v1462, %v1550
      %v1564 = vadd.f32 %v1463, %v1552
      %v1565 = vmul.f32 %v1465, %v1392
      %v1566 = vmul.f32 %v1466, %v1392
      %v1567 = vmul.f32 %v1467, %v1392
      %v1568 = vmul.f32 %v1468, %v1392
      %v1569 = vmul.f32 %v1469, %v1392
      %v1570 = vmul.f32 %v1470, %v1392
      %v1577 = vrot.slane %v1565, 1
      %v1578 = vrot.slane %v1566, 1
      %v1579 = vsel %vm160, %v1577, %v1578
      %v1580 = vrot.slane %v1567, 1
      %v1581 = vsel %vm160, %v1578, %v1580
      %v1582 = vrot.slane %v1568, 1
      %v1583 = vsel %vm160, %v1580, %v1582
      %v1584 = vrot.slane %v1569, 1
      %v1585 = vsel %vm160, %v1582, %v1584
      %v1586 = vrot.slane %v1570, 1
      %v1587 = vsel %vm160, %v1584, %v1586
      %v1594 = vadd.f32 %v1477, %v1579
      %v1595 = vadd.f32 %v1478, %v1581
      %v1596 = vadd.f32 %v1479, %v1583
      %v1597 = vadd.f32 %v1480, %v1585
      %v1598 = vadd.f32 %v1481, %v1587
      %v1599 = vadd.f32 %v1482, %v1586
      %v1600 = vmul.f32 %v1465, %v1428
      %v1601 = vmul.f32 %v1466, %v1428
      %v1602 = vmul.f32 %v1467, %v1428
      %v1603 = vmul.f32 %v1468, %v1428
      %v1604 = vmul.f32 %v1469, %v1428
      %v1605 = vmul.f32 %v1470, %v1428
      %v1612 = vrot.slane %v1600, 1
      %v1613 = vrot.slane %v1601, 1
      %v1614 = vsel %vm160, %v1612, %v1613
      %v1615 = vrot.slane %v1602, 1
      %v1616 = vsel %vm160, %v1613, %v1615
      %v1617 = vrot.slane %v1603, 1
      %v1618 = vsel %vm160, %v1615, %v1617
      %v1619 = vrot.slane %v1604, 1
      %v1620 = vsel %vm160, %v1617, %v1619
      %v1621 = vrot.slane %v1605, 1
      %v1622 = vsel %vm160, %v1619, %v1621
      %v1629 = vadd.f32 %v1489, %v1614
      %v1630 = vadd.f32 %v1490, %v1616
      %v1631 = vadd.f32 %v1491, %v1618
      %v1632 = vadd.f32 %v1492, %v1620
      %v1633 = vadd.f32 %v1493, %v1622
      %v1634 = vadd.f32 %v1494, %v1621
      %v1635 = vmul.f32 %v1465, %v1222
      %v1636 = vmul.f32 %v1466, %v1222
      %v1637 = vmul.f32 %v1467, %v1222
      %v1638 = vmul.f32 %v1468, %v1222
      %v1639 = vmul.f32 %v1469, %v1222
      %v1640 = vmul.f32 %v1470, %v1222
      %v1641 = vadd.f32 %v1524, %v1635
      %v1642 = vadd.f32 %v1525, %v1636
      %v1643 = vadd.f32 %v1526, %v1637
      %v1644 = vadd.f32 %v1527, %v1638
      %v1645 = vadd.f32 %v1528, %v1639
      %v1646 = vadd.f32 %v1529, %v1640
      %v1647 = vmul.f32 %v1465, %v1258
      %v1648 = vmul.f32 %v1466, %v1258
      %v1649 = vmul.f32 %v1467, %v1258
      %v1650 = vmul.f32 %v1468, %v1258
      %v1651 = vmul.f32 %v1469, %v1258
      %v1652 = vmul.f32 %v1470, %v1258
      %v1653 = vadd.f32 %v1559, %v1647
      %v1654 = vadd.f32 %v1560, %v1648
      %v1655 = vadd.f32 %v1561, %v1649
      %v1656 = vadd.f32 %v1562, %v1650
      %v1657 = vadd.f32 %v1563, %v1651
      %v1658 = vadd.f32 %v1564, %v1652
      %v1659 = vmul.f32 %v1465, %v1320
      %v1660 = vmul.f32 %v1466, %v1320
      %v1661 = vmul.f32 %v1467, %v1320
      %v1662 = vmul.f32 %v1468, %v1320
      %v1663 = vmul.f32 %v1469, %v1320
      %v1664 = vmul.f32 %v1470, %v1320
      %v1671 = vrot.slane %v1659, 1
      %v1672 = vrot.slane %v1660, 1
      %v1673 = vsel %vm160, %v1671, %v1672
      %v1674 = vrot.slane %v1661, 1
      %v1675 = vsel %vm160, %v1672, %v1674
      %v1676 = vrot.slane %v1662, 1
      %v1677 = vsel %vm160, %v1674, %v1676
      %v1678 = vrot.slane %v1663, 1
      %v1679 = vsel %vm160, %v1676, %v1678
      %v1680 = vrot.slane %v1664, 1
      %v1681 = vsel %vm160, %v1678, %v1680
      %v1688 = vadd.f32 %v1641, %v1673
      %v1689 = vadd.f32 %v1642, %v1675
      %v1690 = vadd.f32 %v1643, %v1677
      %v1691 = vadd.f32 %v1644, %v1679
      %v1692 = vadd.f32 %v1645, %v1681
      %v1693 = vadd.f32 %v1646, %v1680
      %v1694 = vmul.f32 %v1465, %v1356
      %v1695 = vmul.f32 %v1466, %v1356
      %v1696 = vmul.f32 %v1467, %v1356
      %v1697 = vmul.f32 %v1468, %v1356
      %v1698 = vmul.f32 %v1469, %v1356
      %v1699 = vmul.f32 %v1470, %v1356
      %v1706 = vrot.slane %v1694, 1
      %v1707 = vrot.slane %v1695, 1
      %v1708 = vsel %vm160, %v1706, %v1707
      %v1709 = vrot.slane %v1696, 1
      %v1710 = vsel %vm160, %v1707, %v1709
      %v1711 = vrot.slane %v1697, 1
      %v1712 = vsel %vm160, %v1709, %v1711
      %v1713 = vrot.slane %v1698, 1
      %v1714 = vsel %vm160, %v1711, %v1713
      %v1715 = vrot.slane %v1699, 1
      %v1716 = vsel %vm160, %v1713, %v1715
      %v1723 = vadd.f32 %v1653, %v1708
      %v1724 = vadd.f32 %v1654, %v1710
      %v1725 = vadd.f32 %v1655, %v1712
      %v1726 = vadd.f32 %v1656, %v1714
      %v1727 = vadd.f32 %v1657, %v1716
      %v1728 = vadd.f32 %v1658, %v1715
      %s1729 = sadd.s32 %s124, 3
      %s1730 = smul.u32 %s1729, 48
      %s1731 = scalar_lea.vmem [#allocation7], %s1730
      %v1732 = vld [vmem:[%s1731] sm:$0xff]
      %v1733 = vld [vmem:[%s1731 + $0x8] sm:$0xff]
      %v1734 = vld [vmem:[%s1731 + $0x10] sm:$0xff]
      %v1735 = vld [vmem:[%s1731 + $0x18] sm:$0xff]
      %v1736 = vld [vmem:[%s1731 + $0x20] sm:$0xff]
      %v1737 = vld [vmem:[%s1731 + $0x28] sm:$0x1f]
      %v1738 = vstv %s81
      %v1739 = vmul.f32 %v1732, %v1738
      %v1740 = vmul.f32 %v1733, %v1738
      %v1741 = vmul.f32 %v1734, %v1738
      %v1742 = vmul.f32 %v1735, %v1738
      %v1743 = vmul.f32 %v1736, %v1738
      %v1744 = vmul.f32 %v1737, %v1738
      %v1745 = vadd.f32 %v1594, %v1739
      %v1746 = vadd.f32 %v1595, %v1740
      %v1747 = vadd.f32 %v1596, %v1741
      %v1748 = vadd.f32 %v1597, %v1742
      %v1749 = vadd.f32 %v1598, %v1743
      %v1750 = vadd.f32 %v1599, %v1744
      %v1751 = vstv %s106
      %v1752 = vmul.f32 %v1732, %v1751
      %v1753 = vmul.f32 %v1733, %v1751
      %v1754 = vmul.f32 %v1734, %v1751
      %v1755 = vmul.f32 %v1735, %v1751
      %v1756 = vmul.f32 %v1736, %v1751
      %v1757 = vmul.f32 %v1737, %v1751
      %v1758 = vadd.f32 %v1629, %v1752
      %v1759 = vadd.f32 %v1630, %v1753
      %v1760 = vadd.f32 %v1631, %v1754
      %v1761 = vadd.f32 %v1632, %v1755
      %v1762 = vadd.f32 %v1633, %v1756
      %v1763 = vadd.f32 %v1634, %v1757
      %v1764 = vstv %s83
      %v1765 = vmul.f32 %v1732, %v1764
      %v1766 = vmul.f32 %v1733, %v1764
      %v1767 = vmul.f32 %v1734, %v1764
      %v1768 = vmul.f32 %v1735, %v1764
      %v1769 = vmul.f32 %v1736, %v1764
      %v1770 = vmul.f32 %v1737, %v1764
      %v1777 = vrot.slane %v1765, 1
      %v1778 = vrot.slane %v1766, 1
      %v1779 = vsel %vm160, %v1777, %v1778
      %v1780 = vrot.slane %v1767, 1
      %v1781 = vsel %vm160, %v1778, %v1780
      %v1782 = vrot.slane %v1768, 1
      %v1783 = vsel %vm160, %v1780, %v1782
      %v1784 = vrot.slane %v1769, 1
      %v1785 = vsel %vm160, %v1782, %v1784
      %v1786 = vrot.slane %v1770, 1
      %v1787 = vsel %vm160, %v1784, %v1786
      %v1794 = vadd.f32 %v1745, %v1779
      %v1795 = vadd.f32 %v1746, %v1781
      %v1796 = vadd.f32 %v1747, %v1783
      %v1797 = vadd.f32 %v1748, %v1785
      %v1798 = vadd.f32 %v1749, %v1787
      %v1799 = vadd.f32 %v1750, %v1786
      %v1800 = vstv %s108
      %v1801 = vmul.f32 %v1732, %v1800
      %v1802 = vmul.f32 %v1733, %v1800
      %v1803 = vmul.f32 %v1734, %v1800
      %v1804 = vmul.f32 %v1735, %v1800
      %v1805 = vmul.f32 %v1736, %v1800
      %v1806 = vmul.f32 %v1737, %v1800
      %v1813 = vrot.slane %v1801, 1
      %v1814 = vrot.slane %v1802, 1
      %v1815 = vsel %vm160, %v1813, %v1814
      %v1816 = vrot.slane %v1803, 1
      %v1817 = vsel %vm160, %v1814, %v1816
      %v1818 = vrot.slane %v1804, 1
      %v1819 = vsel %vm160, %v1816, %v1818
      %v1820 = vrot.slane %v1805, 1
      %v1821 = vsel %vm160, %v1818, %v1820
      %v1822 = vrot.slane %v1806, 1
      %v1823 = vsel %vm160, %v1820, %v1822
      %v1830 = vadd.f32 %v1758, %v1815
      %v1831 = vadd.f32 %v1759, %v1817
      %v1832 = vadd.f32 %v1760, %v1819
      %v1833 = vadd.f32 %v1761, %v1821
      %v1834 = vadd.f32 %v1762, %v1823
      %v1835 = vadd.f32 %v1763, %v1822
      %v1836 = vstv %s82
      %v1837 = vmul.f32 %v1732, %v1836
      %v1838 = vmul.f32 %v1733, %v1836
      %v1839 = vmul.f32 %v1734, %v1836
      %v1840 = vmul.f32 %v1735, %v1836
      %v1841 = vmul.f32 %v1736, %v1836
      %v1842 = vmul.f32 %v1737, %v1836
      %v1843 = vadd.f32 %v1688, %v1837
      %v1844 = vadd.f32 %v1689, %v1838
      %v1845 = vadd.f32 %v1690, %v1839
      %v1846 = vadd.f32 %v1691, %v1840
      %v1847 = vadd.f32 %v1692, %v1841
      %v1848 = vadd.f32 %v1693, %v1842
      %v1849 = vstv %s107
      %v1850 = vmul.f32 %v1732, %v1849
      %v1851 = vmul.f32 %v1733, %v1849
      %v1852 = vmul.f32 %v1734, %v1849
      %v1853 = vmul.f32 %v1735, %v1849
      %v1854 = vmul.f32 %v1736, %v1849
      %v1855 = vmul.f32 %v1737, %v1849
      %v1856 = vadd.f32 %v1723, %v1850
      %v1857 = vadd.f32 %v1724, %v1851
      %v1858 = vadd.f32 %v1725, %v1852
      %v1859 = vadd.f32 %v1726, %v1853
      %v1860 = vadd.f32 %v1727, %v1854
      %v1861 = vadd.f32 %v1728, %v1855
      %v1862 = vstv %s85
      %v1863 = vmul.f32 %v1732, %v1862
      %v1864 = vmul.f32 %v1733, %v1862
      %v1865 = vmul.f32 %v1734, %v1862
      %v1866 = vmul.f32 %v1735, %v1862
      %v1867 = vmul.f32 %v1736, %v1862
      %v1868 = vmul.f32 %v1737, %v1862
      %v1875 = vrot.slane %v1863, 2
      %v1876 = vrot.slane %v1864, 2
      %v1877 = vsel %vm247, %v1875, %v1876
      %v1878 = vrot.slane %v1865, 2
      %v1879 = vsel %vm247, %v1876, %v1878
      %v1880 = vrot.slane %v1866, 2
      %v1881 = vsel %vm247, %v1878, %v1880
      %v1882 = vrot.slane %v1867, 2
      %v1883 = vsel %vm247, %v1880, %v1882
      %v1884 = vrot.slane %v1868, 2
      %v1885 = vsel %vm247, %v1882, %v1884
      %v1892 = vadd.f32 %v1794, %v1877
      %v1893 = vadd.f32 %v1795, %v1879
      %v1894 = vadd.f32 %v1796, %v1881
      %v1895 = vadd.f32 %v1797, %v1883
      %v1896 = vadd.f32 %v1798, %v1885
      %v1897 = vadd.f32 %v1799, %v1884
      %v1898 = vstv %s110
      %v1899 = vmul.f32 %v1732, %v1898
      %v1900 = vmul.f32 %v1733, %v1898
      %v1901 = vmul.f32 %v1734, %v1898
      %v1902 = vmul.f32 %v1735, %v1898
      %v1903 = vmul.f32 %v1736, %v1898
      %v1904 = vmul.f32 %v1737, %v1898
      %v1911 = vrot.slane %v1899, 2
      %v1912 = vrot.slane %v1900, 2
      %v1913 = vsel %vm247, %v1911, %v1912
      %v1914 = vrot.slane %v1901, 2
      %v1915 = vsel %vm247, %v1912, %v1914
      %v1916 = vrot.slane %v1902, 2
      %v1917 = vsel %vm247, %v1914, %v1916
      %v1918 = vrot.slane %v1903, 2
      %v1919 = vsel %vm247, %v1916, %v1918
      %v1920 = vrot.slane %v1904, 2
      %v1921 = vsel %vm247, %v1918, %v1920
      %v1928 = vadd.f32 %v1830, %v1913
      %v1929 = vadd.f32 %v1831, %v1915
      %v1930 = vadd.f32 %v1832, %v1917
      %v1931 = vadd.f32 %v1833, %v1919
      %v1932 = vadd.f32 %v1834, %v1921
      %v1933 = vadd.f32 %v1835, %v1920
      %v1934 = vstv %s84
      %v1935 = vmul.f32 %v1732, %v1934
      %v1936 = vmul.f32 %v1733, %v1934
      %v1937 = vmul.f32 %v1734, %v1934
      %v1938 = vmul.f32 %v1735, %v1934
      %v1939 = vmul.f32 %v1736, %v1934
      %v1940 = vmul.f32 %v1737, %v1934
      %v1947 = vrot.slane %v1935, 1
      %v1948 = vrot.slane %v1936, 1
      %v1949 = vsel %vm160, %v1947, %v1948
      %v1950 = vrot.slane %v1937, 1
      %v1951 = vsel %vm160, %v1948, %v1950
      %v1952 = vrot.slane %v1938, 1
      %v1953 = vsel %vm160, %v1950, %v1952
      %v1954 = vrot.slane %v1939, 1
      %v1955 = vsel %vm160, %v1952, %v1954
      %v1956 = vrot.slane %v1940, 1
      %v1957 = vsel %vm160, %v1954, %v1956
      %v1964 = vadd.f32 %v1843, %v1949
      %v1965 = vadd.f32 %v1844, %v1951
      %v1966 = vadd.f32 %v1845, %v1953
      %v1967 = vadd.f32 %v1846, %v1955
      %v1968 = vadd.f32 %v1847, %v1957
      %v1969 = vadd.f32 %v1848, %v1956
      %v1970 = vstv %s109
      %v1971 = vmul.f32 %v1732, %v1970
      %v1972 = vmul.f32 %v1733, %v1970
      %v1973 = vmul.f32 %v1734, %v1970
      %v1974 = vmul.f32 %v1735, %v1970
      %v1975 = vmul.f32 %v1736, %v1970
      %v1976 = vmul.f32 %v1737, %v1970
      %v1983 = vrot.slane %v1971, 1
      %v1984 = vrot.slane %v1972, 1
      %v1985 = vsel %vm160, %v1983, %v1984
      %v1986 = vrot.slane %v1973, 1
      %v1987 = vsel %vm160, %v1984, %v1986
      %v1988 = vrot.slane %v1974, 1
      %v1989 = vsel %vm160, %v1986, %v1988
      %v1990 = vrot.slane %v1975, 1
      %v1991 = vsel %vm160, %v1988, %v1990
      %v1992 = vrot.slane %v1976, 1
      %v1993 = vsel %vm160, %v1990, %v1992
      %v2000 = vadd.f32 %v1856, %v1985
      %v2001 = vadd.f32 %v1857, %v1987
      %v2002 = vadd.f32 %v1858, %v1989
      %v2003 = vadd.f32 %v1859, %v1991
      %v2004 = vadd.f32 %v1860, %v1993
      %v2005 = vadd.f32 %v1861, %v1992
      %s2006 = scalar_lea.vmem [#allocation8], %s1730
      %v2007 = vld [vmem:[%s2006] sm:$0xff]
      %v2008 = vld [vmem:[%s2006 + $0x8] sm:$0xff]
      %v2009 = vld [vmem:[%s2006 + $0x10] sm:$0xff]
      %v2010 = vld [vmem:[%s2006 + $0x18] sm:$0xff]
      %v2011 = vld [vmem:[%s2006 + $0x20] sm:$0xff]
      %v2012 = vld [vmem:[%s2006 + $0x28] sm:$0x1f]
      %v2013 = vmul.f32 %v2007, %v1836
      %v2014 = vmul.f32 %v2008, %v1836
      %v2015 = vmul.f32 %v2009, %v1836
      %v2016 = vmul.f32 %v2010, %v1836
      %v2017 = vmul.f32 %v2011, %v1836
      %v2018 = vmul.f32 %v2012, %v1836
      %v2019 = vadd.f32 %v1892, %v2013
      %v2020 = vadd.f32 %v1893, %v2014
      %v2021 = vadd.f32 %v1894, %v2015
      %v2022 = vadd.f32 %v1895, %v2016
      %v2023 = vadd.f32 %v1896, %v2017
      %v2024 = vadd.f32 %v1897, %v2018
      %v2025 = vmul.f32 %v2007, %v1849
      %v2026 = vmul.f32 %v2008, %v1849
      %v2027 = vmul.f32 %v2009, %v1849
      %v2028 = vmul.f32 %v2010, %v1849
      %v2029 = vmul.f32 %v2011, %v1849
      %v2030 = vmul.f32 %v2012, %v1849
      %v2031 = vadd.f32 %v1928, %v2025
      %v2032 = vadd.f32 %v1929, %v2026
      %v2033 = vadd.f32 %v1930, %v2027
      %v2034 = vadd.f32 %v1931, %v2028
      %v2035 = vadd.f32 %v1932, %v2029
      %v2036 = vadd.f32 %v1933, %v2030
      %v2037 = vmul.f32 %v2007, %v1738
      %v2038 = vmul.f32 %v2008, %v1738
      %v2039 = vmul.f32 %v2009, %v1738
      %v2040 = vmul.f32 %v2010, %v1738
      %v2041 = vmul.f32 %v2011, %v1738
      %v2042 = vmul.f32 %v2012, %v1738
      %v2049 = vrot.slane %v2037, 7
      %v2050 = vrot.slane %v2038, 7
      %v2051 = vsel %vm422, %v2049, %v2050
      %v2052 = vrot.slane %v2039, 7
      %v2053 = vsel %vm422, %v2050, %v2052
      %v2054 = vrot.slane %v2040, 7
      %v2055 = vsel %vm422, %v2052, %v2054
      %v2056 = vrot.slane %v2041, 7
      %v2057 = vsel %vm422, %v2054, %v2056
      %v2058 = vrot.slane %v2042, 7
      %v2059 = vsel %vm422, %v2056, %v2058
      %v2066 = vadd.f32 %v1964, %v2049
      %v2067 = vadd.f32 %v1965, %v2051
      %v2068 = vadd.f32 %v1966, %v2053
      %v2069 = vadd.f32 %v1967, %v2055
      %v2070 = vadd.f32 %v1968, %v2057
      %v2071 = vadd.f32 %v1969, %v2059
      %v2072 = vmul.f32 %v2007, %v1751
      %v2073 = vmul.f32 %v2008, %v1751
      %v2074 = vmul.f32 %v2009, %v1751
      %v2075 = vmul.f32 %v2010, %v1751
      %v2076 = vmul.f32 %v2011, %v1751
      %v2077 = vmul.f32 %v2012, %v1751
      %v2084 = vrot.slane %v2072, 7
      %v2085 = vrot.slane %v2073, 7
      %v2086 = vsel %vm422, %v2084, %v2085
      %v2087 = vrot.slane %v2074, 7
      %v2088 = vsel %vm422, %v2085, %v2087
      %v2089 = vrot.slane %v2075, 7
      %v2090 = vsel %vm422, %v2087, %v2089
      %v2091 = vrot.slane %v2076, 7
      %v2092 = vsel %vm422, %v2089, %v2091
      %v2093 = vrot.slane %v2077, 7
      %v2094 = vsel %vm422, %v2091, %v2093
      %v2101 = vadd.f32 %v2000, %v2084
      %v2102 = vadd.f32 %v2001, %v2086
      %v2103 = vadd.f32 %v2002, %v2088
      %v2104 = vadd.f32 %v2003, %v2090
      %v2105 = vadd.f32 %v2004, %v2092
      %v2106 = vadd.f32 %v2005, %v2094
      %v2107 = vmul.f32 %v2007, %v1934
      %v2108 = vmul.f32 %v2008, %v1934
      %v2109 = vmul.f32 %v2009, %v1934
      %v2110 = vmul.f32 %v2010, %v1934
      %v2111 = vmul.f32 %v2011, %v1934
      %v2112 = vmul.f32 %v2012, %v1934
      %v2119 = vrot.slane %v2107, 1
      %v2120 = vrot.slane %v2108, 1
      %v2121 = vsel %vm160, %v2119, %v2120
      %v2122 = vrot.slane %v2109, 1
      %v2123 = vsel %vm160, %v2120, %v2122
      %v2124 = vrot.slane %v2110, 1
      %v2125 = vsel %vm160, %v2122, %v2124
      %v2126 = vrot.slane %v2111, 1
      %v2127 = vsel %vm160, %v2124, %v2126
      %v2128 = vrot.slane %v2112, 1
      %v2129 = vsel %vm160, %v2126, %v2128
      %v2136 = vadd.f32 %v2019, %v2121
      %v2137 = vadd.f32 %v2020, %v2123
      %v2138 = vadd.f32 %v2021, %v2125
      %v2139 = vadd.f32 %v2022, %v2127
      %v2140 = vadd.f32 %v2023, %v2129
      %v2141 = vadd.f32 %v2024, %v2128
      %v2142 = vmul.f32 %v2007, %v1970
      %v2143 = vmul.f32 %v2008, %v1970
      %v2144 = vmul.f32 %v2009, %v1970
      %v2145 = vmul.f32 %v2010, %v1970
      %v2146 = vmul.f32 %v2011, %v1970
      %v2147 = vmul.f32 %v2012, %v1970
      %v2154 = vrot.slane %v2142, 1
      %v2155 = vrot.slane %v2143, 1
      %v2156 = vsel %vm160, %v2154, %v2155
      %v2157 = vrot.slane %v2144, 1
      %v2158 = vsel %vm160, %v2155, %v2157
      %v2159 = vrot.slane %v2145, 1
      %v2160 = vsel %vm160, %v2157, %v2159
      %v2161 = vrot.slane %v2146, 1
      %v2162 = vsel %vm160, %v2159, %v2161
      %v2163 = vrot.slane %v2147, 1
      %v2164 = vsel %vm160, %v2161, %v2163
      %v2171 = vadd.f32 %v2031, %v2156
      %v2172 = vadd.f32 %v2032, %v2158
      %v2173 = vadd.f32 %v2033, %v2160
      %v2174 = vadd.f32 %v2034, %v2162
      %v2175 = vadd.f32 %v2035, %v2164
      %v2176 = vadd.f32 %v2036, %v2163
      %v2177 = vmul.f32 %v2007, %v1764
      %v2178 = vmul.f32 %v2008, %v1764
      %v2179 = vmul.f32 %v2009, %v1764
      %v2180 = vmul.f32 %v2010, %v1764
      %v2181 = vmul.f32 %v2011, %v1764
      %v2182 = vmul.f32 %v2012, %v1764
      %v2183 = vadd.f32 %v2066, %v2177
      %v2184 = vadd.f32 %v2067, %v2178
      %v2185 = vadd.f32 %v2068, %v2179
      %v2186 = vadd.f32 %v2069, %v2180
      %v2187 = vadd.f32 %v2070, %v2181
      %v2188 = vadd.f32 %v2071, %v2182
      %v2189 = vmul.f32 %v2007, %v1800
      %v2190 = vmul.f32 %v2008, %v1800
      %v2191 = vmul.f32 %v2009, %v1800
      %v2192 = vmul.f32 %v2010, %v1800
      %v2193 = vmul.f32 %v2011, %v1800
      %v2194 = vmul.f32 %v2012, %v1800
      %v2195 = vadd.f32 %v2101, %v2189
      %v2196 = vadd.f32 %v2102, %v2190
      %v2197 = vadd.f32 %v2103, %v2191
      %v2198 = vadd.f32 %v2104, %v2192
      %v2199 = vadd.f32 %v2105, %v2193
      %v2200 = vadd.f32 %v2106, %v2194
      %v2201 = vmul.f32 %v2007, %v1862
      %v2202 = vmul.f32 %v2008, %v1862
      %v2203 = vmul.f32 %v2009, %v1862
      %v2204 = vmul.f32 %v2010, %v1862
      %v2205 = vmul.f32 %v2011, %v1862
      %v2206 = vmul.f32 %v2012, %v1862
      %v2213 = vrot.slane %v2201, 1
      %v2214 = vrot.slane %v2202, 1
      %v2215 = vsel %vm160, %v2213, %v2214
      %v2216 = vrot.slane %v2203, 1
      %v2217 = vsel %vm160, %v2214, %v2216
      %v2218 = vrot.slane %v2204, 1
      %v2219 = vsel %vm160, %v2216, %v2218
      %v2220 = vrot.slane %v2205, 1
      %v2221 = vsel %vm160, %v2218, %v2220
      %v2222 = vrot.slane %v2206, 1
      %v2223 = vsel %vm160, %v2220, %v2222
      %v2230 = vadd.f32 %v2183, %v2215
      %v2231 = vadd.f32 %v2184, %v2217
      %v2232 = vadd.f32 %v2185, %v2219
      %v2233 = vadd.f32 %v2186, %v2221
      %v2234 = vadd.f32 %v2187, %v2223
      %v2235 = vadd.f32 %v2188, %v2222
      %v2236 = vmul.f32 %v2007, %v1898
      %v2237 = vmul.f32 %v2008, %v1898
      %v2238 = vmul.f32 %v2009, %v1898
      %v2239 = vmul.f32 %v2010, %v1898
      %v2240 = vmul.f32 %v2011, %v1898
      %v2241 = vmul.f32 %v2012, %v1898
      %v2248 = vrot.slane %v2236, 1
      %v2249 = vrot.slane %v2237, 1
      %v2250 = vsel %vm160, %v2248, %v2249
      %v2251 = vrot.slane %v2238, 1
      %v2252 = vsel %vm160, %v2249, %v2251
      %v2253 = vrot.slane %v2239, 1
      %v2254 = vsel %vm160, %v2251, %v2253
      %v2255 = vrot.slane %v2240, 1
      %v2256 = vsel %vm160, %v2253, %v2255
      %v2257 = vrot.slane %v2241, 1
      %v2258 = vsel %vm160, %v2255, %v2257
      %v2265 = vadd.f32 %v2195, %v2250
      %v2266 = vadd.f32 %v2196, %v2252
      %v2267 = vadd.f32 %v2197, %v2254
      %v2268 = vadd.f32 %v2198, %v2256
      %v2269 = vadd.f32 %v2199, %v2258
      %v2270 = vadd.f32 %v2200, %v2257
      %s2271 = sadd.s32 %s124, 4
      %s2272 = smul.u32 %s2271, 48
      %s2273 = scalar_lea.vmem [#allocation7], %s2272
      %v2274 = vld [vmem:[%s2273] sm:$0xff]
      %v2275 = vld [vmem:[%s2273 + $0x8] sm:$0xff]
      %v2276 = vld [vmem:[%s2273 + $0x10] sm:$0xff]
      %v2277 = vld [vmem:[%s2273 + $0x18] sm:$0xff]
      %v2278 = vld [vmem:[%s2273 + $0x20] sm:$0xff]
      %v2279 = vld [vmem:[%s2273 + $0x28] sm:$0x1f]
      %v2280 = vstv %s86
      %v2281 = vmul.f32 %v2274, %v2280
      %v2282 = vmul.f32 %v2275, %v2280
      %v2283 = vmul.f32 %v2276, %v2280
      %v2284 = vmul.f32 %v2277, %v2280
      %v2285 = vmul.f32 %v2278, %v2280
      %v2286 = vmul.f32 %v2279, %v2280
      %v2287 = vadd.f32 %v2136, %v2281
      %v2288 = vadd.f32 %v2137, %v2282
      %v2289 = vadd.f32 %v2138, %v2283
      %v2290 = vadd.f32 %v2139, %v2284
      %v2291 = vadd.f32 %v2140, %v2285
      %v2292 = vadd.f32 %v2141, %v2286
      %v2293 = vstv %s111
      %v2294 = vmul.f32 %v2274, %v2293
      %v2295 = vmul.f32 %v2275, %v2293
      %v2296 = vmul.f32 %v2276, %v2293
      %v2297 = vmul.f32 %v2277, %v2293
      %v2298 = vmul.f32 %v2278, %v2293
      %v2299 = vmul.f32 %v2279, %v2293
      %v2300 = vadd.f32 %v2171, %v2294
      %v2301 = vadd.f32 %v2172, %v2295
      %v2302 = vadd.f32 %v2173, %v2296
      %v2303 = vadd.f32 %v2174, %v2297
      %v2304 = vadd.f32 %v2175, %v2298
      %v2305 = vadd.f32 %v2176, %v2299
      %v2306 = vstv %s88
      %v2307 = vmul.f32 %v2274, %v2306
      %v2308 = vmul.f32 %v2275, %v2306
      %v2309 = vmul.f32 %v2276, %v2306
      %v2310 = vmul.f32 %v2277, %v2306
      %v2311 = vmul.f32 %v2278, %v2306
      %v2312 = vmul.f32 %v2279, %v2306
      %v2319 = vrot.slane %v2307, 1
      %v2320 = vrot.slane %v2308, 1
      %v2321 = vsel %vm160, %v2319, %v2320
      %v2322 = vrot.slane %v2309, 1
      %v2323 = vsel %vm160, %v2320, %v2322
      %v2324 = vrot.slane %v2310, 1
      %v2325 = vsel %vm160, %v2322, %v2324
      %v2326 = vrot.slane %v2311, 1
      %v2327 = vsel %vm160, %v2324, %v2326
      %v2328 = vrot.slane %v2312, 1
      %v2329 = vsel %vm160, %v2326, %v2328
      %v2336 = vadd.f32 %v2287, %v2321
      %v2337 = vadd.f32 %v2288, %v2323
      %v2338 = vadd.f32 %v2289, %v2325
      %v2339 = vadd.f32 %v2290, %v2327
      %v2340 = vadd.f32 %v2291, %v2329
      %v2341 = vadd.f32 %v2292, %v2328
      %v2342 = vstv %s113
      %v2343 = vmul.f32 %v2274, %v2342
      %v2344 = vmul.f32 %v2275, %v2342
      %v2345 = vmul.f32 %v2276, %v2342
      %v2346 = vmul.f32 %v2277, %v2342
      %v2347 = vmul.f32 %v2278, %v2342
      %v2348 = vmul.f32 %v2279, %v2342
      %v2355 = vrot.slane %v2343, 1
      %v2356 = vrot.slane %v2344, 1
      %v2357 = vsel %vm160, %v2355, %v2356
      %v2358 = vrot.slane %v2345, 1
      %v2359 = vsel %vm160, %v2356, %v2358
      %v2360 = vrot.slane %v2346, 1
      %v2361 = vsel %vm160, %v2358, %v2360
      %v2362 = vrot.slane %v2347, 1
      %v2363 = vsel %vm160, %v2360, %v2362
      %v2364 = vrot.slane %v2348, 1
      %v2365 = vsel %vm160, %v2362, %v2364
      %v2372 = vadd.f32 %v2300, %v2357
      %v2373 = vadd.f32 %v2301, %v2359
      %v2374 = vadd.f32 %v2302, %v2361
      %v2375 = vadd.f32 %v2303, %v2363
      %v2376 = vadd.f32 %v2304, %v2365
      %v2377 = vadd.f32 %v2305, %v2364
      %v2378 = vstv %s87
      %v2379 = vmul.f32 %v2274, %v2378
      %v2380 = vmul.f32 %v2275, %v2378
      %v2381 = vmul.f32 %v2276, %v2378
      %v2382 = vmul.f32 %v2277, %v2378
      %v2383 = vmul.f32 %v2278, %v2378
      %v2384 = vmul.f32 %v2279, %v2378
      %v2385 = vadd.f32 %v2230, %v2379
      %v2386 = vadd.f32 %v2231, %v2380
      %v2387 = vadd.f32 %v2232, %v2381
      %v2388 = vadd.f32 %v2233, %v2382
      %v2389 = vadd.f32 %v2234, %v2383
      %v2390 = vadd.f32 %v2235, %v2384
      %v2391 = vstv %s112
      %v2392 = vmul.f32 %v2274, %v2391
      %v2393 = vmul.f32 %v2275, %v2391
      %v2394 = vmul.f32 %v2276, %v2391
      %v2395 = vmul.f32 %v2277, %v2391
      %v2396 = vmul.f32 %v2278, %v2391
      %v2397 = vmul.f32 %v2279, %v2391
      %v2398 = vadd.f32 %v2265, %v2392
      %v2399 = vadd.f32 %v2266, %v2393
      %v2400 = vadd.f32 %v2267, %v2394
      %v2401 = vadd.f32 %v2268, %v2395
      %v2402 = vadd.f32 %v2269, %v2396
      %v2403 = vadd.f32 %v2270, %v2397
      %v2404 = vstv %s90
      %v2405 = vmul.f32 %v2274, %v2404
      %v2406 = vmul.f32 %v2275, %v2404
      %v2407 = vmul.f32 %v2276, %v2404
      %v2408 = vmul.f32 %v2277, %v2404
      %v2409 = vmul.f32 %v2278, %v2404
      %v2410 = vmul.f32 %v2279, %v2404
      %v2417 = vrot.slane %v2405, 2
      %v2418 = vrot.slane %v2406, 2
      %v2419 = vsel %vm247, %v2417, %v2418
      %v2420 = vrot.slane %v2407, 2
      %v2421 = vsel %vm247, %v2418, %v2420
      %v2422 = vrot.slane %v2408, 2
      %v2423 = vsel %vm247, %v2420, %v2422
      %v2424 = vrot.slane %v2409, 2
      %v2425 = vsel %vm247, %v2422, %v2424
      %v2426 = vrot.slane %v2410, 2
      %v2427 = vsel %vm247, %v2424, %v2426
      %v2434 = vadd.f32 %v2336, %v2419
      %v2435 = vadd.f32 %v2337, %v2421
      %v2436 = vadd.f32 %v2338, %v2423
      %v2437 = vadd.f32 %v2339, %v2425
      %v2438 = vadd.f32 %v2340, %v2427
      %v2439 = vadd.f32 %v2341, %v2426
      %v2440 = vstv %s115
      %v2441 = vmul.f32 %v2274, %v2440
      %v2442 = vmul.f32 %v2275, %v2440
      %v2443 = vmul.f32 %v2276, %v2440
      %v2444 = vmul.f32 %v2277, %v2440
      %v2445 = vmul.f32 %v2278, %v2440
      %v2446 = vmul.f32 %v2279, %v2440
      %v2453 = vrot.slane %v2441, 2
      %v2454 = vrot.slane %v2442, 2
      %v2455 = vsel %vm247, %v2453, %v2454
      %v2456 = vrot.slane %v2443, 2
      %v2457 = vsel %vm247, %v2454, %v2456
      %v2458 = vrot.slane %v2444, 2
      %v2459 = vsel %vm247, %v2456, %v2458
      %v2460 = vrot.slane %v2445, 2
      %v2461 = vsel %vm247, %v2458, %v2460
      %v2462 = vrot.slane %v2446, 2
      %v2463 = vsel %vm247, %v2460, %v2462
      %v2470 = vadd.f32 %v2372, %v2455
      %v2471 = vadd.f32 %v2373, %v2457
      %v2472 = vadd.f32 %v2374, %v2459
      %v2473 = vadd.f32 %v2375, %v2461
      %v2474 = vadd.f32 %v2376, %v2463
      %v2475 = vadd.f32 %v2377, %v2462
      %v2476 = vstv %s89
      %v2477 = vmul.f32 %v2274, %v2476
      %v2478 = vmul.f32 %v2275, %v2476
      %v2479 = vmul.f32 %v2276, %v2476
      %v2480 = vmul.f32 %v2277, %v2476
      %v2481 = vmul.f32 %v2278, %v2476
      %v2482 = vmul.f32 %v2279, %v2476
      %v2489 = vrot.slane %v2477, 1
      %v2490 = vrot.slane %v2478, 1
      %v2491 = vsel %vm160, %v2489, %v2490
      %v2492 = vrot.slane %v2479, 1
      %v2493 = vsel %vm160, %v2490, %v2492
      %v2494 = vrot.slane %v2480, 1
      %v2495 = vsel %vm160, %v2492, %v2494
      %v2496 = vrot.slane %v2481, 1
      %v2497 = vsel %vm160, %v2494, %v2496
      %v2498 = vrot.slane %v2482, 1
      %v2499 = vsel %vm160, %v2496, %v2498
      %v2506 = vadd.f32 %v2385, %v2491
      %v2507 = vadd.f32 %v2386, %v2493
      %v2508 = vadd.f32 %v2387, %v2495
      %v2509 = vadd.f32 %v2388, %v2497
      %v2510 = vadd.f32 %v2389, %v2499
      %v2511 = vadd.f32 %v2390, %v2498
      %v2512 = vstv %s114
      %v2513 = vmul.f32 %v2274, %v2512
      %v2514 = vmul.f32 %v2275, %v2512
      %v2515 = vmul.f32 %v2276, %v2512
      %v2516 = vmul.f32 %v2277, %v2512
      %v2517 = vmul.f32 %v2278, %v2512
      %v2518 = vmul.f32 %v2279, %v2512
      %v2525 = vrot.slane %v2513, 1
      %v2526 = vrot.slane %v2514, 1
      %v2527 = vsel %vm160, %v2525, %v2526
      %v2528 = vrot.slane %v2515, 1
      %v2529 = vsel %vm160, %v2526, %v2528
      %v2530 = vrot.slane %v2516, 1
      %v2531 = vsel %vm160, %v2528, %v2530
      %v2532 = vrot.slane %v2517, 1
      %v2533 = vsel %vm160, %v2530, %v2532
      %v2534 = vrot.slane %v2518, 1
      %v2535 = vsel %vm160, %v2532, %v2534
      %v2542 = vadd.f32 %v2398, %v2527
      %v2543 = vadd.f32 %v2399, %v2529
      %v2544 = vadd.f32 %v2400, %v2531
      %v2545 = vadd.f32 %v2401, %v2533
      %v2546 = vadd.f32 %v2402, %v2535
      %v2547 = vadd.f32 %v2403, %v2534
      %s2548 = scalar_lea.vmem [#allocation8], %s2272
      %v2549 = vld [vmem:[%s2548] sm:$0xff]
      %v2550 = vld [vmem:[%s2548 + $0x8] sm:$0xff]
      %v2551 = vld [vmem:[%s2548 + $0x10] sm:$0xff]
      %v2552 = vld [vmem:[%s2548 + $0x18] sm:$0xff]
      %v2553 = vld [vmem:[%s2548 + $0x20] sm:$0xff]
      %v2554 = vld [vmem:[%s2548 + $0x28] sm:$0x1f]
      %v2555 = vmul.f32 %v2549, %v2378
      %v2556 = vmul.f32 %v2550, %v2378
      %v2557 = vmul.f32 %v2551, %v2378
      %v2558 = vmul.f32 %v2552, %v2378
      %v2559 = vmul.f32 %v2553, %v2378
      %v2560 = vmul.f32 %v2554, %v2378
      %v2561 = vadd.f32 %v2434, %v2555
      %v2562 = vadd.f32 %v2435, %v2556
      %v2563 = vadd.f32 %v2436, %v2557
      %v2564 = vadd.f32 %v2437, %v2558
      %v2565 = vadd.f32 %v2438, %v2559
      %v2566 = vadd.f32 %v2439, %v2560
      %v2567 = vmul.f32 %v2549, %v2391
      %v2568 = vmul.f32 %v2550, %v2391
      %v2569 = vmul.f32 %v2551, %v2391
      %v2570 = vmul.f32 %v2552, %v2391
      %v2571 = vmul.f32 %v2553, %v2391
      %v2572 = vmul.f32 %v2554, %v2391
      %v2573 = vadd.f32 %v2470, %v2567
      %v2574 = vadd.f32 %v2471, %v2568
      %v2575 = vadd.f32 %v2472, %v2569
      %v2576 = vadd.f32 %v2473, %v2570
      %v2577 = vadd.f32 %v2474, %v2571
      %v2578 = vadd.f32 %v2475, %v2572
      %v2579 = vmul.f32 %v2549, %v2280
      %v2580 = vmul.f32 %v2550, %v2280
      %v2581 = vmul.f32 %v2551, %v2280
      %v2582 = vmul.f32 %v2552, %v2280
      %v2583 = vmul.f32 %v2553, %v2280
      %v2584 = vmul.f32 %v2554, %v2280
      %v2591 = vrot.slane %v2579, 7
      %v2592 = vrot.slane %v2580, 7
      %v2593 = vsel %vm422, %v2591, %v2592
      %v2594 = vrot.slane %v2581, 7
      %v2595 = vsel %vm422, %v2592, %v2594
      %v2596 = vrot.slane %v2582, 7
      %v2597 = vsel %vm422, %v2594, %v2596
      %v2598 = vrot.slane %v2583, 7
      %v2599 = vsel %vm422, %v2596, %v2598
      %v2600 = vrot.slane %v2584, 7
      %v2601 = vsel %vm422, %v2598, %v2600
      %v2608 = vadd.f32 %v2506, %v2591
      %v2609 = vadd.f32 %v2507, %v2593
      %v2610 = vadd.f32 %v2508, %v2595
      %v2611 = vadd.f32 %v2509, %v2597
      %v2612 = vadd.f32 %v2510, %v2599
      %v2613 = vadd.f32 %v2511, %v2601
      %v2614 = vmul.f32 %v2549, %v2293
      %v2615 = vmul.f32 %v2550, %v2293
      %v2616 = vmul.f32 %v2551, %v2293
      %v2617 = vmul.f32 %v2552, %v2293
      %v2618 = vmul.f32 %v2553, %v2293
      %v2619 = vmul.f32 %v2554, %v2293
      %v2626 = vrot.slane %v2614, 7
      %v2627 = vrot.slane %v2615, 7
      %v2628 = vsel %vm422, %v2626, %v2627
      %v2629 = vrot.slane %v2616, 7
      %v2630 = vsel %vm422, %v2627, %v2629
      %v2631 = vrot.slane %v2617, 7
      %v2632 = vsel %vm422, %v2629, %v2631
      %v2633 = vrot.slane %v2618, 7
      %v2634 = vsel %vm422, %v2631, %v2633
      %v2635 = vrot.slane %v2619, 7
      %v2636 = vsel %vm422, %v2633, %v2635
      %v2643 = vadd.f32 %v2542, %v2626
      %v2644 = vadd.f32 %v2543, %v2628
      %v2645 = vadd.f32 %v2544, %v2630
      %v2646 = vadd.f32 %v2545, %v2632
      %v2647 = vadd.f32 %v2546, %v2634
      %v2648 = vadd.f32 %v2547, %v2636
      %v2649 = vmul.f32 %v2549, %v2476
      %v2650 = vmul.f32 %v2550, %v2476
      %v2651 = vmul.f32 %v2551, %v2476
      %v2652 = vmul.f32 %v2552, %v2476
      %v2653 = vmul.f32 %v2553, %v2476
      %v2654 = vmul.f32 %v2554, %v2476
      %v2661 = vrot.slane %v2649, 1
      %v2662 = vrot.slane %v2650, 1
      %v2663 = vsel %vm160, %v2661, %v2662
      %v2664 = vrot.slane %v2651, 1
      %v2665 = vsel %vm160, %v2662, %v2664
      %v2666 = vrot.slane %v2652, 1
      %v2667 = vsel %vm160, %v2664, %v2666
      %v2668 = vrot.slane %v2653, 1
      %v2669 = vsel %vm160, %v2666, %v2668
      %v2670 = vrot.slane %v2654, 1
      %v2671 = vsel %vm160, %v2668, %v2670
      %v2678 = vadd.f32 %v2561, %v2663
      %v2679 = vadd.f32 %v2562, %v2665
      %v2680 = vadd.f32 %v2563, %v2667
      %v2681 = vadd.f32 %v2564, %v2669
      %v2682 = vadd.f32 %v2565, %v2671
      %v2683 = vadd.f32 %v2566, %v2670
      %v2684 = vmul.f32 %v2549, %v2512
      %v2685 = vmul.f32 %v2550, %v2512
      %v2686 = vmul.f32 %v2551, %v2512
      %v2687 = vmul.f32 %v2552, %v2512
      %v2688 = vmul.f32 %v2553, %v2512
      %v2689 = vmul.f32 %v2554, %v2512
      %v2696 = vrot.slane %v2684, 1
      %v2697 = vrot.slane %v2685, 1
      %v2698 = vsel %vm160, %v2696, %v2697
      %v2699 = vrot.slane %v2686, 1
      %v2700 = vsel %vm160, %v2697, %v2699
      %v2701 = vrot.slane %v2687, 1
      %v2702 = vsel %vm160, %v2699, %v2701
      %v2703 = vrot.slane %v2688, 1
      %v2704 = vsel %vm160, %v2701, %v2703
      %v2705 = vrot.slane %v2689, 1
      %v2706 = vsel %vm160, %v2703, %v2705
      %v2713 = vadd.f32 %v2573, %v2698
      %v2714 = vadd.f32 %v2574, %v2700
      %v2715 = vadd.f32 %v2575, %v2702
      %v2716 = vadd.f32 %v2576, %v2704
      %v2717 = vadd.f32 %v2577, %v2706
      %v2718 = vadd.f32 %v2578, %v2705
      %v2719 = vmul.f32 %v2549, %v2306
      %v2720 = vmul.f32 %v2550, %v2306
      %v2721 = vmul.f32 %v2551, %v2306
      %v2722 = vmul.f32 %v2552, %v2306
      %v2723 = vmul.f32 %v2553, %v2306
      %v2724 = vmul.f32 %v2554, %v2306
      %v2725 = vadd.f32 %v2608, %v2719
      %v2726 = vadd.f32 %v2609, %v2720
      %v2727 = vadd.f32 %v2610, %v2721
      %v2728 = vadd.f32 %v2611, %v2722
      %v2729 = vadd.f32 %v2612, %v2723
      %v2730 = vadd.f32 %v2613, %v2724
      %v2731 = vmul.f32 %v2549, %v2342
      %v2732 = vmul.f32 %v2550, %v2342
      %v2733 = vmul.f32 %v2551, %v2342
      %v2734 = vmul.f32 %v2552, %v2342
      %v2735 = vmul.f32 %v2553, %v2342
      %v2736 = vmul.f32 %v2554, %v2342
      %v2737 = vadd.f32 %v2643, %v2731
      %v2738 = vadd.f32 %v2644, %v2732
      %v2739 = vadd.f32 %v2645, %v2733
      %v2740 = vadd.f32 %v2646, %v2734
      %v2741 = vadd.f32 %v2647, %v2735
      %v2742 = vadd.f32 %v2648, %v2736
      %v2743 = vmul.f32 %v2549, %v2404
      %v2744 = vmul.f32 %v2550, %v2404
      %v2745 = vmul.f32 %v2551, %v2404
      %v2746 = vmul.f32 %v2552, %v2404
      %v2747 = vmul.f32 %v2553, %v2404
      %v2748 = vmul.f32 %v2554, %v2404
      %v2755 = vrot.slane %v2743, 1
      %v2756 = vrot.slane %v2744, 1
      %v2757 = vsel %vm160, %v2755, %v2756
      %v2758 = vrot.slane %v2745, 1
      %v2759 = vsel %vm160, %v2756, %v2758
      %v2760 = vrot.slane %v2746, 1
      %v2761 = vsel %vm160, %v2758, %v2760
      %v2762 = vrot.slane %v2747, 1
      %v2763 = vsel %vm160, %v2760, %v2762
      %v2764 = vrot.slane %v2748, 1
      %v2765 = vsel %vm160, %v2762, %v2764
      %v2772 = vadd.f32 %v2725, %v2757
      %v2773 = vadd.f32 %v2726, %v2759
      %v2774 = vadd.f32 %v2727, %v2761
      %v2775 = vadd.f32 %v2728, %v2763
      %v2776 = vadd.f32 %v2729, %v2765
      %v2777 = vadd.f32 %v2730, %v2764
      %v2778 = vmul.f32 %v2549, %v2440
      %v2779 = vmul.f32 %v2550, %v2440
      %v2780 = vmul.f32 %v2551, %v2440
      %v2781 = vmul.f32 %v2552, %v2440
      %v2782 = vmul.f32 %v2553, %v2440
      %v2783 = vmul.f32 %v2554, %v2440
      %v2790 = vrot.slane %v2778, 1
      %v2791 = vrot.slane %v2779, 1
      %v2792 = vsel %vm160, %v2790, %v2791
      %v2793 = vrot.slane %v2780, 1
      %v2794 = vsel %vm160, %v2791, %v2793
      %v2795 = vrot.slane %v2781, 1
      %v2796 = vsel %vm160, %v2793, %v2795
      %v2797 = vrot.slane %v2782, 1
      %v2798 = vsel %vm160, %v2795, %v2797
      %v2799 = vrot.slane %v2783, 1
      %v2800 = vsel %vm160, %v2797, %v2799
      %v2807 = vadd.f32 %v2737, %v2792
      %v2808 = vadd.f32 %v2738, %v2794
      %v2809 = vadd.f32 %v2739, %v2796
      %v2810 = vadd.f32 %v2740, %v2798
      %v2811 = vadd.f32 %v2741, %v2800
      %v2812 = vadd.f32 %v2742, %v2799
      %v2819 = vrot.slane %v2772, 1
      %v2820 = vrot.slane %v2773, 1
      %v2821 = vsel %vm160, %v2819, %v2820
      %v2822 = vrot.slane %v2774, 1
      %v2823 = vsel %vm160, %v2820, %v2822
      %v2824 = vrot.slane %v2775, 1
      %v2825 = vsel %vm160, %v2822, %v2824
      %v2826 = vrot.slane %v2776, 1
      %v2827 = vsel %vm160, %v2824, %v2826
      %v2828 = vrot.slane %v2777, 1
      %v2829 = vsel %vm160, %v2826, %v2828
      %v2836 = vmax.f32 %v2678, %v2821
      %v2837 = vmax.f32 %v2679, %v2823
      %v2838 = vmax.f32 %v2680, %v2825
      %v2839 = vmax.f32 %v2681, %v2827
      %v2840 = vmax.f32 %v2682, %v2829
      %v2841 = vmax.f32 %v2683, %v2828
      %v2848 = vrot.slane %v2807, 1
      %v2849 = vrot.slane %v2808, 1
      %v2850 = vsel %vm160, %v2848, %v2849
      %v2851 = vrot.slane %v2809, 1
      %v2852 = vsel %vm160, %v2849, %v2851
      %v2853 = vrot.slane %v2810, 1
      %v2854 = vsel %vm160, %v2851, %v2853
      %v2855 = vrot.slane %v2811, 1
      %v2856 = vsel %vm160, %v2853, %v2855
      %v2857 = vrot.slane %v2812, 1
      %v2858 = vsel %vm160, %v2855, %v2857
      %v2865 = vmax.f32 %v2713, %v2850
      %v2866 = vmax.f32 %v2714, %v2852
      %v2867 = vmax.f32 %v2715, %v2854
      %v2868 = vmax.f32 %v2716, %v2856
      %v2869 = vmax.f32 %v2717, %v2858
      %v2870 = vmax.f32 %v2718, %v2857
      %v2871 = vmul.f32 %v648, %v133
      %v2872 = vmul.f32 %v649, %v133
      %v2873 = vmul.f32 %v650, %v133
      %v2874 = vmul.f32 %v651, %v133
      %v2875 = vmul.f32 %v652, %v133
      %v2876 = vmul.f32 %v653, %v133
      %v2877 = vmul.f32 %v648, %v140
      %v2878 = vmul.f32 %v649, %v140
      %v2879 = vmul.f32 %v650, %v140
      %v2880 = vmul.f32 %v651, %v140
      %v2881 = vmul.f32 %v652, %v140
      %v2882 = vmul.f32 %v653, %v140
      %v2883 = vmul.f32 %v648, %v147
      %v2884 = vmul.f32 %v649, %v147
      %v2885 = vmul.f32 %v650, %v147
      %v2886 = vmul.f32 %v651, %v147
      %v2887 = vmul.f32 %v652, %v147
      %v2888 = vmul.f32 %v653, %v147
      %v2895 = vrot.slane %v2883, 1
      %v2896 = vrot.slane %v2884, 1
      %v2897 = vsel %vm160, %v2895, %v2896
      %v2898 = vrot.slane %v2885, 1
      %v2899 = vsel %vm160, %v2896, %v2898
      %v2900 = vrot.slane %v2886, 1
      %v2901 = vsel %vm160, %v2898, %v2900
      %v2902 = vrot.slane %v2887, 1
      %v2903 = vsel %vm160, %v2900, %v2902
      %v2904 = vrot.slane %v2888, 1
      %v2905 = vsel %vm160, %v2902, %v2904
      %v2912 = vadd.f32 %v2871, %v2897
      %v2913 = vadd.f32 %v2872, %v2899
      %v2914 = vadd.f32 %v2873, %v2901
      %v2915 = vadd.f32 %v2874, %v2903
      %v2916 = vadd.f32 %v2875, %v2905
      %v2917 = vadd.f32 %v2876, %v2904
      %v2918 = vmul.f32 %v648, %v184
      %v2919 = vmul.f32 %v649, %v184
      %v2920 = vmul.f32 %v650, %v184
      %v2921 = vmul.f32 %v651, %v184
      %v2922 = vmul.f32 %v652, %v184
      %v2923 = vmul.f32 %v653, %v184
      %v2930 = vrot.slane %v2918, 1
      %v2931 = vrot.slane %v2919, 1
      %v2932 = vsel %vm160, %v2930, %v2931
      %v2933 = vrot.slane %v2920, 1
      %v2934 = vsel %vm160, %v2931, %v2933
      %v2935 = vrot.slane %v2921, 1
      %v2936 = vsel %vm160, %v2933, %v2935
      %v2937 = vrot.slane %v2922, 1
      %v2938 = vsel %vm160, %v2935, %v2937
      %v2939 = vrot.slane %v2923, 1
      %v2940 = vsel %vm160, %v2937, %v2939
      %v2947 = vadd.f32 %v2877, %v2932
      %v2948 = vadd.f32 %v2878, %v2934
      %v2949 = vadd.f32 %v2879, %v2936
      %v2950 = vadd.f32 %v2880, %v2938
      %v2951 = vadd.f32 %v2881, %v2940
      %v2952 = vadd.f32 %v2882, %v2939
      %v2953 = vmul.f32 %v648, %v220
      %v2954 = vmul.f32 %v649, %v220
      %v2955 = vmul.f32 %v650, %v220
      %v2956 = vmul.f32 %v651, %v220
      %v2957 = vmul.f32 %v652, %v220
      %v2958 = vmul.f32 %v653, %v220
      %v2959 = vmul.f32 %v648, %v227
      %v2960 = vmul.f32 %v649, %v227
      %v2961 = vmul.f32 %v650, %v227
      %v2962 = vmul.f32 %v651, %v227
      %v2963 = vmul.f32 %v652, %v227
      %v2964 = vmul.f32 %v653, %v227
      %v2965 = vmul.f32 %v648, %v234
      %v2966 = vmul.f32 %v649, %v234
      %v2967 = vmul.f32 %v650, %v234
      %v2968 = vmul.f32 %v651, %v234
      %v2969 = vmul.f32 %v652, %v234
      %v2970 = vmul.f32 %v653, %v234
      %v2977 = vrot.slane %v2965, 2
      %v2978 = vrot.slane %v2966, 2
      %v2979 = vsel %vm247, %v2977, %v2978
      %v2980 = vrot.slane %v2967, 2
      %v2981 = vsel %vm247, %v2978, %v2980
      %v2982 = vrot.slane %v2968, 2
      %v2983 = vsel %vm247, %v2980, %v2982
      %v2984 = vrot.slane %v2969, 2
      %v2985 = vsel %vm247, %v2982, %v2984
      %v2986 = vrot.slane %v2970, 2
      %v2987 = vsel %vm247, %v2984, %v2986
      %v2994 = vadd.f32 %v2912, %v2979
      %v2995 = vadd.f32 %v2913, %v2981
      %v2996 = vadd.f32 %v2914, %v2983
      %v2997 = vadd.f32 %v2915, %v2985
      %v2998 = vadd.f32 %v2916, %v2987
      %v2999 = vadd.f32 %v2917, %v2986
      %v3000 = vmul.f32 %v648, %v271
      %v3001 = vmul.f32 %v649, %v271
      %v3002 = vmul.f32 %v650, %v271
      %v3003 = vmul.f32 %v651, %v271
      %v3004 = vmul.f32 %v652, %v271
      %v3005 = vmul.f32 %v653, %v271
      %v3012 = vrot.slane %v3000, 2
      %v3013 = vrot.slane %v3001, 2
      %v3014 = vsel %vm247, %v3012, %v3013
      %v3015 = vrot.slane %v3002, 2
      %v3016 = vsel %vm247, %v3013, %v3015
      %v3017 = vrot.slane %v3003, 2
      %v3018 = vsel %vm247, %v3015, %v3017
      %v3019 = vrot.slane %v3004, 2
      %v3020 = vsel %vm247, %v3017, %v3019
      %v3021 = vrot.slane %v3005, 2
      %v3022 = vsel %vm247, %v3019, %v3021
      %v3029 = vadd.f32 %v2947, %v3014
      %v3030 = vadd.f32 %v2948, %v3016
      %v3031 = vadd.f32 %v2949, %v3018
      %v3032 = vadd.f32 %v2950, %v3020
      %v3033 = vadd.f32 %v2951, %v3022
      %v3034 = vadd.f32 %v2952, %v3021
      %v3035 = vmul.f32 %v648, %v307
      %v3036 = vmul.f32 %v649, %v307
      %v3037 = vmul.f32 %v650, %v307
      %v3038 = vmul.f32 %v651, %v307
      %v3039 = vmul.f32 %v652, %v307
      %v3040 = vmul.f32 %v653, %v307
      %v3047 = vrot.slane %v3035, 1
      %v3048 = vrot.slane %v3036, 1
      %v3049 = vsel %vm160, %v3047, %v3048
      %v3050 = vrot.slane %v3037, 1
      %v3051 = vsel %vm160, %v3048, %v3050
      %v3052 = vrot.slane %v3038, 1
      %v3053 = vsel %vm160, %v3050, %v3052
      %v3054 = vrot.slane %v3039, 1
      %v3055 = vsel %vm160, %v3052, %v3054
      %v3056 = vrot.slane %v3040, 1
      %v3057 = vsel %vm160, %v3054, %v3056
      %v3064 = vadd.f32 %v2953, %v3049
      %v3065 = vadd.f32 %v2954, %v3051
      %v3066 = vadd.f32 %v2955, %v3053
      %v3067 = vadd.f32 %v2956, %v3055
      %v3068 = vadd.f32 %v2957, %v3057
      %v3069 = vadd.f32 %v2958, %v3056
      %v3070 = vmul.f32 %v648, %v343
      %v3071 = vmul.f32 %v649, %v343
      %v3072 = vmul.f32 %v650, %v343
      %v3073 = vmul.f32 %v651, %v343
      %v3074 = vmul.f32 %v652, %v343
      %v3075 = vmul.f32 %v653, %v343
      %v3082 = vrot.slane %v3070, 1
      %v3083 = vrot.slane %v3071, 1
      %v3084 = vsel %vm160, %v3082, %v3083
      %v3085 = vrot.slane %v3072, 1
      %v3086 = vsel %vm160, %v3083, %v3085
      %v3087 = vrot.slane %v3073, 1
      %v3088 = vsel %vm160, %v3085, %v3087
      %v3089 = vrot.slane %v3074, 1
      %v3090 = vsel %vm160, %v3087, %v3089
      %v3091 = vrot.slane %v3075, 1
      %v3092 = vsel %vm160, %v3089, %v3091
      %v3099 = vadd.f32 %v2959, %v3084
      %v3100 = vadd.f32 %v2960, %v3086
      %v3101 = vadd.f32 %v2961, %v3088
      %v3102 = vadd.f32 %v2962, %v3090
      %v3103 = vadd.f32 %v2963, %v3092
      %v3104 = vadd.f32 %v2964, %v3091
      %v3105 = vmul.f32 %v923, %v220
      %v3106 = vmul.f32 %v924, %v220
      %v3107 = vmul.f32 %v925, %v220
      %v3108 = vmul.f32 %v926, %v220
      %v3109 = vmul.f32 %v927, %v220
      %v3110 = vmul.f32 %v928, %v220
      %v3111 = vadd.f32 %v2994, %v3105
      %v3112 = vadd.f32 %v2995, %v3106
      %v3113 = vadd.f32 %v2996, %v3107
      %v3114 = vadd.f32 %v2997, %v3108
      %v3115 = vadd.f32 %v2998, %v3109
      %v3116 = vadd.f32 %v2999, %v3110
      %v3117 = vmul.f32 %v923, %v227
      %v3118 = vmul.f32 %v924, %v227
      %v3119 = vmul.f32 %v925, %v227
      %v3120 = vmul.f32 %v926, %v227
      %v3121 = vmul.f32 %v927, %v227
      %v3122 = vmul.f32 %v928, %v227
      %v3123 = vadd.f32 %v3029, %v3117
      %v3124 = vadd.f32 %v3030, %v3118
      %v3125 = vadd.f32 %v3031, %v3119
      %v3126 = vadd.f32 %v3032, %v3120
      %v3127 = vadd.f32 %v3033, %v3121
      %v3128 = vadd.f32 %v3034, %v3122
      %v3129 = vmul.f32 %v923, %v133
      %v3130 = vmul.f32 %v924, %v133
      %v3131 = vmul.f32 %v925, %v133
      %v3132 = vmul.f32 %v926, %v133
      %v3133 = vmul.f32 %v927, %v133
      %v3134 = vmul.f32 %v928, %v133
      %v3141 = vrot.slane %v3129, 7
      %v3142 = vrot.slane %v3130, 7
      %v3143 = vsel %vm422, %v3141, %v3142
      %v3144 = vrot.slane %v3131, 7
      %v3145 = vsel %vm422, %v3142, %v3144
      %v3146 = vrot.slane %v3132, 7
      %v3147 = vsel %vm422, %v3144, %v3146
      %v3148 = vrot.slane %v3133, 7
      %v3149 = vsel %vm422, %v3146, %v3148
      %v3150 = vrot.slane %v3134, 7
      %v3151 = vsel %vm422, %v3148, %v3150
      %v3158 = vadd.f32 %v3064, %v3141
      %v3159 = vadd.f32 %v3065, %v3143
      %v3160 = vadd.f32 %v3066, %v3145
      %v3161 = vadd.f32 %v3067, %v3147
      %v3162 = vadd.f32 %v3068, %v3149
      %v3163 = vadd.f32 %v3069, %v3151
      %v3164 = vmul.f32 %v923, %v140
      %v3165 = vmul.f32 %v924, %v140
      %v3166 = vmul.f32 %v925, %v140
      %v3167 = vmul.f32 %v926, %v140
      %v3168 = vmul.f32 %v927, %v140
      %v3169 = vmul.f32 %v928, %v140
      %v3176 = vrot.slane %v3164, 7
      %v3177 = vrot.slane %v3165, 7
      %v3178 = vsel %vm422, %v3176, %v3177
      %v3179 = vrot.slane %v3166, 7
      %v3180 = vsel %vm422, %v3177, %v3179
      %v3181 = vrot.slane %v3167, 7
      %v3182 = vsel %vm422, %v3179, %v3181
      %v3183 = vrot.slane %v3168, 7
      %v3184 = vsel %vm422, %v3181, %v3183
      %v3185 = vrot.slane %v3169, 7
      %v3186 = vsel %vm422, %v3183, %v3185
      %v3193 = vadd.f32 %v3099, %v3176
      %v3194 = vadd.f32 %v3100, %v3178
      %v3195 = vadd.f32 %v3101, %v3180
      %v3196 = vadd.f32 %v3102, %v3182
      %v3197 = vadd.f32 %v3103, %v3184
      %v3198 = vadd.f32 %v3104, %v3186
      %v3199 = vmul.f32 %v923, %v307
      %v3200 = vmul.f32 %v924, %v307
      %v3201 = vmul.f32 %v925, %v307
      %v3202 = vmul.f32 %v926, %v307
      %v3203 = vmul.f32 %v927, %v307
      %v3204 = vmul.f32 %v928, %v307
      %v3211 = vrot.slane %v3199, 1
      %v3212 = vrot.slane %v3200, 1
      %v3213 = vsel %vm160, %v3211, %v3212
      %v3214 = vrot.slane %v3201, 1
      %v3215 = vsel %vm160, %v3212, %v3214
      %v3216 = vrot.slane %v3202, 1
      %v3217 = vsel %vm160, %v3214, %v3216
      %v3218 = vrot.slane %v3203, 1
      %v3219 = vsel %vm160, %v3216, %v3218
      %v3220 = vrot.slane %v3204, 1
      %v3221 = vsel %vm160, %v3218, %v3220
      %v3228 = vadd.f32 %v3111, %v3213
      %v3229 = vadd.f32 %v3112, %v3215
      %v3230 = vadd.f32 %v3113, %v3217
      %v3231 = vadd.f32 %v3114, %v3219
      %v3232 = vadd.f32 %v3115, %v3221
      %v3233 = vadd.f32 %v3116, %v3220
      %v3234 = vmul.f32 %v923, %v343
      %v3235 = vmul.f32 %v924, %v343
      %v3236 = vmul.f32 %v925, %v343
      %v3237 = vmul.f32 %v926, %v343
      %v3238 = vmul.f32 %v927, %v343
      %v3239 = vmul.f32 %v928, %v343
      %v3246 = vrot.slane %v3234, 1
      %v3247 = vrot.slane %v3235, 1
      %v3248 = vsel %vm160, %v3246, %v3247
      %v3249 = vrot.slane %v3236, 1
      %v3250 = vsel %vm160, %v3247, %v3249
      %v3251 = vrot.slane %v3237, 1
      %v3252 = vsel %vm160, %v3249, %v3251
      %v3253 = vrot.slane %v3238, 1
      %v3254 = vsel %vm160, %v3251, %v3253
      %v3255 = vrot.slane %v3239, 1
      %v3256 = vsel %vm160, %v3253, %v3255
      %v3263 = vadd.f32 %v3123, %v3248
      %v3264 = vadd.f32 %v3124, %v3250
      %v3265 = vadd.f32 %v3125, %v3252
      %v3266 = vadd.f32 %v3126, %v3254
      %v3267 = vadd.f32 %v3127, %v3256
      %v3268 = vadd.f32 %v3128, %v3255
      %v3269 = vmul.f32 %v923, %v147
      %v3270 = vmul.f32 %v924, %v147
      %v3271 = vmul.f32 %v925, %v147
      %v3272 = vmul.f32 %v926, %v147
      %v3273 = vmul.f32 %v927, %v147
      %v3274 = vmul.f32 %v928, %v147
      %v3275 = vadd.f32 %v3158, %v3269
      %v3276 = vadd.f32 %v3159, %v3270
      %v3277 = vadd.f32 %v3160, %v3271
      %v3278 = vadd.f32 %v3161, %v3272
      %v3279 = vadd.f32 %v3162, %v3273
      %v3280 = vadd.f32 %v3163, %v3274
      %v3281 = vmul.f32 %v923, %v184
      %v3282 = vmul.f32 %v924, %v184
      %v3283 = vmul.f32 %v925, %v184
      %v3284 = vmul.f32 %v926, %v184
      %v3285 = vmul.f32 %v927, %v184
      %v3286 = vmul.f32 %v928, %v184
      %v3287 = vadd.f32 %v3193, %v3281
      %v3288 = vadd.f32 %v3194, %v3282
      %v3289 = vadd.f32 %v3195, %v3283
      %v3290 = vadd.f32 %v3196, %v3284
      %v3291 = vadd.f32 %v3197, %v3285
      %v3292 = vadd.f32 %v3198, %v3286
      %v3293 = vmul.f32 %v923, %v234
      %v3294 = vmul.f32 %v924, %v234
      %v3295 = vmul.f32 %v925, %v234
      %v3296 = vmul.f32 %v926, %v234
      %v3297 = vmul.f32 %v927, %v234
      %v3298 = vmul.f32 %v928, %v234
      %v3305 = vrot.slane %v3293, 1
      %v3306 = vrot.slane %v3294, 1
      %v3307 = vsel %vm160, %v3305, %v3306
      %v3308 = vrot.slane %v3295, 1
      %v3309 = vsel %vm160, %v3306, %v3308
      %v3310 = vrot.slane %v3296, 1
      %v3311 = vsel %vm160, %v3308, %v3310
      %v3312 = vrot.slane %v3297, 1
      %v3313 = vsel %vm160, %v3310, %v3312
      %v3314 = vrot.slane %v3298, 1
      %v3315 = vsel %vm160, %v3312, %v3314
      %v3322 = vadd.f32 %v3275, %v3307
      %v3323 = vadd.f32 %v3276, %v3309
      %v3324 = vadd.f32 %v3277, %v3311
      %v3325 = vadd.f32 %v3278, %v3313
      %v3326 = vadd.f32 %v3279, %v3315
      %v3327 = vadd.f32 %v3280, %v3314
      %v3328 = vmul.f32 %v923, %v271
      %v3329 = vmul.f32 %v924, %v271
      %v3330 = vmul.f32 %v925, %v271
      %v3331 = vmul.f32 %v926, %v271
      %v3332 = vmul.f32 %v927, %v271
      %v3333 = vmul.f32 %v928, %v271
      %v3340 = vrot.slane %v3328, 1
      %v3341 = vrot.slane %v3329, 1
      %v3342 = vsel %vm160, %v3340, %v3341
      %v3343 = vrot.slane %v3330, 1
      %v3344 = vsel %vm160, %v3341, %v3343
      %v3345 = vrot.slane %v3331, 1
      %v3346 = vsel %vm160, %v3343, %v3345
      %v3347 = vrot.slane %v3332, 1
      %v3348 = vsel %vm160, %v3345, %v3347
      %v3349 = vrot.slane %v3333, 1
      %v3350 = vsel %vm160, %v3347, %v3349
      %v3357 = vadd.f32 %v3287, %v3342
      %v3358 = vadd.f32 %v3288, %v3344
      %v3359 = vadd.f32 %v3289, %v3346
      %v3360 = vadd.f32 %v3290, %v3348
      %v3361 = vadd.f32 %v3291, %v3350
      %v3362 = vadd.f32 %v3292, %v3349
      %v3363 = vmul.f32 %v1190, %v654
      %v3364 = vmul.f32 %v1191, %v654
      %v3365 = vmul.f32 %v1192, %v654
      %v3366 = vmul.f32 %v1193, %v654
      %v3367 = vmul.f32 %v1194, %v654
      %v3368 = vmul.f32 %v1195, %v654
      %v3369 = vadd.f32 %v3228, %v3363
      %v3370 = vadd.f32 %v3229, %v3364
      %v3371 = vadd.f32 %v3230, %v3365
      %v3372 = vadd.f32 %v3231, %v3366
      %v3373 = vadd.f32 %v3232, %v3367
      %v3374 = vadd.f32 %v3233, %v3368
      %v3375 = vmul.f32 %v1190, %v667
      %v3376 = vmul.f32 %v1191, %v667
      %v3377 = vmul.f32 %v1192, %v667
      %v3378 = vmul.f32 %v1193, %v667
      %v3379 = vmul.f32 %v1194, %v667
      %v3380 = vmul.f32 %v1195, %v667
      %v3381 = vadd.f32 %v3263, %v3375
      %v3382 = vadd.f32 %v3264, %v3376
      %v3383 = vadd.f32 %v3265, %v3377
      %v3384 = vadd.f32 %v3266, %v3378
      %v3385 = vadd.f32 %v3267, %v3379
      %v3386 = vadd.f32 %v3268, %v3380
      %v3387 = vmul.f32 %v1190, %v680
      %v3388 = vmul.f32 %v1191, %v680
      %v3389 = vmul.f32 %v1192, %v680
      %v3390 = vmul.f32 %v1193, %v680
      %v3391 = vmul.f32 %v1194, %v680
      %v3392 = vmul.f32 %v1195, %v680
      %v3399 = vrot.slane %v3387, 1
      %v3400 = vrot.slane %v3388, 1
      %v3401 = vsel %vm160, %v3399, %v3400
      %v3402 = vrot.slane %v3389, 1
      %v3403 = vsel %vm160, %v3400, %v3402
      %v3404 = vrot.slane %v3390, 1
      %v3405 = vsel %vm160, %v3402, %v3404
      %v3406 = vrot.slane %v3391, 1
      %v3407 = vsel %vm160, %v3404, %v3406
      %v3408 = vrot.slane %v3392, 1
      %v3409 = vsel %vm160, %v3406, %v3408
      %v3416 = vadd.f32 %v3369, %v3401
      %v3417 = vadd.f32 %v3370, %v3403
      %v3418 = vadd.f32 %v3371, %v3405
      %v3419 = vadd.f32 %v3372, %v3407
      %v3420 = vadd.f32 %v3373, %v3409
      %v3421 = vadd.f32 %v3374, %v3408
      %v3422 = vmul.f32 %v1190, %v716
      %v3423 = vmul.f32 %v1191, %v716
      %v3424 = vmul.f32 %v1192, %v716
      %v3425 = vmul.f32 %v1193, %v716
      %v3426 = vmul.f32 %v1194, %v716
      %v3427 = vmul.f32 %v1195, %v716
      %v3434 = vrot.slane %v3422, 1
      %v3435 = vrot.slane %v3423, 1
      %v3436 = vsel %vm160, %v3434, %v3435
      %v3437 = vrot.slane %v3424, 1
      %v3438 = vsel %vm160, %v3435, %v3437
      %v3439 = vrot.slane %v3425, 1
      %v3440 = vsel %vm160, %v3437, %v3439
      %v3441 = vrot.slane %v3426, 1
      %v3442 = vsel %vm160, %v3439, %v3441
      %v3443 = vrot.slane %v3427, 1
      %v3444 = vsel %vm160, %v3441, %v3443
      %v3451 = vadd.f32 %v3381, %v3436
      %v3452 = vadd.f32 %v3382, %v3438
      %v3453 = vadd.f32 %v3383, %v3440
      %v3454 = vadd.f32 %v3384, %v3442
      %v3455 = vadd.f32 %v3385, %v3444
      %v3456 = vadd.f32 %v3386, %v3443
      %v3457 = vmul.f32 %v1190, %v752
      %v3458 = vmul.f32 %v1191, %v752
      %v3459 = vmul.f32 %v1192, %v752
      %v3460 = vmul.f32 %v1193, %v752
      %v3461 = vmul.f32 %v1194, %v752
      %v3462 = vmul.f32 %v1195, %v752
      %v3463 = vadd.f32 %v3322, %v3457
      %v3464 = vadd.f32 %v3323, %v3458
      %v3465 = vadd.f32 %v3324, %v3459
      %v3466 = vadd.f32 %v3325, %v3460
      %v3467 = vadd.f32 %v3326, %v3461
      %v3468 = vadd.f32 %v3327, %v3462
      %v3469 = vmul.f32 %v1190, %v765
      %v3470 = vmul.f32 %v1191, %v765
      %v3471 = vmul.f32 %v1192, %v765
      %v3472 = vmul.f32 %v1193, %v765
      %v3473 = vmul.f32 %v1194, %v765
      %v3474 = vmul.f32 %v1195, %v765
      %v3475 = vadd.f32 %v3357, %v3469
      %v3476 = vadd.f32 %v3358, %v3470
      %v3477 = vadd.f32 %v3359, %v3471
      %v3478 = vadd.f32 %v3360, %v3472
      %v3479 = vadd.f32 %v3361, %v3473
      %v3480 = vadd.f32 %v3362, %v3474
      %v3481 = vmul.f32 %v1190, %v778
      %v3482 = vmul.f32 %v1191, %v778
      %v3483 = vmul.f32 %v1192, %v778
      %v3484 = vmul.f32 %v1193, %v778
      %v3485 = vmul.f32 %v1194, %v778
      %v3486 = vmul.f32 %v1195, %v778
      %v3493 = vrot.slane %v3481, 2
      %v3494 = vrot.slane %v3482, 2
      %v3495 = vsel %vm247, %v3493, %v3494
      %v3496 = vrot.slane %v3483, 2
      %v3497 = vsel %vm247, %v3494, %v3496
      %v3498 = vrot.slane %v3484, 2
      %v3499 = vsel %vm247, %v3496, %v3498
      %v3500 = vrot.slane %v3485, 2
      %v3501 = vsel %vm247, %v3498, %v3500
      %v3502 = vrot.slane %v3486, 2
      %v3503 = vsel %vm247, %v3500, %v3502
      %v3510 = vadd.f32 %v3416, %v3495
      %v3511 = vadd.f32 %v3417, %v3497
      %v3512 = vadd.f32 %v3418, %v3499
      %v3513 = vadd.f32 %v3419, %v3501
      %v3514 = vadd.f32 %v3420, %v3503
      %v3515 = vadd.f32 %v3421, %v3502
      %v3516 = vmul.f32 %v1190, %v814
      %v3517 = vmul.f32 %v1191, %v814
      %v3518 = vmul.f32 %v1192, %v814
      %v3519 = vmul.f32 %v1193, %v814
      %v3520 = vmul.f32 %v1194, %v814
      %v3521 = vmul.f32 %v1195, %v814
      %v3528 = vrot.slane %v3516, 2
      %v3529 = vrot.slane %v3517, 2
      %v3530 = vsel %vm247, %v3528, %v3529
      %v3531 = vrot.slane %v3518, 2
      %v3532 = vsel %vm247, %v3529, %v3531
      %v3533 = vrot.slane %v3519, 2
      %v3534 = vsel %vm247, %v3531, %v3533
      %v3535 = vrot.slane %v3520, 2
      %v3536 = vsel %vm247, %v3533, %v3535
      %v3537 = vrot.slane %v3521, 2
      %v3538 = vsel %vm247, %v3535, %v3537
      %v3545 = vadd.f32 %v3451, %v3530
      %v3546 = vadd.f32 %v3452, %v3532
      %v3547 = vadd.f32 %v3453, %v3534
      %v3548 = vadd.f32 %v3454, %v3536
      %v3549 = vadd.f32 %v3455, %v3538
      %v3550 = vadd.f32 %v3456, %v3537
      %v3551 = vmul.f32 %v1190, %v850
      %v3552 = vmul.f32 %v1191, %v850
      %v3553 = vmul.f32 %v1192, %v850
      %v3554 = vmul.f32 %v1193, %v850
      %v3555 = vmul.f32 %v1194, %v850
      %v3556 = vmul.f32 %v1195, %v850
      %v3563 = vrot.slane %v3551, 1
      %v3564 = vrot.slane %v3552, 1
      %v3565 = vsel %vm160, %v3563, %v3564
      %v3566 = vrot.slane %v3553, 1
      %v3567 = vsel %vm160, %v3564, %v3566
      %v3568 = vrot.slane %v3554, 1
      %v3569 = vsel %vm160, %v3566, %v3568
      %v3570 = vrot.slane %v3555, 1
      %v3571 = vsel %vm160, %v3568, %v3570
      %v3572 = vrot.slane %v3556, 1
      %v3573 = vsel %vm160, %v3570, %v3572
      %v3580 = vadd.f32 %v3463, %v3565
      %v3581 = vadd.f32 %v3464, %v3567
      %v3582 = vadd.f32 %v3465, %v3569
      %v3583 = vadd.f32 %v3466, %v3571
      %v3584 = vadd.f32 %v3467, %v3573
      %v3585 = vadd.f32 %v3468, %v3572
      %v3586 = vmul.f32 %v1190, %v886
      %v3587 = vmul.f32 %v1191, %v886
      %v3588 = vmul.f32 %v1192, %v886
      %v3589 = vmul.f32 %v1193, %v886
      %v3590 = vmul.f32 %v1194, %v886
      %v3591 = vmul.f32 %v1195, %v886
      %v3598 = vrot.slane %v3586, 1
      %v3599 = vrot.slane %v3587, 1
      %v3600 = vsel %vm160, %v3598, %v3599
      %v3601 = vrot.slane %v3588, 1
      %v3602 = vsel %vm160, %v3599, %v3601
      %v3603 = vrot.slane %v3589, 1
      %v3604 = vsel %vm160, %v3601, %v3603
      %v3605 = vrot.slane %v3590, 1
      %v3606 = vsel %vm160, %v3603, %v3605
      %v3607 = vrot.slane %v3591, 1
      %v3608 = vsel %vm160, %v3605, %v3607
      %v3615 = vadd.f32 %v3475, %v3600
      %v3616 = vadd.f32 %v3476, %v3602
      %v3617 = vadd.f32 %v3477, %v3604
      %v3618 = vadd.f32 %v3478, %v3606
      %v3619 = vadd.f32 %v3479, %v3608
      %v3620 = vadd.f32 %v3480, %v3607
      %v3621 = vmul.f32 %v1465, %v752
      %v3622 = vmul.f32 %v1466, %v752
      %v3623 = vmul.f32 %v1467, %v752
      %v3624 = vmul.f32 %v1468, %v752
      %v3625 = vmul.f32 %v1469, %v752
      %v3626 = vmul.f32 %v1470, %v752
      %v3627 = vadd.f32 %v3510, %v3621
      %v3628 = vadd.f32 %v3511, %v3622
      %v3629 = vadd.f32 %v3512, %v3623
      %v3630 = vadd.f32 %v3513, %v3624
      %v3631 = vadd.f32 %v3514, %v3625
      %v3632 = vadd.f32 %v3515, %v3626
      %v3633 = vmul.f32 %v1465, %v765
      %v3634 = vmul.f32 %v1466, %v765
      %v3635 = vmul.f32 %v1467, %v765
      %v3636 = vmul.f32 %v1468, %v765
      %v3637 = vmul.f32 %v1469, %v765
      %v3638 = vmul.f32 %v1470, %v765
      %v3639 = vadd.f32 %v3545, %v3633
      %v3640 = vadd.f32 %v3546, %v3634
      %v3641 = vadd.f32 %v3547, %v3635
      %v3642 = vadd.f32 %v3548, %v3636
      %v3643 = vadd.f32 %v3549, %v3637
      %v3644 = vadd.f32 %v3550, %v3638
      %v3645 = vmul.f32 %v1465, %v654
      %v3646 = vmul.f32 %v1466, %v654
      %v3647 = vmul.f32 %v1467, %v654
      %v3648 = vmul.f32 %v1468, %v654
      %v3649 = vmul.f32 %v1469, %v654
      %v3650 = vmul.f32 %v1470, %v654
      %v3657 = vrot.slane %v3645, 7
      %v3658 = vrot.slane %v3646, 7
      %v3659 = vsel %vm422, %v3657, %v3658
      %v3660 = vrot.slane %v3647, 7
      %v3661 = vsel %vm422, %v3658, %v3660
      %v3662 = vrot.slane %v3648, 7
      %v3663 = vsel %vm422, %v3660, %v3662
      %v3664 = vrot.slane %v3649, 7
      %v3665 = vsel %vm422, %v3662, %v3664
      %v3666 = vrot.slane %v3650, 7
      %v3667 = vsel %vm422, %v3664, %v3666
      %v3674 = vadd.f32 %v3580, %v3657
      %v3675 = vadd.f32 %v3581, %v3659
      %v3676 = vadd.f32 %v3582, %v3661
      %v3677 = vadd.f32 %v3583, %v3663
      %v3678 = vadd.f32 %v3584, %v3665
      %v3679 = vadd.f32 %v3585, %v3667
      %v3680 = vmul.f32 %v1465, %v667
      %v3681 = vmul.f32 %v1466, %v667
      %v3682 = vmul.f32 %v1467, %v667
      %v3683 = vmul.f32 %v1468, %v667
      %v3684 = vmul.f32 %v1469, %v667
      %v3685 = vmul.f32 %v1470, %v667
      %v3692 = vrot.slane %v3680, 7
      %v3693 = vrot.slane %v3681, 7
      %v3694 = vsel %vm422, %v3692, %v3693
      %v3695 = vrot.slane %v3682, 7
      %v3696 = vsel %vm422, %v3693, %v3695
      %v3697 = vrot.slane %v3683, 7
      %v3698 = vsel %vm422, %v3695, %v3697
      %v3699 = vrot.slane %v3684, 7
      %v3700 = vsel %vm422, %v3697, %v3699
      %v3701 = vrot.slane %v3685, 7
      %v3702 = vsel %vm422, %v3699, %v3701
      %v3709 = vadd.f32 %v3615, %v3692
      %v3710 = vadd.f32 %v3616, %v3694
      %v3711 = vadd.f32 %v3617, %v3696
      %v3712 = vadd.f32 %v3618, %v3698
      %v3713 = vadd.f32 %v3619, %v3700
      %v3714 = vadd.f32 %v3620, %v3702
      %v3715 = vmul.f32 %v1465, %v850
      %v3716 = vmul.f32 %v1466, %v850
      %v3717 = vmul.f32 %v1467, %v850
      %v3718 = vmul.f32 %v1468, %v850
      %v3719 = vmul.f32 %v1469, %v850
      %v3720 = vmul.f32 %v1470, %v850
      %v3727 = vrot.slane %v3715, 1
      %v3728 = vrot.slane %v3716, 1
      %v3729 = vsel %vm160, %v3727, %v3728
      %v3730 = vrot.slane %v3717, 1
      %v3731 = vsel %vm160, %v3728, %v3730
      %v3732 = vrot.slane %v3718, 1
      %v3733 = vsel %vm160, %v3730, %v3732
      %v3734 = vrot.slane %v3719, 1
      %v3735 = vsel %vm160, %v3732, %v3734
      %v3736 = vrot.slane %v3720, 1
      %v3737 = vsel %vm160, %v3734, %v3736
      %v3744 = vadd.f32 %v3627, %v3729
      %v3745 = vadd.f32 %v3628, %v3731
      %v3746 = vadd.f32 %v3629, %v3733
      %v3747 = vadd.f32 %v3630, %v3735
      %v3748 = vadd.f32 %v3631, %v3737
      %v3749 = vadd.f32 %v3632, %v3736
      %v3750 = vmul.f32 %v1465, %v886
      %v3751 = vmul.f32 %v1466, %v886
      %v3752 = vmul.f32 %v1467, %v886
      %v3753 = vmul.f32 %v1468, %v886
      %v3754 = vmul.f32 %v1469, %v886
      %v3755 = vmul.f32 %v1470, %v886
      %v3762 = vrot.slane %v3750, 1
      %v3763 = vrot.slane %v3751, 1
      %v3764 = vsel %vm160, %v3762, %v3763
      %v3765 = vrot.slane %v3752, 1
      %v3766 = vsel %vm160, %v3763, %v3765
      %v3767 = vrot.slane %v3753, 1
      %v3768 = vsel %vm160, %v3765, %v3767
      %v3769 = vrot.slane %v3754, 1
      %v3770 = vsel %vm160, %v3767, %v3769
      %v3771 = vrot.slane %v3755, 1
      %v3772 = vsel %vm160, %v3769, %v3771
      %v3779 = vadd.f32 %v3639, %v3764
      %v3780 = vadd.f32 %v3640, %v3766
      %v3781 = vadd.f32 %v3641, %v3768
      %v3782 = vadd.f32 %v3642, %v3770
      %v3783 = vadd.f32 %v3643, %v3772
      %v3784 = vadd.f32 %v3644, %v3771
      %v3785 = vmul.f32 %v1465, %v680
      %v3786 = vmul.f32 %v1466, %v680
      %v3787 = vmul.f32 %v1467, %v680
      %v3788 = vmul.f32 %v1468, %v680
      %v3789 = vmul.f32 %v1469, %v680
      %v3790 = vmul.f32 %v1470, %v680
      %v3791 = vadd.f32 %v3674, %v3785
      %v3792 = vadd.f32 %v3675, %v3786
      %v3793 = vadd.f32 %v3676, %v3787
      %v3794 = vadd.f32 %v3677, %v3788
      %v3795 = vadd.f32 %v3678, %v3789
      %v3796 = vadd.f32 %v3679, %v3790
      %v3797 = vmul.f32 %v1465, %v716
      %v3798 = vmul.f32 %v1466, %v716
      %v3799 = vmul.f32 %v1467, %v716
      %v3800 = vmul.f32 %v1468, %v716
      %v3801 = vmul.f32 %v1469, %v716
      %v3802 = vmul.f32 %v1470, %v716
      %v3803 = vadd.f32 %v3709, %v3797
      %v3804 = vadd.f32 %v3710, %v3798
      %v3805 = vadd.f32 %v3711, %v3799
      %v3806 = vadd.f32 %v3712, %v3800
      %v3807 = vadd.f32 %v3713, %v3801
      %v3808 = vadd.f32 %v3714, %v3802
      %v3809 = vmul.f32 %v1465, %v778
      %v3810 = vmul.f32 %v1466, %v778
      %v3811 = vmul.f32 %v1467, %v778
      %v3812 = vmul.f32 %v1468, %v778
      %v3813 = vmul.f32 %v1469, %v778
      %v3814 = vmul.f32 %v1470, %v778
      %v3821 = vrot.slane %v3809, 1
      %v3822 = vrot.slane %v3810, 1
      %v3823 = vsel %vm160, %v3821, %v3822
      %v3824 = vrot.slane %v3811, 1
      %v3825 = vsel %vm160, %v3822, %v3824
      %v3826 = vrot.slane %v3812, 1
      %v3827 = vsel %vm160, %v3824, %v3826
      %v3828 = vrot.slane %v3813, 1
      %v3829 = vsel %vm160, %v3826, %v3828
      %v3830 = vrot.slane %v3814, 1
      %v3831 = vsel %vm160, %v3828, %v3830
      %v3838 = vadd.f32 %v3791, %v3823
      %v3839 = vadd.f32 %v3792, %v3825
      %v3840 = vadd.f32 %v3793, %v3827
      %v3841 = vadd.f32 %v3794, %v3829
      %v3842 = vadd.f32 %v3795, %v3831
      %v3843 = vadd.f32 %v3796, %v3830
      %v3844 = vmul.f32 %v1465, %v814
      %v3845 = vmul.f32 %v1466, %v814
      %v3846 = vmul.f32 %v1467, %v814
      %v3847 = vmul.f32 %v1468, %v814
      %v3848 = vmul.f32 %v1469, %v814
      %v3849 = vmul.f32 %v1470, %v814
      %v3856 = vrot.slane %v3844, 1
      %v3857 = vrot.slane %v3845, 1
      %v3858 = vsel %vm160, %v3856, %v3857
      %v3859 = vrot.slane %v3846, 1
      %v3860 = vsel %vm160, %v3857, %v3859
      %v3861 = vrot.slane %v3847, 1
      %v3862 = vsel %vm160, %v3859, %v3861
      %v3863 = vrot.slane %v3848, 1
      %v3864 = vsel %vm160, %v3861, %v3863
      %v3865 = vrot.slane %v3849, 1
      %v3866 = vsel %vm160, %v3863, %v3865
      %v3873 = vadd.f32 %v3803, %v3858
      %v3874 = vadd.f32 %v3804, %v3860
      %v3875 = vadd.f32 %v3805, %v3862
      %v3876 = vadd.f32 %v3806, %v3864
      %v3877 = vadd.f32 %v3807, %v3866
      %v3878 = vadd.f32 %v3808, %v3865
      %v3879 = vmul.f32 %v1732, %v1196
      %v3880 = vmul.f32 %v1733, %v1196
      %v3881 = vmul.f32 %v1734, %v1196
      %v3882 = vmul.f32 %v1735, %v1196
      %v3883 = vmul.f32 %v1736, %v1196
      %v3884 = vmul.f32 %v1737, %v1196
      %v3885 = vadd.f32 %v3744, %v3879
      %v3886 = vadd.f32 %v3745, %v3880
      %v3887 = vadd.f32 %v3746, %v3881
      %v3888 = vadd.f32 %v3747, %v3882
      %v3889 = vadd.f32 %v3748, %v3883
      %v3890 = vadd.f32 %v3749, %v3884
      %v3891 = vmul.f32 %v1732, %v1209
      %v3892 = vmul.f32 %v1733, %v1209
      %v3893 = vmul.f32 %v1734, %v1209
      %v3894 = vmul.f32 %v1735, %v1209
      %v3895 = vmul.f32 %v1736, %v1209
      %v3896 = vmul.f32 %v1737, %v1209
      %v3897 = vadd.f32 %v3779, %v3891
      %v3898 = vadd.f32 %v3780, %v3892
      %v3899 = vadd.f32 %v3781, %v3893
      %v3900 = vadd.f32 %v3782, %v3894
      %v3901 = vadd.f32 %v3783, %v3895
      %v3902 = vadd.f32 %v3784, %v3896
      %v3903 = vmul.f32 %v1732, %v1222
      %v3904 = vmul.f32 %v1733, %v1222
      %v3905 = vmul.f32 %v1734, %v1222
      %v3906 = vmul.f32 %v1735, %v1222
      %v3907 = vmul.f32 %v1736, %v1222
      %v3908 = vmul.f32 %v1737, %v1222
      %v3915 = vrot.slane %v3903, 1
      %v3916 = vrot.slane %v3904, 1
      %v3917 = vsel %vm160, %v3915, %v3916
      %v3918 = vrot.slane %v3905, 1
      %v3919 = vsel %vm160, %v3916, %v3918
      %v3920 = vrot.slane %v3906, 1
      %v3921 = vsel %vm160, %v3918, %v3920
      %v3922 = vrot.slane %v3907, 1
      %v3923 = vsel %vm160, %v3920, %v3922
      %v3924 = vrot.slane %v3908, 1
      %v3925 = vsel %vm160, %v3922, %v3924
      %v3932 = vadd.f32 %v3885, %v3917
      %v3933 = vadd.f32 %v3886, %v3919
      %v3934 = vadd.f32 %v3887, %v3921
      %v3935 = vadd.f32 %v3888, %v3923
      %v3936 = vadd.f32 %v3889, %v3925
      %v3937 = vadd.f32 %v3890, %v3924
      %v3938 = vmul.f32 %v1732, %v1258
      %v3939 = vmul.f32 %v1733, %v1258
      %v3940 = vmul.f32 %v1734, %v1258
      %v3941 = vmul.f32 %v1735, %v1258
      %v3942 = vmul.f32 %v1736, %v1258
      %v3943 = vmul.f32 %v1737, %v1258
      %v3950 = vrot.slane %v3938, 1
      %v3951 = vrot.slane %v3939, 1
      %v3952 = vsel %vm160, %v3950, %v3951
      %v3953 = vrot.slane %v3940, 1
      %v3954 = vsel %vm160, %v3951, %v3953
      %v3955 = vrot.slane %v3941, 1
      %v3956 = vsel %vm160, %v3953, %v3955
      %v3957 = vrot.slane %v3942, 1
      %v3958 = vsel %vm160, %v3955, %v3957
      %v3959 = vrot.slane %v3943, 1
      %v3960 = vsel %vm160, %v3957, %v3959
      %v3967 = vadd.f32 %v3897, %v3952
      %v3968 = vadd.f32 %v3898, %v3954
      %v3969 = vadd.f32 %v3899, %v3956
      %v3970 = vadd.f32 %v3900, %v3958
      %v3971 = vadd.f32 %v3901, %v3960
      %v3972 = vadd.f32 %v3902, %v3959
      %v3973 = vmul.f32 %v1732, %v1294
      %v3974 = vmul.f32 %v1733, %v1294
      %v3975 = vmul.f32 %v1734, %v1294
      %v3976 = vmul.f32 %v1735, %v1294
      %v3977 = vmul.f32 %v1736, %v1294
      %v3978 = vmul.f32 %v1737, %v1294
      %v3979 = vadd.f32 %v3838, %v3973
      %v3980 = vadd.f32 %v3839, %v3974
      %v3981 = vadd.f32 %v3840, %v3975
      %v3982 = vadd.f32 %v3841, %v3976
      %v3983 = vadd.f32 %v3842, %v3977
      %v3984 = vadd.f32 %v3843, %v3978
      %v3985 = vmul.f32 %v1732, %v1307
      %v3986 = vmul.f32 %v1733, %v1307
      %v3987 = vmul.f32 %v1734, %v1307
      %v3988 = vmul.f32 %v1735, %v1307
      %v3989 = vmul.f32 %v1736, %v1307
      %v3990 = vmul.f32 %v1737, %v1307
      %v3991 = vadd.f32 %v3873, %v3985
      %v3992 = vadd.f32 %v3874, %v3986
      %v3993 = vadd.f32 %v3875, %v3987
      %v3994 = vadd.f32 %v3876, %v3988
      %v3995 = vadd.f32 %v3877, %v3989
      %v3996 = vadd.f32 %v3878, %v3990
      %v3997 = vmul.f32 %v1732, %v1320
      %v3998 = vmul.f32 %v1733, %v1320
      %v3999 = vmul.f32 %v1734, %v1320
      %v4000 = vmul.f32 %v1735, %v1320
      %v4001 = vmul.f32 %v1736, %v1320
      %v4002 = vmul.f32 %v1737, %v1320
      %v4009 = vrot.slane %v3997, 2
      %v4010 = vrot.slane %v3998, 2
      %v4011 = vsel %vm247, %v4009, %v4010
      %v4012 = vrot.slane %v3999, 2
      %v4013 = vsel %vm247, %v4010, %v4012
      %v4014 = vrot.slane %v4000, 2
      %v4015 = vsel %vm247, %v4012, %v4014
      %v4016 = vrot.slane %v4001, 2
      %v4017 = vsel %vm247, %v4014, %v4016
      %v4018 = vrot.slane %v4002, 2
      %v4019 = vsel %vm247, %v4016, %v4018
      %v4026 = vadd.f32 %v3932, %v4011
      %v4027 = vadd.f32 %v3933, %v4013
      %v4028 = vadd.f32 %v3934, %v4015
      %v4029 = vadd.f32 %v3935, %v4017
      %v4030 = vadd.f32 %v3936, %v4019
      %v4031 = vadd.f32 %v3937, %v4018
      %v4032 = vmul.f32 %v1732, %v1356
      %v4033 = vmul.f32 %v1733, %v1356
      %v4034 = vmul.f32 %v1734, %v1356
      %v4035 = vmul.f32 %v1735, %v1356
      %v4036 = vmul.f32 %v1736, %v1356
      %v4037 = vmul.f32 %v1737, %v1356
      %v4044 = vrot.slane %v4032, 2
      %v4045 = vrot.slane %v4033, 2
      %v4046 = vsel %vm247, %v4044, %v4045
      %v4047 = vrot.slane %v4034, 2
      %v4048 = vsel %vm247, %v4045, %v4047
      %v4049 = vrot.slane %v4035, 2
      %v4050 = vsel %vm247, %v4047, %v4049
      %v4051 = vrot.slane %v4036, 2
      %v4052 = vsel %vm247, %v4049, %v4051
      %v4053 = vrot.slane %v4037, 2
      %v4054 = vsel %vm247, %v4051, %v4053
      %v4061 = vadd.f32 %v3967, %v4046
      %v4062 = vadd.f32 %v3968, %v4048
      %v4063 = vadd.f32 %v3969, %v4050
      %v4064 = vadd.f32 %v3970, %v4052
      %v4065 = vadd.f32 %v3971, %v4054
      %v4066 = vadd.f32 %v3972, %v4053
      %v4067 = vmul.f32 %v1732, %v1392
      %v4068 = vmul.f32 %v1733, %v1392
      %v4069 = vmul.f32 %v1734, %v1392
      %v4070 = vmul.f32 %v1735, %v1392
      %v4071 = vmul.f32 %v1736, %v1392
      %v4072 = vmul.f32 %v1737, %v1392
      %v4079 = vrot.slane %v4067, 1
      %v4080 = vrot.slane %v4068, 1
      %v4081 = vsel %vm160, %v4079, %v4080
      %v4082 = vrot.slane %v4069, 1
      %v4083 = vsel %vm160, %v4080, %v4082
      %v4084 = vrot.slane %v4070, 1
      %v4085 = vsel %vm160, %v4082, %v4084
      %v4086 = vrot.slane %v4071, 1
      %v4087 = vsel %vm160, %v4084, %v4086
      %v4088 = vrot.slane %v4072, 1
      %v4089 = vsel %vm160, %v4086, %v4088
      %v4096 = vadd.f32 %v3979, %v4081
      %v4097 = vadd.f32 %v3980, %v4083
      %v4098 = vadd.f32 %v3981, %v4085
      %v4099 = vadd.f32 %v3982, %v4087
      %v4100 = vadd.f32 %v3983, %v4089
      %v4101 = vadd.f32 %v3984, %v4088
      %v4102 = vmul.f32 %v1732, %v1428
      %v4103 = vmul.f32 %v1733, %v1428
      %v4104 = vmul.f32 %v1734, %v1428
      %v4105 = vmul.f32 %v1735, %v1428
      %v4106 = vmul.f32 %v1736, %v1428
      %v4107 = vmul.f32 %v1737, %v1428
      %v4114 = vrot.slane %v4102, 1
      %v4115 = vrot.slane %v4103, 1
      %v4116 = vsel %vm160, %v4114, %v4115
      %v4117 = vrot.slane %v4104, 1
      %v4118 = vsel %vm160, %v4115, %v4117
      %v4119 = vrot.slane %v4105, 1
      %v4120 = vsel %vm160, %v4117, %v4119
      %v4121 = vrot.slane %v4106, 1
      %v4122 = vsel %vm160, %v4119, %v4121
      %v4123 = vrot.slane %v4107, 1
      %v4124 = vsel %vm160, %v4121, %v4123
      %v4131 = vadd.f32 %v3991, %v4116
      %v4132 = vadd.f32 %v3992, %v4118
      %v4133 = vadd.f32 %v3993, %v4120
      %v4134 = vadd.f32 %v3994, %v4122
      %v4135 = vadd.f32 %v3995, %v4124
      %v4136 = vadd.f32 %v3996, %v4123
      %v4137 = vmul.f32 %v2007, %v1294
      %v4138 = vmul.f32 %v2008, %v1294
      %v4139 = vmul.f32 %v2009, %v1294
      %v4140 = vmul.f32 %v2010, %v1294
      %v4141 = vmul.f32 %v2011, %v1294
      %v4142 = vmul.f32 %v2012, %v1294
      %v4143 = vadd.f32 %v4026, %v4137
      %v4144 = vadd.f32 %v4027, %v4138
      %v4145 = vadd.f32 %v4028, %v4139
      %v4146 = vadd.f32 %v4029, %v4140
      %v4147 = vadd.f32 %v4030, %v4141
      %v4148 = vadd.f32 %v4031, %v4142
      %v4149 = vmul.f32 %v2007, %v1307
      %v4150 = vmul.f32 %v2008, %v1307
      %v4151 = vmul.f32 %v2009, %v1307
      %v4152 = vmul.f32 %v2010, %v1307
      %v4153 = vmul.f32 %v2011, %v1307
      %v4154 = vmul.f32 %v2012, %v1307
      %v4155 = vadd.f32 %v4061, %v4149
      %v4156 = vadd.f32 %v4062, %v4150
      %v4157 = vadd.f32 %v4063, %v4151
      %v4158 = vadd.f32 %v4064, %v4152
      %v4159 = vadd.f32 %v4065, %v4153
      %v4160 = vadd.f32 %v4066, %v4154
      %v4161 = vmul.f32 %v2007, %v1196
      %v4162 = vmul.f32 %v2008, %v1196
      %v4163 = vmul.f32 %v2009, %v1196
      %v4164 = vmul.f32 %v2010, %v1196
      %v4165 = vmul.f32 %v2011, %v1196
      %v4166 = vmul.f32 %v2012, %v1196
      %v4173 = vrot.slane %v4161, 7
      %v4174 = vrot.slane %v4162, 7
      %v4175 = vsel %vm422, %v4173, %v4174
      %v4176 = vrot.slane %v4163, 7
      %v4177 = vsel %vm422, %v4174, %v4176
      %v4178 = vrot.slane %v4164, 7
      %v4179 = vsel %vm422, %v4176, %v4178
      %v4180 = vrot.slane %v4165, 7
      %v4181 = vsel %vm422, %v4178, %v4180
      %v4182 = vrot.slane %v4166, 7
      %v4183 = vsel %vm422, %v4180, %v4182
      %v4190 = vadd.f32 %v4096, %v4173
      %v4191 = vadd.f32 %v4097, %v4175
      %v4192 = vadd.f32 %v4098, %v4177
      %v4193 = vadd.f32 %v4099, %v4179
      %v4194 = vadd.f32 %v4100, %v4181
      %v4195 = vadd.f32 %v4101, %v4183
      %v4196 = vmul.f32 %v2007, %v1209
      %v4197 = vmul.f32 %v2008, %v1209
      %v4198 = vmul.f32 %v2009, %v1209
      %v4199 = vmul.f32 %v2010, %v1209
      %v4200 = vmul.f32 %v2011, %v1209
      %v4201 = vmul.f32 %v2012, %v1209
      %v4208 = vrot.slane %v4196, 7
      %v4209 = vrot.slane %v4197, 7
      %v4210 = vsel %vm422, %v4208, %v4209
      %v4211 = vrot.slane %v4198, 7
      %v4212 = vsel %vm422, %v4209, %v4211
      %v4213 = vrot.slane %v4199, 7
      %v4214 = vsel %vm422, %v4211, %v4213
      %v4215 = vrot.slane %v4200, 7
      %v4216 = vsel %vm422, %v4213, %v4215
      %v4217 = vrot.slane %v4201, 7
      %v4218 = vsel %vm422, %v4215, %v4217
      %v4225 = vadd.f32 %v4131, %v4208
      %v4226 = vadd.f32 %v4132, %v4210
      %v4227 = vadd.f32 %v4133, %v4212
      %v4228 = vadd.f32 %v4134, %v4214
      %v4229 = vadd.f32 %v4135, %v4216
      %v4230 = vadd.f32 %v4136, %v4218
      %v4231 = vmul.f32 %v2007, %v1392
      %v4232 = vmul.f32 %v2008, %v1392
      %v4233 = vmul.f32 %v2009, %v1392
      %v4234 = vmul.f32 %v2010, %v1392
      %v4235 = vmul.f32 %v2011, %v1392
      %v4236 = vmul.f32 %v2012, %v1392
      %v4243 = vrot.slane %v4231, 1
      %v4244 = vrot.slane %v4232, 1
      %v4245 = vsel %vm160, %v4243, %v4244
      %v4246 = vrot.slane %v4233, 1
      %v4247 = vsel %vm160, %v4244, %v4246
      %v4248 = vrot.slane %v4234, 1
      %v4249 = vsel %vm160, %v4246, %v4248
      %v4250 = vrot.slane %v4235, 1
      %v4251 = vsel %vm160, %v4248, %v4250
      %v4252 = vrot.slane %v4236, 1
      %v4253 = vsel %vm160, %v4250, %v4252
      %v4260 = vadd.f32 %v4143, %v4245
      %v4261 = vadd.f32 %v4144, %v4247
      %v4262 = vadd.f32 %v4145, %v4249
      %v4263 = vadd.f32 %v4146, %v4251
      %v4264 = vadd.f32 %v4147, %v4253
      %v4265 = vadd.f32 %v4148, %v4252
      %v4266 = vmul.f32 %v2007, %v1428
      %v4267 = vmul.f32 %v2008, %v1428
      %v4268 = vmul.f32 %v2009, %v1428
      %v4269 = vmul.f32 %v2010, %v1428
      %v4270 = vmul.f32 %v2011, %v1428
      %v4271 = vmul.f32 %v2012, %v1428
      %v4278 = vrot.slane %v4266, 1
      %v4279 = vrot.slane %v4267, 1
      %v4280 = vsel %vm160, %v4278, %v4279
      %v4281 = vrot.slane %v4268, 1
      %v4282 = vsel %vm160, %v4279, %v4281
      %v4283 = vrot.slane %v4269, 1
      %v4284 = vsel %vm160, %v4281, %v4283
      %v4285 = vrot.slane %v4270, 1
      %v4286 = vsel %vm160, %v4283, %v4285
      %v4287 = vrot.slane %v4271, 1
      %v4288 = vsel %vm160, %v4285, %v4287
      %v4295 = vadd.f32 %v4155, %v4280
      %v4296 = vadd.f32 %v4156, %v4282
      %v4297 = vadd.f32 %v4157, %v4284
      %v4298 = vadd.f32 %v4158, %v4286
      %v4299 = vadd.f32 %v4159, %v4288
      %v4300 = vadd.f32 %v4160, %v4287
      %v4301 = vmul.f32 %v2007, %v1222
      %v4302 = vmul.f32 %v2008, %v1222
      %v4303 = vmul.f32 %v2009, %v1222
      %v4304 = vmul.f32 %v2010, %v1222
      %v4305 = vmul.f32 %v2011, %v1222
      %v4306 = vmul.f32 %v2012, %v1222
      %v4307 = vadd.f32 %v4190, %v4301
      %v4308 = vadd.f32 %v4191, %v4302
      %v4309 = vadd.f32 %v4192, %v4303
      %v4310 = vadd.f32 %v4193, %v4304
      %v4311 = vadd.f32 %v4194, %v4305
      %v4312 = vadd.f32 %v4195, %v4306
      %v4313 = vmul.f32 %v2007, %v1258
      %v4314 = vmul.f32 %v2008, %v1258
      %v4315 = vmul.f32 %v2009, %v1258
      %v4316 = vmul.f32 %v2010, %v1258
      %v4317 = vmul.f32 %v2011, %v1258
      %v4318 = vmul.f32 %v2012, %v1258
      %v4319 = vadd.f32 %v4225, %v4313
      %v4320 = vadd.f32 %v4226, %v4314
      %v4321 = vadd.f32 %v4227, %v4315
      %v4322 = vadd.f32 %v4228, %v4316
      %v4323 = vadd.f32 %v4229, %v4317
      %v4324 = vadd.f32 %v4230, %v4318
      %v4325 = vmul.f32 %v2007, %v1320
      %v4326 = vmul.f32 %v2008, %v1320
      %v4327 = vmul.f32 %v2009, %v1320
      %v4328 = vmul.f32 %v2010, %v1320
      %v4329 = vmul.f32 %v2011, %v1320
      %v4330 = vmul.f32 %v2012, %v1320
      %v4337 = vrot.slane %v4325, 1
      %v4338 = vrot.slane %v4326, 1
      %v4339 = vsel %vm160, %v4337, %v4338
      %v4340 = vrot.slane %v4327, 1
      %v4341 = vsel %vm160, %v4338, %v4340
      %v4342 = vrot.slane %v4328, 1
      %v4343 = vsel %vm160, %v4340, %v4342
      %v4344 = vrot.slane %v4329, 1
      %v4345 = vsel %vm160, %v4342, %v4344
      %v4346 = vrot.slane %v4330, 1
      %v4347 = vsel %vm160, %v4344, %v4346
      %v4354 = vadd.f32 %v4307, %v4339
      %v4355 = vadd.f32 %v4308, %v4341
      %v4356 = vadd.f32 %v4309, %v4343
      %v4357 = vadd.f32 %v4310, %v4345
      %v4358 = vadd.f32 %v4311, %v4347
      %v4359 = vadd.f32 %v4312, %v4346
      %v4360 = vmul.f32 %v2007, %v1356
      %v4361 = vmul.f32 %v2008, %v1356
      %v4362 = vmul.f32 %v2009, %v1356
      %v4363 = vmul.f32 %v2010, %v1356
      %v4364 = vmul.f32 %v2011, %v1356
      %v4365 = vmul.f32 %v2012, %v1356
      %v4372 = vrot.slane %v4360, 1
      %v4373 = vrot.slane %v4361, 1
      %v4374 = vsel %vm160, %v4372, %v4373
      %v4375 = vrot.slane %v4362, 1
      %v4376 = vsel %vm160, %v4373, %v4375
      %v4377 = vrot.slane %v4363, 1
      %v4378 = vsel %vm160, %v4375, %v4377
      %v4379 = vrot.slane %v4364, 1
      %v4380 = vsel %vm160, %v4377, %v4379
      %v4381 = vrot.slane %v4365, 1
      %v4382 = vsel %vm160, %v4379, %v4381
      %v4389 = vadd.f32 %v4319, %v4374
      %v4390 = vadd.f32 %v4320, %v4376
      %v4391 = vadd.f32 %v4321, %v4378
      %v4392 = vadd.f32 %v4322, %v4380
      %v4393 = vadd.f32 %v4323, %v4382
      %v4394 = vadd.f32 %v4324, %v4381
      %v4395 = vmul.f32 %v2274, %v1738
      %v4396 = vmul.f32 %v2275, %v1738
      %v4397 = vmul.f32 %v2276, %v1738
      %v4398 = vmul.f32 %v2277, %v1738
      %v4399 = vmul.f32 %v2278, %v1738
      %v4400 = vmul.f32 %v2279, %v1738
      %v4401 = vadd.f32 %v4260, %v4395
      %v4402 = vadd.f32 %v4261, %v4396
      %v4403 = vadd.f32 %v4262, %v4397
      %v4404 = vadd.f32 %v4263, %v4398
      %v4405 = vadd.f32 %v4264, %v4399
      %v4406 = vadd.f32 %v4265, %v4400
      %v4407 = vmul.f32 %v2274, %v1751
      %v4408 = vmul.f32 %v2275, %v1751
      %v4409 = vmul.f32 %v2276, %v1751
      %v4410 = vmul.f32 %v2277, %v1751
      %v4411 = vmul.f32 %v2278, %v1751
      %v4412 = vmul.f32 %v2279, %v1751
      %v4413 = vadd.f32 %v4295, %v4407
      %v4414 = vadd.f32 %v4296, %v4408
      %v4415 = vadd.f32 %v4297, %v4409
      %v4416 = vadd.f32 %v4298, %v4410
      %v4417 = vadd.f32 %v4299, %v4411
      %v4418 = vadd.f32 %v4300, %v4412
      %v4419 = vmul.f32 %v2274, %v1764
      %v4420 = vmul.f32 %v2275, %v1764
      %v4421 = vmul.f32 %v2276, %v1764
      %v4422 = vmul.f32 %v2277, %v1764
      %v4423 = vmul.f32 %v2278, %v1764
      %v4424 = vmul.f32 %v2279, %v1764
      %v4431 = vrot.slane %v4419, 1
      %v4432 = vrot.slane %v4420, 1
      %v4433 = vsel %vm160, %v4431, %v4432
      %v4434 = vrot.slane %v4421, 1
      %v4435 = vsel %vm160, %v4432, %v4434
      %v4436 = vrot.slane %v4422, 1
      %v4437 = vsel %vm160, %v4434, %v4436
      %v4438 = vrot.slane %v4423, 1
      %v4439 = vsel %vm160, %v4436, %v4438
      %v4440 = vrot.slane %v4424, 1
      %v4441 = vsel %vm160, %v4438, %v4440
      %v4448 = vadd.f32 %v4401, %v4433
      %v4449 = vadd.f32 %v4402, %v4435
      %v4450 = vadd.f32 %v4403, %v4437
      %v4451 = vadd.f32 %v4404, %v4439
      %v4452 = vadd.f32 %v4405, %v4441
      %v4453 = vadd.f32 %v4406, %v4440
      %v4454 = vmul.f32 %v2274, %v1800
      %v4455 = vmul.f32 %v2275, %v1800
      %v4456 = vmul.f32 %v2276, %v1800
      %v4457 = vmul.f32 %v2277, %v1800
      %v4458 = vmul.f32 %v2278, %v1800
      %v4459 = vmul.f32 %v2279, %v1800
      %v4466 = vrot.slane %v4454, 1
      %v4467 = vrot.slane %v4455, 1
      %v4468 = vsel %vm160, %v4466, %v4467
      %v4469 = vrot.slane %v4456, 1
      %v4470 = vsel %vm160, %v4467, %v4469
      %v4471 = vrot.slane %v4457, 1
      %v4472 = vsel %vm160, %v4469, %v4471
      %v4473 = vrot.slane %v4458, 1
      %v4474 = vsel %vm160, %v4471, %v4473
      %v4475 = vrot.slane %v4459, 1
      %v4476 = vsel %vm160, %v4473, %v4475
      %v4483 = vadd.f32 %v4413, %v4468
      %v4484 = vadd.f32 %v4414, %v4470
      %v4485 = vadd.f32 %v4415, %v4472
      %v4486 = vadd.f32 %v4416, %v4474
      %v4487 = vadd.f32 %v4417, %v4476
      %v4488 = vadd.f32 %v4418, %v4475
      %v4489 = vmul.f32 %v2274, %v1836
      %v4490 = vmul.f32 %v2275, %v1836
      %v4491 = vmul.f32 %v2276, %v1836
      %v4492 = vmul.f32 %v2277, %v1836
      %v4493 = vmul.f32 %v2278, %v1836
      %v4494 = vmul.f32 %v2279, %v1836
      %v4495 = vadd.f32 %v4354, %v4489
      %v4496 = vadd.f32 %v4355, %v4490
      %v4497 = vadd.f32 %v4356, %v4491
      %v4498 = vadd.f32 %v4357, %v4492
      %v4499 = vadd.f32 %v4358, %v4493
      %v4500 = vadd.f32 %v4359, %v4494
      %v4501 = vmul.f32 %v2274, %v1849
      %v4502 = vmul.f32 %v2275, %v1849
      %v4503 = vmul.f32 %v2276, %v1849
      %v4504 = vmul.f32 %v2277, %v1849
      %v4505 = vmul.f32 %v2278, %v1849
      %v4506 = vmul.f32 %v2279, %v1849
      %v4507 = vadd.f32 %v4389, %v4501
      %v4508 = vadd.f32 %v4390, %v4502
      %v4509 = vadd.f32 %v4391, %v4503
      %v4510 = vadd.f32 %v4392, %v4504
      %v4511 = vadd.f32 %v4393, %v4505
      %v4512 = vadd.f32 %v4394, %v4506
      %v4513 = vmul.f32 %v2274, %v1862
      %v4514 = vmul.f32 %v2275, %v1862
      %v4515 = vmul.f32 %v2276, %v1862
      %v4516 = vmul.f32 %v2277, %v1862
      %v4517 = vmul.f32 %v2278, %v1862
      %v4518 = vmul.f32 %v2279, %v1862
      %v4525 = vrot.slane %v4513, 2
      %v4526 = vrot.slane %v4514, 2
      %v4527 = vsel %vm247, %v4525, %v4526
      %v4528 = vrot.slane %v4515, 2
      %v4529 = vsel %vm247, %v4526, %v4528
      %v4530 = vrot.slane %v4516, 2
      %v4531 = vsel %vm247, %v4528, %v4530
      %v4532 = vrot.slane %v4517, 2
      %v4533 = vsel %vm247, %v4530, %v4532
      %v4534 = vrot.slane %v4518, 2
      %v4535 = vsel %vm247, %v4532, %v4534
      %v4542 = vadd.f32 %v4448, %v4527
      %v4543 = vadd.f32 %v4449, %v4529
      %v4544 = vadd.f32 %v4450, %v4531
      %v4545 = vadd.f32 %v4451, %v4533
      %v4546 = vadd.f32 %v4452, %v4535
      %v4547 = vadd.f32 %v4453, %v4534
      %v4548 = vmul.f32 %v2274, %v1898
      %v4549 = vmul.f32 %v2275, %v1898
      %v4550 = vmul.f32 %v2276, %v1898
      %v4551 = vmul.f32 %v2277, %v1898
      %v4552 = vmul.f32 %v2278, %v1898
      %v4553 = vmul.f32 %v2279, %v1898
      %v4560 = vrot.slane %v4548, 2
      %v4561 = vrot.slane %v4549, 2
      %v4562 = vsel %vm247, %v4560, %v4561
      %v4563 = vrot.slane %v4550, 2
      %v4564 = vsel %vm247, %v4561, %v4563
      %v4565 = vrot.slane %v4551, 2
      %v4566 = vsel %vm247, %v4563, %v4565
      %v4567 = vrot.slane %v4552, 2
      %v4568 = vsel %vm247, %v4565, %v4567
      %v4569 = vrot.slane %v4553, 2
      %v4570 = vsel %vm247, %v4567, %v4569
      %v4577 = vadd.f32 %v4483, %v4562
      %v4578 = vadd.f32 %v4484, %v4564
      %v4579 = vadd.f32 %v4485, %v4566
      %v4580 = vadd.f32 %v4486, %v4568
      %v4581 = vadd.f32 %v4487, %v4570
      %v4582 = vadd.f32 %v4488, %v4569
      %v4583 = vmul.f32 %v2274, %v1934
      %v4584 = vmul.f32 %v2275, %v1934
      %v4585 = vmul.f32 %v2276, %v1934
      %v4586 = vmul.f32 %v2277, %v1934
      %v4587 = vmul.f32 %v2278, %v1934
      %v4588 = vmul.f32 %v2279, %v1934
      %v4595 = vrot.slane %v4583, 1
      %v4596 = vrot.slane %v4584, 1
      %v4597 = vsel %vm160, %v4595, %v4596
      %v4598 = vrot.slane %v4585, 1
      %v4599 = vsel %vm160, %v4596, %v4598
      %v4600 = vrot.slane %v4586, 1
      %v4601 = vsel %vm160, %v4598, %v4600
      %v4602 = vrot.slane %v4587, 1
      %v4603 = vsel %vm160, %v4600, %v4602
      %v4604 = vrot.slane %v4588, 1
      %v4605 = vsel %vm160, %v4602, %v4604
      %v4612 = vadd.f32 %v4495, %v4597
      %v4613 = vadd.f32 %v4496, %v4599
      %v4614 = vadd.f32 %v4497, %v4601
      %v4615 = vadd.f32 %v4498, %v4603
      %v4616 = vadd.f32 %v4499, %v4605
      %v4617 = vadd.f32 %v4500, %v4604
      %v4618 = vmul.f32 %v2274, %v1970
      %v4619 = vmul.f32 %v2275, %v1970
      %v4620 = vmul.f32 %v2276, %v1970
      %v4621 = vmul.f32 %v2277, %v1970
      %v4622 = vmul.f32 %v2278, %v1970
      %v4623 = vmul.f32 %v2279, %v1970
      %v4630 = vrot.slane %v4618, 1
      %v4631 = vrot.slane %v4619, 1
      %v4632 = vsel %vm160, %v4630, %v4631
      %v4633 = vrot.slane %v4620, 1
      %v4634 = vsel %vm160, %v4631, %v4633
      %v4635 = vrot.slane %v4621, 1
      %v4636 = vsel %vm160, %v4633, %v4635
      %v4637 = vrot.slane %v4622, 1
      %v4638 = vsel %vm160, %v4635, %v4637
      %v4639 = vrot.slane %v4623, 1
      %v4640 = vsel %vm160, %v4637, %v4639
      %v4647 = vadd.f32 %v4507, %v4632
      %v4648 = vadd.f32 %v4508, %v4634
      %v4649 = vadd.f32 %v4509, %v4636
      %v4650 = vadd.f32 %v4510, %v4638
      %v4651 = vadd.f32 %v4511, %v4640
      %v4652 = vadd.f32 %v4512, %v4639
      %v4653 = vmul.f32 %v2549, %v1836
      %v4654 = vmul.f32 %v2550, %v1836
      %v4655 = vmul.f32 %v2551, %v1836
      %v4656 = vmul.f32 %v2552, %v1836
      %v4657 = vmul.f32 %v2553, %v1836
      %v4658 = vmul.f32 %v2554, %v1836
      %v4659 = vadd.f32 %v4542, %v4653
      %v4660 = vadd.f32 %v4543, %v4654
      %v4661 = vadd.f32 %v4544, %v4655
      %v4662 = vadd.f32 %v4545, %v4656
      %v4663 = vadd.f32 %v4546, %v4657
      %v4664 = vadd.f32 %v4547, %v4658
      %v4665 = vmul.f32 %v2549, %v1849
      %v4666 = vmul.f32 %v2550, %v1849
      %v4667 = vmul.f32 %v2551, %v1849
      %v4668 = vmul.f32 %v2552, %v1849
      %v4669 = vmul.f32 %v2553, %v1849
      %v4670 = vmul.f32 %v2554, %v1849
      %v4671 = vadd.f32 %v4577, %v4665
      %v4672 = vadd.f32 %v4578, %v4666
      %v4673 = vadd.f32 %v4579, %v4667
      %v4674 = vadd.f32 %v4580, %v4668
      %v4675 = vadd.f32 %v4581, %v4669
      %v4676 = vadd.f32 %v4582, %v4670
      %v4677 = vmul.f32 %v2549, %v1738
      %v4678 = vmul.f32 %v2550, %v1738
      %v4679 = vmul.f32 %v2551, %v1738
      %v4680 = vmul.f32 %v2552, %v1738
      %v4681 = vmul.f32 %v2553, %v1738
      %v4682 = vmul.f32 %v2554, %v1738
      %v4689 = vrot.slane %v4677, 7
      %v4690 = vrot.slane %v4678, 7
      %v4691 = vsel %vm422, %v4689, %v4690
      %v4692 = vrot.slane %v4679, 7
      %v4693 = vsel %vm422, %v4690, %v4692
      %v4694 = vrot.slane %v4680, 7
      %v4695 = vsel %vm422, %v4692, %v4694
      %v4696 = vrot.slane %v4681, 7
      %v4697 = vsel %vm422, %v4694, %v4696
      %v4698 = vrot.slane %v4682, 7
      %v4699 = vsel %vm422, %v4696, %v4698
      %v4706 = vadd.f32 %v4612, %v4689
      %v4707 = vadd.f32 %v4613, %v4691
      %v4708 = vadd.f32 %v4614, %v4693
      %v4709 = vadd.f32 %v4615, %v4695
      %v4710 = vadd.f32 %v4616, %v4697
      %v4711 = vadd.f32 %v4617, %v4699
      %v4712 = vmul.f32 %v2549, %v1751
      %v4713 = vmul.f32 %v2550, %v1751
      %v4714 = vmul.f32 %v2551, %v1751
      %v4715 = vmul.f32 %v2552, %v1751
      %v4716 = vmul.f32 %v2553, %v1751
      %v4717 = vmul.f32 %v2554, %v1751
      %v4724 = vrot.slane %v4712, 7
      %v4725 = vrot.slane %v4713, 7
      %v4726 = vsel %vm422, %v4724, %v4725
      %v4727 = vrot.slane %v4714, 7
      %v4728 = vsel %vm422, %v4725, %v4727
      %v4729 = vrot.slane %v4715, 7
      %v4730 = vsel %vm422, %v4727, %v4729
      %v4731 = vrot.slane %v4716, 7
      %v4732 = vsel %vm422, %v4729, %v4731
      %v4733 = vrot.slane %v4717, 7
      %v4734 = vsel %vm422, %v4731, %v4733
      %v4741 = vadd.f32 %v4647, %v4724
      %v4742 = vadd.f32 %v4648, %v4726
      %v4743 = vadd.f32 %v4649, %v4728
      %v4744 = vadd.f32 %v4650, %v4730
      %v4745 = vadd.f32 %v4651, %v4732
      %v4746 = vadd.f32 %v4652, %v4734
      %v4747 = vmul.f32 %v2549, %v1934
      %v4748 = vmul.f32 %v2550, %v1934
      %v4749 = vmul.f32 %v2551, %v1934
      %v4750 = vmul.f32 %v2552, %v1934
      %v4751 = vmul.f32 %v2553, %v1934
      %v4752 = vmul.f32 %v2554, %v1934
      %v4759 = vrot.slane %v4747, 1
      %v4760 = vrot.slane %v4748, 1
      %v4761 = vsel %vm160, %v4759, %v4760
      %v4762 = vrot.slane %v4749, 1
      %v4763 = vsel %vm160, %v4760, %v4762
      %v4764 = vrot.slane %v4750, 1
      %v4765 = vsel %vm160, %v4762, %v4764
      %v4766 = vrot.slane %v4751, 1
      %v4767 = vsel %vm160, %v4764, %v4766
      %v4768 = vrot.slane %v4752, 1
      %v4769 = vsel %vm160, %v4766, %v4768
      %v4776 = vadd.f32 %v4659, %v4761
      %v4777 = vadd.f32 %v4660, %v4763
      %v4778 = vadd.f32 %v4661, %v4765
      %v4779 = vadd.f32 %v4662, %v4767
      %v4780 = vadd.f32 %v4663, %v4769
      %v4781 = vadd.f32 %v4664, %v4768
      %v4782 = vmul.f32 %v2549, %v1970
      %v4783 = vmul.f32 %v2550, %v1970
      %v4784 = vmul.f32 %v2551, %v1970
      %v4785 = vmul.f32 %v2552, %v1970
      %v4786 = vmul.f32 %v2553, %v1970
      %v4787 = vmul.f32 %v2554, %v1970
      %v4794 = vrot.slane %v4782, 1
      %v4795 = vrot.slane %v4783, 1
      %v4796 = vsel %vm160, %v4794, %v4795
      %v4797 = vrot.slane %v4784, 1
      %v4798 = vsel %vm160, %v4795, %v4797
      %v4799 = vrot.slane %v4785, 1
      %v4800 = vsel %vm160, %v4797, %v4799
      %v4801 = vrot.slane %v4786, 1
      %v4802 = vsel %vm160, %v4799, %v4801
      %v4803 = vrot.slane %v4787, 1
      %v4804 = vsel %vm160, %v4801, %v4803
      %v4811 = vadd.f32 %v4671, %v4796
      %v4812 = vadd.f32 %v4672, %v4798
      %v4813 = vadd.f32 %v4673, %v4800
      %v4814 = vadd.f32 %v4674, %v4802
      %v4815 = vadd.f32 %v4675, %v4804
      %v4816 = vadd.f32 %v4676, %v4803
      %v4817 = vmul.f32 %v2549, %v1764
      %v4818 = vmul.f32 %v2550, %v1764
      %v4819 = vmul.f32 %v2551, %v1764
      %v4820 = vmul.f32 %v2552, %v1764
      %v4821 = vmul.f32 %v2553, %v1764
      %v4822 = vmul.f32 %v2554, %v1764
      %v4823 = vadd.f32 %v4706, %v4817
      %v4824 = vadd.f32 %v4707, %v4818
      %v4825 = vadd.f32 %v4708, %v4819
      %v4826 = vadd.f32 %v4709, %v4820
      %v4827 = vadd.f32 %v4710, %v4821
      %v4828 = vadd.f32 %v4711, %v4822
      %v4829 = vmul.f32 %v2549, %v1800
      %v4830 = vmul.f32 %v2550, %v1800
      %v4831 = vmul.f32 %v2551, %v1800
      %v4832 = vmul.f32 %v2552, %v1800
      %v4833 = vmul.f32 %v2553, %v1800
      %v4834 = vmul.f32 %v2554, %v1800
      %v4835 = vadd.f32 %v4741, %v4829
      %v4836 = vadd.f32 %v4742, %v4830
      %v4837 = vadd.f32 %v4743, %v4831
      %v4838 = vadd.f32 %v4744, %v4832
      %v4839 = vadd.f32 %v4745, %v4833
      %v4840 = vadd.f32 %v4746, %v4834
      %v4841 = vmul.f32 %v2549, %v1862
      %v4842 = vmul.f32 %v2550, %v1862
      %v4843 = vmul.f32 %v2551, %v1862
      %v4844 = vmul.f32 %v2552, %v1862
      %v4845 = vmul.f32 %v2553, %v1862
      %v4846 = vmul.f32 %v2554, %v1862
      %v4853 = vrot.slane %v4841, 1
      %v4854 = vrot.slane %v4842, 1
      %v4855 = vsel %vm160, %v4853, %v4854
      %v4856 = vrot.slane %v4843, 1
      %v4857 = vsel %vm160, %v4854, %v4856
      %v4858 = vrot.slane %v4844, 1
      %v4859 = vsel %vm160, %v4856, %v4858
      %v4860 = vrot.slane %v4845, 1
      %v4861 = vsel %vm160, %v4858, %v4860
      %v4862 = vrot.slane %v4846, 1
      %v4863 = vsel %vm160, %v4860, %v4862
      %v4870 = vadd.f32 %v4823, %v4855
      %v4871 = vadd.f32 %v4824, %v4857
      %v4872 = vadd.f32 %v4825, %v4859
      %v4873 = vadd.f32 %v4826, %v4861
      %v4874 = vadd.f32 %v4827, %v4863
      %v4875 = vadd.f32 %v4828, %v4862
      %v4876 = vmul.f32 %v2549, %v1898
      %v4877 = vmul.f32 %v2550, %v1898
      %v4878 = vmul.f32 %v2551, %v1898
      %v4879 = vmul.f32 %v2552, %v1898
      %v4880 = vmul.f32 %v2553, %v1898
      %v4881 = vmul.f32 %v2554, %v1898
      %v4888 = vrot.slane %v4876, 1
      %v4889 = vrot.slane %v4877, 1
      %v4890 = vsel %vm160, %v4888, %v4889
      %v4891 = vrot.slane %v4878, 1
      %v4892 = vsel %vm160, %v4889, %v4891
      %v4893 = vrot.slane %v4879, 1
      %v4894 = vsel %vm160, %v4891, %v4893
      %v4895 = vrot.slane %v4880, 1
      %v4896 = vsel %vm160, %v4893, %v4895
      %v4897 = vrot.slane %v4881, 1
      %v4898 = vsel %vm160, %v4895, %v4897
      %v4905 = vadd.f32 %v4835, %v4890
      %v4906 = vadd.f32 %v4836, %v4892
      %v4907 = vadd.f32 %v4837, %v4894
      %v4908 = vadd.f32 %v4838, %v4896
      %v4909 = vadd.f32 %v4839, %v4898
      %v4910 = vadd.f32 %v4840, %v4897
      %s4911 = sadd.s32 %s124, 5
      %s4912 = smul.u32 %s4911, 48
      %s4913 = scalar_lea.vmem [#allocation7], %s4912
      %v4914 = vld [vmem:[%s4913] sm:$0xff]
      %v4915 = vld [vmem:[%s4913 + $0x8] sm:$0xff]
      %v4916 = vld [vmem:[%s4913 + $0x10] sm:$0xff]
      %v4917 = vld [vmem:[%s4913 + $0x18] sm:$0xff]
      %v4918 = vld [vmem:[%s4913 + $0x20] sm:$0xff]
      %v4919 = vld [vmem:[%s4913 + $0x28] sm:$0x1f]
      %v4920 = vmul.f32 %v4914, %v2280
      %v4921 = vmul.f32 %v4915, %v2280
      %v4922 = vmul.f32 %v4916, %v2280
      %v4923 = vmul.f32 %v4917, %v2280
      %v4924 = vmul.f32 %v4918, %v2280
      %v4925 = vmul.f32 %v4919, %v2280
      %v4926 = vadd.f32 %v4776, %v4920
      %v4927 = vadd.f32 %v4777, %v4921
      %v4928 = vadd.f32 %v4778, %v4922
      %v4929 = vadd.f32 %v4779, %v4923
      %v4930 = vadd.f32 %v4780, %v4924
      %v4931 = vadd.f32 %v4781, %v4925
      %v4932 = vmul.f32 %v4914, %v2293
      %v4933 = vmul.f32 %v4915, %v2293
      %v4934 = vmul.f32 %v4916, %v2293
      %v4935 = vmul.f32 %v4917, %v2293
      %v4936 = vmul.f32 %v4918, %v2293
      %v4937 = vmul.f32 %v4919, %v2293
      %v4938 = vadd.f32 %v4811, %v4932
      %v4939 = vadd.f32 %v4812, %v4933
      %v4940 = vadd.f32 %v4813, %v4934
      %v4941 = vadd.f32 %v4814, %v4935
      %v4942 = vadd.f32 %v4815, %v4936
      %v4943 = vadd.f32 %v4816, %v4937
      %v4944 = vmul.f32 %v4914, %v2306
      %v4945 = vmul.f32 %v4915, %v2306
      %v4946 = vmul.f32 %v4916, %v2306
      %v4947 = vmul.f32 %v4917, %v2306
      %v4948 = vmul.f32 %v4918, %v2306
      %v4949 = vmul.f32 %v4919, %v2306
      %v4956 = vrot.slane %v4944, 1
      %v4957 = vrot.slane %v4945, 1
      %v4958 = vsel %vm160, %v4956, %v4957
      %v4959 = vrot.slane %v4946, 1
      %v4960 = vsel %vm160, %v4957, %v4959
      %v4961 = vrot.slane %v4947, 1
      %v4962 = vsel %vm160, %v4959, %v4961
      %v4963 = vrot.slane %v4948, 1
      %v4964 = vsel %vm160, %v4961, %v4963
      %v4965 = vrot.slane %v4949, 1
      %v4966 = vsel %vm160, %v4963, %v4965
      %v4973 = vadd.f32 %v4926, %v4958
      %v4974 = vadd.f32 %v4927, %v4960
      %v4975 = vadd.f32 %v4928, %v4962
      %v4976 = vadd.f32 %v4929, %v4964
      %v4977 = vadd.f32 %v4930, %v4966
      %v4978 = vadd.f32 %v4931, %v4965
      %v4979 = vmul.f32 %v4914, %v2342
      %v4980 = vmul.f32 %v4915, %v2342
      %v4981 = vmul.f32 %v4916, %v2342
      %v4982 = vmul.f32 %v4917, %v2342
      %v4983 = vmul.f32 %v4918, %v2342
      %v4984 = vmul.f32 %v4919, %v2342
      %v4991 = vrot.slane %v4979, 1
      %v4992 = vrot.slane %v4980, 1
      %v4993 = vsel %vm160, %v4991, %v4992
      %v4994 = vrot.slane %v4981, 1
      %v4995 = vsel %vm160, %v4992, %v4994
      %v4996 = vrot.slane %v4982, 1
      %v4997 = vsel %vm160, %v4994, %v4996
      %v4998 = vrot.slane %v4983, 1
      %v4999 = vsel %vm160, %v4996, %v4998
      %v5000 = vrot.slane %v4984, 1
      %v5001 = vsel %vm160, %v4998, %v5000
      %v5008 = vadd.f32 %v4938, %v4993
      %v5009 = vadd.f32 %v4939, %v4995
      %v5010 = vadd.f32 %v4940, %v4997
      %v5011 = vadd.f32 %v4941, %v4999
      %v5012 = vadd.f32 %v4942, %v5001
      %v5013 = vadd.f32 %v4943, %v5000
      %v5014 = vmul.f32 %v4914, %v2378
      %v5015 = vmul.f32 %v4915, %v2378
      %v5016 = vmul.f32 %v4916, %v2378
      %v5017 = vmul.f32 %v4917, %v2378
      %v5018 = vmul.f32 %v4918, %v2378
      %v5019 = vmul.f32 %v4919, %v2378
      %v5020 = vadd.f32 %v4870, %v5014
      %v5021 = vadd.f32 %v4871, %v5015
      %v5022 = vadd.f32 %v4872, %v5016
      %v5023 = vadd.f32 %v4873, %v5017
      %v5024 = vadd.f32 %v4874, %v5018
      %v5025 = vadd.f32 %v4875, %v5019
      %v5026 = vmul.f32 %v4914, %v2391
      %v5027 = vmul.f32 %v4915, %v2391
      %v5028 = vmul.f32 %v4916, %v2391
      %v5029 = vmul.f32 %v4917, %v2391
      %v5030 = vmul.f32 %v4918, %v2391
      %v5031 = vmul.f32 %v4919, %v2391
      %v5032 = vadd.f32 %v4905, %v5026
      %v5033 = vadd.f32 %v4906, %v5027
      %v5034 = vadd.f32 %v4907, %v5028
      %v5035 = vadd.f32 %v4908, %v5029
      %v5036 = vadd.f32 %v4909, %v5030
      %v5037 = vadd.f32 %v4910, %v5031
      %v5038 = vmul.f32 %v4914, %v2404
      %v5039 = vmul.f32 %v4915, %v2404
      %v5040 = vmul.f32 %v4916, %v2404
      %v5041 = vmul.f32 %v4917, %v2404
      %v5042 = vmul.f32 %v4918, %v2404
      %v5043 = vmul.f32 %v4919, %v2404
      %v5050 = vrot.slane %v5038, 2
      %v5051 = vrot.slane %v5039, 2
      %v5052 = vsel %vm247, %v5050, %v5051
      %v5053 = vrot.slane %v5040, 2
      %v5054 = vsel %vm247, %v5051, %v5053
      %v5055 = vrot.slane %v5041, 2
      %v5056 = vsel %vm247, %v5053, %v5055
      %v5057 = vrot.slane %v5042, 2
      %v5058 = vsel %vm247, %v5055, %v5057
      %v5059 = vrot.slane %v5043, 2
      %v5060 = vsel %vm247, %v5057, %v5059
      %v5067 = vadd.f32 %v4973, %v5052
      %v5068 = vadd.f32 %v4974, %v5054
      %v5069 = vadd.f32 %v4975, %v5056
      %v5070 = vadd.f32 %v4976, %v5058
      %v5071 = vadd.f32 %v4977, %v5060
      %v5072 = vadd.f32 %v4978, %v5059
      %v5073 = vmul.f32 %v4914, %v2440
      %v5074 = vmul.f32 %v4915, %v2440
      %v5075 = vmul.f32 %v4916, %v2440
      %v5076 = vmul.f32 %v4917, %v2440
      %v5077 = vmul.f32 %v4918, %v2440
      %v5078 = vmul.f32 %v4919, %v2440
      %v5085 = vrot.slane %v5073, 2
      %v5086 = vrot.slane %v5074, 2
      %v5087 = vsel %vm247, %v5085, %v5086
      %v5088 = vrot.slane %v5075, 2
      %v5089 = vsel %vm247, %v5086, %v5088
      %v5090 = vrot.slane %v5076, 2
      %v5091 = vsel %vm247, %v5088, %v5090
      %v5092 = vrot.slane %v5077, 2
      %v5093 = vsel %vm247, %v5090, %v5092
      %v5094 = vrot.slane %v5078, 2
      %v5095 = vsel %vm247, %v5092, %v5094
      %v5102 = vadd.f32 %v5008, %v5087
      %v5103 = vadd.f32 %v5009, %v5089
      %v5104 = vadd.f32 %v5010, %v5091
      %v5105 = vadd.f32 %v5011, %v5093
      %v5106 = vadd.f32 %v5012, %v5095
      %v5107 = vadd.f32 %v5013, %v5094
      %v5108 = vmul.f32 %v4914, %v2476
      %v5109 = vmul.f32 %v4915, %v2476
      %v5110 = vmul.f32 %v4916, %v2476
      %v5111 = vmul.f32 %v4917, %v2476
      %v5112 = vmul.f32 %v4918, %v2476
      %v5113 = vmul.f32 %v4919, %v2476
      %v5120 = vrot.slane %v5108, 1
      %v5121 = vrot.slane %v5109, 1
      %v5122 = vsel %vm160, %v5120, %v5121
      %v5123 = vrot.slane %v5110, 1
      %v5124 = vsel %vm160, %v5121, %v5123
      %v5125 = vrot.slane %v5111, 1
      %v5126 = vsel %vm160, %v5123, %v5125
      %v5127 = vrot.slane %v5112, 1
      %v5128 = vsel %vm160, %v5125, %v5127
      %v5129 = vrot.slane %v5113, 1
      %v5130 = vsel %vm160, %v5127, %v5129
      %v5137 = vadd.f32 %v5020, %v5122
      %v5138 = vadd.f32 %v5021, %v5124
      %v5139 = vadd.f32 %v5022, %v5126
      %v5140 = vadd.f32 %v5023, %v5128
      %v5141 = vadd.f32 %v5024, %v5130
      %v5142 = vadd.f32 %v5025, %v5129
      %v5143 = vmul.f32 %v4914, %v2512
      %v5144 = vmul.f32 %v4915, %v2512
      %v5145 = vmul.f32 %v4916, %v2512
      %v5146 = vmul.f32 %v4917, %v2512
      %v5147 = vmul.f32 %v4918, %v2512
      %v5148 = vmul.f32 %v4919, %v2512
      %v5155 = vrot.slane %v5143, 1
      %v5156 = vrot.slane %v5144, 1
      %v5157 = vsel %vm160, %v5155, %v5156
      %v5158 = vrot.slane %v5145, 1
      %v5159 = vsel %vm160, %v5156, %v5158
      %v5160 = vrot.slane %v5146, 1
      %v5161 = vsel %vm160, %v5158, %v5160
      %v5162 = vrot.slane %v5147, 1
      %v5163 = vsel %vm160, %v5160, %v5162
      %v5164 = vrot.slane %v5148, 1
      %v5165 = vsel %vm160, %v5162, %v5164
      %v5172 = vadd.f32 %v5032, %v5157
      %v5173 = vadd.f32 %v5033, %v5159
      %v5174 = vadd.f32 %v5034, %v5161
      %v5175 = vadd.f32 %v5035, %v5163
      %v5176 = vadd.f32 %v5036, %v5165
      %v5177 = vadd.f32 %v5037, %v5164
      %s5178 = scalar_lea.vmem [#allocation8], %s4912
      %v5179 = vld [vmem:[%s5178] sm:$0xff]
      %v5180 = vld [vmem:[%s5178 + $0x8] sm:$0xff]
      %v5181 = vld [vmem:[%s5178 + $0x10] sm:$0xff]
      %v5182 = vld [vmem:[%s5178 + $0x18] sm:$0xff]
      %v5183 = vld [vmem:[%s5178 + $0x20] sm:$0xff]
      %v5184 = vld [vmem:[%s5178 + $0x28] sm:$0x1f]
      %v5185 = vmul.f32 %v5179, %v2378
      %v5186 = vmul.f32 %v5180, %v2378
      %v5187 = vmul.f32 %v5181, %v2378
      %v5188 = vmul.f32 %v5182, %v2378
      %v5189 = vmul.f32 %v5183, %v2378
      %v5190 = vmul.f32 %v5184, %v2378
      %v5191 = vadd.f32 %v5067, %v5185
      %v5192 = vadd.f32 %v5068, %v5186
      %v5193 = vadd.f32 %v5069, %v5187
      %v5194 = vadd.f32 %v5070, %v5188
      %v5195 = vadd.f32 %v5071, %v5189
      %v5196 = vadd.f32 %v5072, %v5190
      %v5197 = vmul.f32 %v5179, %v2391
      %v5198 = vmul.f32 %v5180, %v2391
      %v5199 = vmul.f32 %v5181, %v2391
      %v5200 = vmul.f32 %v5182, %v2391
      %v5201 = vmul.f32 %v5183, %v2391
      %v5202 = vmul.f32 %v5184, %v2391
      %v5203 = vadd.f32 %v5102, %v5197
      %v5204 = vadd.f32 %v5103, %v5198
      %v5205 = vadd.f32 %v5104, %v5199
      %v5206 = vadd.f32 %v5105, %v5200
      %v5207 = vadd.f32 %v5106, %v5201
      %v5208 = vadd.f32 %v5107, %v5202
      %v5209 = vmul.f32 %v5179, %v2280
      %v5210 = vmul.f32 %v5180, %v2280
      %v5211 = vmul.f32 %v5181, %v2280
      %v5212 = vmul.f32 %v5182, %v2280
      %v5213 = vmul.f32 %v5183, %v2280
      %v5214 = vmul.f32 %v5184, %v2280
      %v5221 = vrot.slane %v5209, 7
      %v5222 = vrot.slane %v5210, 7
      %v5223 = vsel %vm422, %v5221, %v5222
      %v5224 = vrot.slane %v5211, 7
      %v5225 = vsel %vm422, %v5222, %v5224
      %v5226 = vrot.slane %v5212, 7
      %v5227 = vsel %vm422, %v5224, %v5226
      %v5228 = vrot.slane %v5213, 7
      %v5229 = vsel %vm422, %v5226, %v5228
      %v5230 = vrot.slane %v5214, 7
      %v5231 = vsel %vm422, %v5228, %v5230
      %v5238 = vadd.f32 %v5137, %v5221
      %v5239 = vadd.f32 %v5138, %v5223
      %v5240 = vadd.f32 %v5139, %v5225
      %v5241 = vadd.f32 %v5140, %v5227
      %v5242 = vadd.f32 %v5141, %v5229
      %v5243 = vadd.f32 %v5142, %v5231
      %v5244 = vmul.f32 %v5179, %v2293
      %v5245 = vmul.f32 %v5180, %v2293
      %v5246 = vmul.f32 %v5181, %v2293
      %v5247 = vmul.f32 %v5182, %v2293
      %v5248 = vmul.f32 %v5183, %v2293
      %v5249 = vmul.f32 %v5184, %v2293
      %v5256 = vrot.slane %v5244, 7
      %v5257 = vrot.slane %v5245, 7
      %v5258 = vsel %vm422, %v5256, %v5257
      %v5259 = vrot.slane %v5246, 7
      %v5260 = vsel %vm422, %v5257, %v5259
      %v5261 = vrot.slane %v5247, 7
      %v5262 = vsel %vm422, %v5259, %v5261
      %v5263 = vrot.slane %v5248, 7
      %v5264 = vsel %vm422, %v5261, %v5263
      %v5265 = vrot.slane %v5249, 7
      %v5266 = vsel %vm422, %v5263, %v5265
      %v5273 = vadd.f32 %v5172, %v5256
      %v5274 = vadd.f32 %v5173, %v5258
      %v5275 = vadd.f32 %v5174, %v5260
      %v5276 = vadd.f32 %v5175, %v5262
      %v5277 = vadd.f32 %v5176, %v5264
      %v5278 = vadd.f32 %v5177, %v5266
      %v5279 = vmul.f32 %v5179, %v2476
      %v5280 = vmul.f32 %v5180, %v2476
      %v5281 = vmul.f32 %v5181, %v2476
      %v5282 = vmul.f32 %v5182, %v2476
      %v5283 = vmul.f32 %v5183, %v2476
      %v5284 = vmul.f32 %v5184, %v2476
      %v5291 = vrot.slane %v5279, 1
      %v5292 = vrot.slane %v5280, 1
      %v5293 = vsel %vm160, %v5291, %v5292
      %v5294 = vrot.slane %v5281, 1
      %v5295 = vsel %vm160, %v5292, %v5294
      %v5296 = vrot.slane %v5282, 1
      %v5297 = vsel %vm160, %v5294, %v5296
      %v5298 = vrot.slane %v5283, 1
      %v5299 = vsel %vm160, %v5296, %v5298
      %v5300 = vrot.slane %v5284, 1
      %v5301 = vsel %vm160, %v5298, %v5300
      %v5308 = vadd.f32 %v5191, %v5293
      %v5309 = vadd.f32 %v5192, %v5295
      %v5310 = vadd.f32 %v5193, %v5297
      %v5311 = vadd.f32 %v5194, %v5299
      %v5312 = vadd.f32 %v5195, %v5301
      %v5313 = vadd.f32 %v5196, %v5300
      %v5314 = vmul.f32 %v5179, %v2512
      %v5315 = vmul.f32 %v5180, %v2512
      %v5316 = vmul.f32 %v5181, %v2512
      %v5317 = vmul.f32 %v5182, %v2512
      %v5318 = vmul.f32 %v5183, %v2512
      %v5319 = vmul.f32 %v5184, %v2512
      %v5326 = vrot.slane %v5314, 1
      %v5327 = vrot.slane %v5315, 1
      %v5328 = vsel %vm160, %v5326, %v5327
      %v5329 = vrot.slane %v5316, 1
      %v5330 = vsel %vm160, %v5327, %v5329
      %v5331 = vrot.slane %v5317, 1
      %v5332 = vsel %vm160, %v5329, %v5331
      %v5333 = vrot.slane %v5318, 1
      %v5334 = vsel %vm160, %v5331, %v5333
      %v5335 = vrot.slane %v5319, 1
      %v5336 = vsel %vm160, %v5333, %v5335
      %v5343 = vadd.f32 %v5203, %v5328
      %v5344 = vadd.f32 %v5204, %v5330
      %v5345 = vadd.f32 %v5205, %v5332
      %v5346 = vadd.f32 %v5206, %v5334
      %v5347 = vadd.f32 %v5207, %v5336
      %v5348 = vadd.f32 %v5208, %v5335
      %v5349 = vmul.f32 %v5179, %v2306
      %v5350 = vmul.f32 %v5180, %v2306
      %v5351 = vmul.f32 %v5181, %v2306
      %v5352 = vmul.f32 %v5182, %v2306
      %v5353 = vmul.f32 %v5183, %v2306
      %v5354 = vmul.f32 %v5184, %v2306
      %v5355 = vadd.f32 %v5238, %v5349
      %v5356 = vadd.f32 %v5239, %v5350
      %v5357 = vadd.f32 %v5240, %v5351
      %v5358 = vadd.f32 %v5241, %v5352
      %v5359 = vadd.f32 %v5242, %v5353
      %v5360 = vadd.f32 %v5243, %v5354
      %v5361 = vmul.f32 %v5179, %v2342
      %v5362 = vmul.f32 %v5180, %v2342
      %v5363 = vmul.f32 %v5181, %v2342
      %v5364 = vmul.f32 %v5182, %v2342
      %v5365 = vmul.f32 %v5183, %v2342
      %v5366 = vmul.f32 %v5184, %v2342
      %v5367 = vadd.f32 %v5273, %v5361
      %v5368 = vadd.f32 %v5274, %v5362
      %v5369 = vadd.f32 %v5275, %v5363
      %v5370 = vadd.f32 %v5276, %v5364
      %v5371 = vadd.f32 %v5277, %v5365
      %v5372 = vadd.f32 %v5278, %v5366
      %v5373 = vmul.f32 %v5179, %v2404
      %v5374 = vmul.f32 %v5180, %v2404
      %v5375 = vmul.f32 %v5181, %v2404
      %v5376 = vmul.f32 %v5182, %v2404
      %v5377 = vmul.f32 %v5183, %v2404
      %v5378 = vmul.f32 %v5184, %v2404
      %v5385 = vrot.slane %v5373, 1
      %v5386 = vrot.slane %v5374, 1
      %v5387 = vsel %vm160, %v5385, %v5386
      %v5388 = vrot.slane %v5375, 1
      %v5389 = vsel %vm160, %v5386, %v5388
      %v5390 = vrot.slane %v5376, 1
      %v5391 = vsel %vm160, %v5388, %v5390
      %v5392 = vrot.slane %v5377, 1
      %v5393 = vsel %vm160, %v5390, %v5392
      %v5394 = vrot.slane %v5378, 1
      %v5395 = vsel %vm160, %v5392, %v5394
      %v5402 = vadd.f32 %v5355, %v5387
      %v5403 = vadd.f32 %v5356, %v5389
      %v5404 = vadd.f32 %v5357, %v5391
      %v5405 = vadd.f32 %v5358, %v5393
      %v5406 = vadd.f32 %v5359, %v5395
      %v5407 = vadd.f32 %v5360, %v5394
      %v5408 = vmul.f32 %v5179, %v2440
      %v5409 = vmul.f32 %v5180, %v2440
      %v5410 = vmul.f32 %v5181, %v2440
      %v5411 = vmul.f32 %v5182, %v2440
      %v5412 = vmul.f32 %v5183, %v2440
      %v5413 = vmul.f32 %v5184, %v2440
      %v5420 = vrot.slane %v5408, 1
      %v5421 = vrot.slane %v5409, 1
      %v5422 = vsel %vm160, %v5420, %v5421
      %v5423 = vrot.slane %v5410, 1
      %v5424 = vsel %vm160, %v5421, %v5423
      %v5425 = vrot.slane %v5411, 1
      %v5426 = vsel %vm160, %v5423, %v5425
      %v5427 = vrot.slane %v5412, 1
      %v5428 = vsel %vm160, %v5425, %v5427
      %v5429 = vrot.slane %v5413, 1
      %v5430 = vsel %vm160, %v5427, %v5429
      %v5437 = vadd.f32 %v5367, %v5422
      %v5438 = vadd.f32 %v5368, %v5424
      %v5439 = vadd.f32 %v5369, %v5426
      %v5440 = vadd.f32 %v5370, %v5428
      %v5441 = vadd.f32 %v5371, %v5430
      %v5442 = vadd.f32 %v5372, %v5429
      %v5449 = vrot.slane %v5402, 1
      %v5450 = vrot.slane %v5403, 1
      %v5451 = vsel %vm160, %v5449, %v5450
      %v5452 = vrot.slane %v5404, 1
      %v5453 = vsel %vm160, %v5450, %v5452
      %v5454 = vrot.slane %v5405, 1
      %v5455 = vsel %vm160, %v5452, %v5454
      %v5456 = vrot.slane %v5406, 1
      %v5457 = vsel %vm160, %v5454, %v5456
      %v5458 = vrot.slane %v5407, 1
      %v5459 = vsel %vm160, %v5456, %v5458
      %v5466 = vmax.f32 %v5308, %v5451
      %v5467 = vmax.f32 %v5309, %v5453
      %v5468 = vmax.f32 %v5310, %v5455
      %v5469 = vmax.f32 %v5311, %v5457
      %v5470 = vmax.f32 %v5312, %v5459
      %v5471 = vmax.f32 %v5313, %v5458
      %v5472 = vmax.f32 %v2836, %v5466
      %v5473 = vmax.f32 %v2837, %v5467
      %v5474 = vmax.f32 %v2838, %v5468
      %v5475 = vmax.f32 %v2839, %v5469
      %v5476 = vmax.f32 %v2840, %v5470
      %v5477 = vmax.f32 %v2841, %v5471
      %v5478 = vstv %s116
      %v5479 = vadd.f32 %v5472, %v5478
      %v5480 = vadd.f32 %v5473, %v5478
      %v5481 = vadd.f32 %v5474, %v5478
      %v5482 = vadd.f32 %v5475, %v5478
      %v5483 = vadd.f32 %v5476, %v5478
      %v5484 = vadd.f32 %v5477, %v5478
      %v5485 = vmax.f32 %v5479, 0.0
      %v5486 = vmax.f32 %v5480, 0.0
      %v5487 = vmax.f32 %v5481, 0.0
      %v5488 = vmax.f32 %v5482, 0.0
      %v5489 = vmax.f32 %v5483, 0.0
      %v5490 = vmax.f32 %v5484, 0.0
      %s5491 = smul.u32 %s119, 48
      %s5492 = scalar_lea.vmem %s4, %s5491
      %5493 = vst [vmem:[%s5492] sm:$0xff] %v5485
      %5494 = vst [vmem:[%s5492 + $0x8] sm:$0xff] %v5486
      %5495 = vst [vmem:[%s5492 + $0x10] sm:$0xff] %v5487
      %5496 = vst [vmem:[%s5492 + $0x18] sm:$0xff] %v5488
      %5497 = vst [vmem:[%s5492 + $0x20] sm:$0xff] %v5489
      %5498 = vst [vmem:[%s5492 + $0x28] sm:$0x7] %v5490
      %v5505 = vrot.slane %v5437, 1
      %v5506 = vrot.slane %v5438, 1
      %v5507 = vsel %vm160, %v5505, %v5506
      %v5508 = vrot.slane %v5439, 1
      %v5509 = vsel %vm160, %v5506, %v5508
      %v5510 = vrot.slane %v5440, 1
      %v5511 = vsel %vm160, %v5508, %v5510
      %v5512 = vrot.slane %v5441, 1
      %v5513 = vsel %vm160, %v5510, %v5512
      %v5514 = vrot.slane %v5442, 1
      %v5515 = vsel %vm160, %v5512, %v5514
      %v5522 = vmax.f32 %v5343, %v5507
      %v5523 = vmax.f32 %v5344, %v5509
      %v5524 = vmax.f32 %v5345, %v5511
      %v5525 = vmax.f32 %v5346, %v5513
      %v5526 = vmax.f32 %v5347, %v5515
      %v5527 = vmax.f32 %v5348, %v5514
      %v5528 = vmax.f32 %v2865, %v5522
      %v5529 = vmax.f32 %v2866, %v5523
      %v5530 = vmax.f32 %v2867, %v5524
      %v5531 = vmax.f32 %v2868, %v5525
      %v5532 = vmax.f32 %v2869, %v5526
      %v5533 = vmax.f32 %v2870, %v5527
      %v5534 = vstv %s117
      %v5535 = vadd.f32 %v5528, %v5534
      %v5536 = vadd.f32 %v5529, %v5534
      %v5537 = vadd.f32 %v5530, %v5534
      %v5538 = vadd.f32 %v5531, %v5534
      %v5539 = vadd.f32 %v5532, %v5534
      %v5540 = vadd.f32 %v5533, %v5534
      %v5541 = vmax.f32 %v5535, 0.0
      %v5542 = vmax.f32 %v5536, 0.0
      %v5543 = vmax.f32 %v5537, 0.0
      %v5544 = vmax.f32 %v5538, 0.0
      %v5545 = vmax.f32 %v5539, 0.0
      %v5546 = vmax.f32 %v5540, 0.0
      %s5547 = sadd.s32 %s5491, 2064
      %s5548 = scalar_lea.vmem %s4, %s5547
      %5549 = vst [vmem:[%s5548] sm:$0xff] %v5541
      %5550 = vst [vmem:[%s5548 + $0x8] sm:$0xff] %v5542
      %5551 = vst [vmem:[%s5548 + $0x10] sm:$0xff] %v5543
      %5552 = vst [vmem:[%s5548 + $0x18] sm:$0xff] %v5544
      %5553 = vst [vmem:[%s5548 + $0x20] sm:$0xff] %v5545
      %5554 = vst [vmem:[%s5548 + $0x28] sm:$0x7] %v5546
    $region38: #{tpu_custom_call.1} parent=1 // loop_footer
      %s123 = sadd.s32 1, %s119
    $region39: #{tpu_custom_call.1} parent=1 // loop_footer_branch
      %118 = sbr.rel target = $region35
    $region40: #{tpu_custom_call.1} parent=1 // loop_exit
      _
    // Predicated region
    $region41: #{tpu_custom_call.1} parent=1 // pred_check
      _
    $region42: #{tpu_custom_call.1} parent=1 // pred_check_branch
      %5556 = sbr.rel (0) target = $region44
    $region43: #{tpu_custom_call.1} parent=1 // pred_region
      _
    $region44: #{tpu_custom_call.1} parent=1 // pred_fallthru
      _
    // Predicated region
    $region45: #{tpu_custom_call.1} parent=1 // pred_check
      _
    $region46: #{tpu_custom_call.1} parent=1 // pred_check_branch
      %5558 = sbr.rel (0) target = $region48
    $region47: #{tpu_custom_call.1} parent=1 // pred_region
      _
    $region48: #{tpu_custom_call.1} parent=1 // pred_fallthru
      _
    %5559 = vsyncpa [#allocation3], 1
    %5560 = vsyncpa [#allocation9], 1
    %5561 = vsyncpa [#allocation4], 1
    %5562 = vsyncpa [#allocation6], 1

</llo_original>
